<compile_context>
chip_gen: v7x
topology: tpu7x:2x2x1
jax: 0.10.0
libtpu: 0.0.40
codegen_flags: <defaults>
</compile_context>

<pallas_src>
import jax
import jax.numpy as jnp
from jax.experimental import pallas as pl
from jax.experimental.pallas import tpu as pltpu

_VMEM = pl.BlockSpec(memory_space=pltpu.MemorySpace.VMEM)


# ---------------------------------------------------------------------------
# Pallas kernels
# ---------------------------------------------------------------------------
def conv_kernel(p_ref, w_ref, b_ref, scale_ref, shift_ref, o_ref):
    """Lane-dense im2col conv: relu(W @ patches + b), then eval-mode BN (FMA).

    p_ref:     (Cin*9, M)   patch matrix, M = N*H*W on the lane axis
    w_ref:     (Cout, Cin*9)
    b/scale/shift: (Cout, 1)  broadcast along lanes
    o_ref:     (Cout, M)
    """
    y = jnp.dot(w_ref[...], p_ref[...], preferred_element_type=jnp.float32)
    y = jnp.maximum(y + b_ref[...], 0.0)                 # ReLU
    o_ref[...] = y * scale_ref[...] + shift_ref[...]     # BN (folded scale/shift)


def fc_kernel(x_ref, w1_ref, b1_ref, w2_ref, b2_ref, w3_ref, b3_ref, o_ref):
    """Fused 3-layer MLP. Weights are bf16 (f32 accumulation), biases f32."""
    h = jnp.dot(x_ref[...].astype(jnp.bfloat16), w1_ref[...],
                preferred_element_type=jnp.float32)
    h = jnp.maximum(h + b1_ref[...], 0.0)
    h = jnp.dot(h.astype(jnp.bfloat16), w2_ref[...],
                preferred_element_type=jnp.float32)
    h = jnp.maximum(h + b2_ref[...], 0.0)
    h = jnp.dot(h.astype(jnp.bfloat16), w3_ref[...],
                preferred_element_type=jnp.float32)
    o_ref[...] = h + b3_ref[...]


# ---------------------------------------------------------------------------
# Wrappers (glue: reflection pad, im2col, reshapes)
# ---------------------------------------------------------------------------
def _im2col_cfirst(y_cnhw):
    """(C, N, H, W) -> (C*9, N*H*W) patch matrix; row index = ci*9 + kh*3 + kw."""
    C, N, H, W = y_cnhw.shape
    yp = jnp.pad(y_cnhw, ((0, 0), (0, 0), (1, 1), (1, 1)), mode="reflect")
    cols = [yp[:, :, kh:kh + H, kw:kw + W] for kh in range(3) for kw in range(3)]
    p = jnp.stack(cols, axis=1)                      # (C, 9, N, H, W)
    return p.reshape(C * 9, N * H * W)


def conv3x3_relu_bn(y_cnhw, w, b, gamma, beta, rmean, rvar, eps=1e-5):
    """ReflectionPad2d(1) -> Conv2d(3x3) -> ReLU -> BatchNorm2d (eval).

    Activations kept channel-first/batch-second (C, N, H, W) between layers so
    no transpose is needed in the glue.
    """
    Cin, N, H, W = y_cnhw.shape
    Cout = w.shape[0]
    M = N * H * W

    p = _im2col_cfirst(y_cnhw)                       # (Cin*9, M)
    wm = w.reshape(Cout, Cin * 9)                    # matches ci*9 + kh*3 + kw
    scale = gamma / jnp.sqrt(rvar + eps)
    shift = beta - rmean * scale

    out = pl.pallas_call(
        conv_kernel,
        out_shape=jax.ShapeDtypeStruct((Cout, M), jnp.float32),
        in_specs=[_VMEM] * 5,
        out_specs=_VMEM,
    )(p, wm, b.reshape(Cout, 1), scale.reshape(Cout, 1), shift.reshape(Cout, 1))

    return out.reshape(Cout, N, H, W)


def fc_head(x, w1, b1, w2, b2, w3, b3):
    B = x.shape[0]
    out_dim = w3.shape[1]
    return pl.pallas_call(
        fc_kernel,
        out_shape=jax.ShapeDtypeStruct((B, out_dim), jnp.float32),
        in_specs=[_VMEM] * 7,
        out_specs=_VMEM,
    )(x, w1, b1.reshape(1, -1), w2, b2.reshape(1, -1), w3, b3.reshape(1, -1))


# ---------------------------------------------------------------------------
# Params
# ---------------------------------------------------------------------------
def init_params(key, spatial=16):
    ks = jax.random.split(key, 6)
    D = 8 * spatial * spatial
    HPAD = 512  # 500 padded to a lane multiple (zero-padded -> numerically identical)

    def conv_init(k, cout, cin):
        fan_in = cin * 9
        std = 1.0 / (fan_in ** 0.5)
        kw, kb = jax.random.split(k)
        return (jax.random.uniform(kw, (cout, cin, 3, 3), jnp.float32, -std, std),
                jax.random.uniform(kb, (cout,), jnp.float32, -std, std))

    def lin_init(k, din, dout, pad_in, pad_out):
        std = 1.0 / (din ** 0.5)
        kw, kb = jax.random.split(k)
        w = jax.random.uniform(kw, (din, dout), jnp.float32, -std, std)
        b = jax.random.uniform(kb, (dout,), jnp.float32, -std, std)
        w = jnp.pad(w, ((0, pad_in - din), (0, pad_out - dout)))
        b = jnp.pad(b, ((0, pad_out - dout),))
        # FC weights stored in bf16 (halves weight DMA; f32 accumulation in-kernel).
        return w.astype(jnp.bfloat16), b

    def bn_init(c):
        return (jnp.ones((c,), jnp.float32), jnp.zeros((c,), jnp.float32),
                jnp.zeros((c,), jnp.float32), jnp.ones((c,), jnp.float32))

    params = {}
    params["conv1_w"], params["conv1_b"] = conv_init(ks[0], 4, 1)
    params["bn1"] = bn_init(4)
    params["conv2_w"], params["conv2_b"] = conv_init(ks[1], 8, 4)
    params["bn2"] = bn_init(8)
    params["conv3_w"], params["conv3_b"] = conv_init(ks[2], 8, 8)
    params["bn3"] = bn_init(8)
    params["fc1_w"], params["fc1_b"] = lin_init(ks[3], D, 500, D, HPAD)
    params["fc2_w"], params["fc2_b"] = lin_init(ks[4], 500, 500, HPAD, HPAD)
    params["fc3_w"], params["fc3_b"] = lin_init(ks[5], 500, 5, HPAD, 5)
    return params


# ---------------------------------------------------------------------------
# SiameseNetwork forward
# ---------------------------------------------------------------------------
def forward_once(params, x_nchw):
    N, Cin, H, W = x_nchw.shape
    g1, b1, m1, v1 = params["bn1"]
    g2, b2, m2, v2 = params["bn2"]
    g3, b3, m3, v3 = params["bn3"]

    y = x_nchw.transpose(1, 0, 2, 3)                 # (Cin, N, H, W)
    y = conv3x3_relu_bn(y, params["conv1_w"], params["conv1_b"], g1, b1, m1, v1)
    y = conv3x3_relu_bn(y, params["conv2_w"], params["conv2_b"], g2, b2, m2, v2)
    y = conv3x3_relu_bn(y, params["conv3_w"], params["conv3_b"], g3, b3, m3, v3)

    C = y.shape[0]
    # PyTorch flatten order: (N, C*H*W) from NCHW.
    flat = y.reshape(C, N, H * W).transpose(1, 0, 2).reshape(N, C * H * W)
    return fc_head(flat, params["fc1_w"], params["fc1_b"],
                   params["fc2_w"], params["fc2_b"],
                   params["fc3_w"], params["fc3_b"])


@jax.jit
def siamese_forward(params, input1, input2):
    # Run both branches through one set of kernels (shared weights): halves the
    # kernel launches and streams the FC weights from HBM only once per forward.
    N = input1.shape[0]
    x = jnp.concatenate([input1, input2], axis=0)    # (2N, 1, H, W)
    out = forward_once(params, x)
    return out[:N], out[N:]


if __name__ == "__main__":
    key = jax.random.PRNGKey(0)
    kp, k1, k2 = jax.random.split(key, 3)
    params = init_params(kp, spatial=16)

    input1 = jax.random.normal(k1, (2, 1, 16, 16), jnp.float32)
    input2 = jax.random.normal(k2, (2, 1, 16, 16), jnp.float32)

    out1, out2 = siamese_forward(params, input1, input2)
    jax.block_until_ready((out1, out2))
    assert out1.shape == (2, 5) and out2.shape == (2, 5)
    print("KERNEL_OK")
</pallas_src>

<mosaic_0001>
module attributes {stable_mosaic.version = 11 : i64} {
  func.func @conv_kernel(%arg0: memref<9x1024xf32, #tpu.memory_space<vmem>>, %arg1: memref<4x9xf32, #tpu.memory_space<vmem>>, %arg2: memref<4x1xf32, #tpu.memory_space<vmem>>, %arg3: memref<4x1xf32, #tpu.memory_space<vmem>>, %arg4: memref<4x1xf32, #tpu.memory_space<vmem>>, %arg5: memref<4x1024xf32, #tpu.memory_space<vmem>>) attributes {dimension_semantics = [], scalar_prefetch = 0 : i64, scratch_operands = 0 : i64, tpu.core_type = #tpu.core_type<tc>} {
    %c0 = arith.constant 0 : index
    %c0_0 = arith.constant 0 : index
    %0 = vector.load %arg1[%c0, %c0_0] : memref<4x9xf32, #tpu.memory_space<vmem>>, vector<4x9xf32>
    %c0_1 = arith.constant 0 : index
    %c0_2 = arith.constant 0 : index
    %1 = vector.load %arg0[%c0_1, %c0_2] : memref<9x1024xf32, #tpu.memory_space<vmem>>, vector<9x1024xf32>
    %cst = arith.constant dense<0.000000e+00> : vector<4x1024xf32>
    %2 = tpu.matmul %0, %1, %cst {dimension_numbers = #tpu.dot_dimension_numbers<[1], [0], [0], [1], [0, 0, 1, 1], [], []>} : vector<4x9xf32>, vector<9x1024xf32>, vector<4x1024xf32> -> vector<4x1024xf32>
    %c0_3 = arith.constant 0 : index
    %c0_4 = arith.constant 0 : index
    %3 = vector.load %arg2[%c0_3, %c0_4] : memref<4x1xf32, #tpu.memory_space<vmem>>, vector<4x1xf32>
    %4 = vector.broadcast %3 : vector<4x1xf32> to vector<4x1024xf32>
    %5 = arith.addf %2, %4 : vector<4x1024xf32>
    %cst_5 = arith.constant 0.000000e+00 : f32
    %6 = vector.broadcast %cst_5 : f32 to vector<4x1024xf32>
    %7 = arith.maximumf %5, %6 : vector<4x1024xf32>
    %c0_6 = arith.constant 0 : index
    %c0_7 = arith.constant 0 : index
    %8 = vector.load %arg3[%c0_6, %c0_7] : memref<4x1xf32, #tpu.memory_space<vmem>>, vector<4x1xf32>
    %9 = vector.broadcast %8 : vector<4x1xf32> to vector<4x1024xf32>
    %10 = arith.mulf %7, %9 : vector<4x1024xf32>
    %c0_8 = arith.constant 0 : index
    %c0_9 = arith.constant 0 : index
    %11 = vector.load %arg4[%c0_8, %c0_9] : memref<4x1xf32, #tpu.memory_space<vmem>>, vector<4x1xf32>
    %12 = vector.broadcast %11 : vector<4x1xf32> to vector<4x1024xf32>
    %13 = arith.addf %10, %12 : vector<4x1024xf32>
    %c0_10 = arith.constant 0 : index
    %c0_11 = arith.constant 0 : index
    %14 = vector.load %arg5[%c0_10, %c0_11] : memref<4x1024xf32, #tpu.memory_space<vmem>>, vector<4x1024xf32>
    tpu.vector_store %arg5[%c0_10, %c0_11], %13 {strides = array<i32>} : memref<4x1024xf32, #tpu.memory_space<vmem>>, vector<4x1024xf32>,
    return
  }
}

module attributes {stable_mosaic.version = 11 : i64} {
  func.func @conv_kernel(%arg0: memref<36x1024xf32, #tpu.memory_space<vmem>>, %arg1: memref<8x36xf32, #tpu.memory_space<vmem>>, %arg2: memref<8x1xf32, #tpu.memory_space<vmem>>, %arg3: memref<8x1xf32, #tpu.memory_space<vmem>>, %arg4: memref<8x1xf32, #tpu.memory_space<vmem>>, %arg5: memref<8x1024xf32, #tpu.memory_space<vmem>>) attributes {dimension_semantics = [], scalar_prefetch = 0 : i64, scratch_operands = 0 : i64, tpu.core_type = #tpu.core_type<tc>} {
    %c0 = arith.constant 0 : index
    %c0_0 = arith.constant 0 : index
    %0 = vector.load %arg1[%c0, %c0_0] : memref<8x36xf32, #tpu.memory_space<vmem>>, vector<8x36xf32>
    %c0_1 = arith.constant 0 : index
    %c0_2 = arith.constant 0 : index
    %1 = vector.load %arg0[%c0_1, %c0_2] : memref<36x1024xf32, #tpu.memory_space<vmem>>, vector<36x1024xf32>
    %cst = arith.constant dense<0.000000e+00> : vector<8x1024xf32>
    %2 = tpu.matmul %0, %1, %cst {dimension_numbers = #tpu.dot_dimension_numbers<[1], [0], [0], [1], [0, 0, 1, 1], [], []>} : vector<8x36xf32>, vector<36x1024xf32>, vector<8x1024xf32> -> vector<8x1024xf32>
    %c0_3 = arith.constant 0 : index
    %c0_4 = arith.constant 0 : index
    %3 = vector.load %arg2[%c0_3, %c0_4] : memref<8x1xf32, #tpu.memory_space<vmem>>, vector<8x1xf32>
    %4 = vector.broadcast %3 : vector<8x1xf32> to vector<8x1024xf32>
    %5 = arith.addf %2, %4 : vector<8x1024xf32>
    %cst_5 = arith.constant 0.000000e+00 : f32
    %6 = vector.broadcast %cst_5 : f32 to vector<8x1024xf32>
    %7 = arith.maximumf %5, %6 : vector<8x1024xf32>
    %c0_6 = arith.constant 0 : index
    %c0_7 = arith.constant 0 : index
    %8 = vector.load %arg3[%c0_6, %c0_7] : memref<8x1xf32, #tpu.memory_space<vmem>>, vector<8x1xf32>
    %9 = vector.broadcast %8 : vector<8x1xf32> to vector<8x1024xf32>
    %10 = arith.mulf %7, %9 : vector<8x1024xf32>
    %c0_8 = arith.constant 0 : index
    %c0_9 = arith.constant 0 : index
    %11 = vector.load %arg4[%c0_8, %c0_9] : memref<8x1xf32, #tpu.memory_space<vmem>>, vector<8x1xf32>
    %12 = vector.broadcast %11 : vector<8x1xf32> to vector<8x1024xf32>
    %13 = arith.addf %10, %12 : vector<8x1024xf32>
    %c0_10 = arith.constant 0 : index
    %c0_11 = arith.constant 0 : index
    %14 = vector.load %arg5[%c0_10, %c0_11] : memref<8x1024xf32, #tpu.memory_space<vmem>>, vector<8x1024xf32>
    tpu.vector_store %arg5[%c0_10, %c0_11], %13 {strides = array<i32>} : memref<8x1024xf32, #tpu.memory_space<vmem>>, vector<8x1024xf32>,
    return
  }
}

module attributes {stable_mosaic.version = 11 : i64} {
  func.func @fc_kernel(%arg0: memref<4x2048xf32, #tpu.memory_space<vmem>>, %arg1: memref<2048x512xbf16, #tpu.memory_space<vmem>>, %arg2: memref<1x512xf32, #tpu.memory_space<vmem>>, %arg3: memref<512x512xbf16, #tpu.memory_space<vmem>>, %arg4: memref<1x512xf32, #tpu.memory_space<vmem>>, %arg5: memref<512x5xbf16, #tpu.memory_space<vmem>>, %arg6: memref<1x5xf32, #tpu.memory_space<vmem>>, %arg7: memref<4x5xf32, #tpu.memory_space<vmem>>) attributes {dimension_semantics = [], scalar_prefetch = 0 : i64, scratch_operands = 0 : i64, tpu.core_type = #tpu.core_type<tc>} {
    %c0 = arith.constant 0 : index
    %c0_0 = arith.constant 0 : index
    %0 = vector.load %arg0[%c0, %c0_0] : memref<4x2048xf32, #tpu.memory_space<vmem>>, vector<4x2048xf32>
    %1 = arith.truncf %0 : vector<4x2048xf32> to vector<4x2048xbf16>
    %c0_1 = arith.constant 0 : index
    %c0_2 = arith.constant 0 : index
    %2 = vector.load %arg1[%c0_1, %c0_2] : memref<2048x512xbf16, #tpu.memory_space<vmem>>, vector<2048x512xbf16>
    %cst = arith.constant dense<0.000000e+00> : vector<4x512xf32>
    %3 = tpu.matmul %1, %2, %cst {dimension_numbers = #tpu.dot_dimension_numbers<[1], [0], [0], [1], [0, 0, 1, 1], [], []>} : vector<4x2048xbf16>, vector<2048x512xbf16>, vector<4x512xf32> -> vector<4x512xf32>
    %c0_3 = arith.constant 0 : index
    %c0_4 = arith.constant 0 : index
    %4 = vector.load %arg2[%c0_3, %c0_4] : memref<1x512xf32, #tpu.memory_space<vmem>>, vector<1x512xf32>
    %5 = vector.broadcast %4 : vector<1x512xf32> to vector<4x512xf32>
    %6 = arith.addf %3, %5 : vector<4x512xf32>
    %cst_5 = arith.constant 0.000000e+00 : f32
    %7 = vector.broadcast %cst_5 : f32 to vector<4x512xf32>
    %8 = arith.maximumf %6, %7 : vector<4x512xf32>
    %9 = arith.truncf %8 : vector<4x512xf32> to vector<4x512xbf16>
    %c0_6 = arith.constant 0 : index
    %c0_7 = arith.constant 0 : index
    %10 = vector.load %arg3[%c0_6, %c0_7] : memref<512x512xbf16, #tpu.memory_space<vmem>>, vector<512x512xbf16>
    %cst_8 = arith.constant dense<0.000000e+00> : vector<4x512xf32>
    %11 = tpu.matmul %9, %10, %cst_8 {dimension_numbers = #tpu.dot_dimension_numbers<[1], [0], [0], [1], [0, 0, 1, 1], [], []>} : vector<4x512xbf16>, vector<512x512xbf16>, vector<4x512xf32> -> vector<4x512xf32>
    %c0_9 = arith.constant 0 : index
    %c0_10 = arith.constant 0 : index
    %12 = vector.load %arg4[%c0_9, %c0_10] : memref<1x512xf32, #tpu.memory_space<vmem>>, vector<1x512xf32>
    %13 = vector.broadcast %12 : vector<1x512xf32> to vector<4x512xf32>
    %14 = arith.addf %11, %13 : vector<4x512xf32>
    %cst_11 = arith.constant 0.000000e+00 : f32
    %15 = vector.broadcast %cst_11 : f32 to vector<4x512xf32>
    %16 = arith.maximumf %14, %15 : vector<4x512xf32>
    %17 = arith.truncf %16 : vector<4x512xf32> to vector<4x512xbf16>
    %c0_12 = arith.constant 0 : index
    %c0_13 = arith.constant 0 : index
    %18 = vector.load %arg5[%c0_12, %c0_13] : memref<512x5xbf16, #tpu.memory_space<vmem>>, vector<512x5xbf16>
    %cst_14 = arith.constant dense<0.000000e+00> : vector<4x5xf32>
    %19 = tpu.matmul %17, %18, %cst_14 {dimension_numbers = #tpu.dot_dimension_numbers<[1], [0], [0], [1], [0, 0, 1, 1], [], []>} : vector<4x512xbf16>, vector<512x5xbf16>, vector<4x5xf32> -> vector<4x5xf32>
    %c0_15 = arith.constant 0 : index
    %c0_16 = arith.constant 0 : index
    %20 = vector.load %arg6[%c0_15, %c0_16] : memref<1x5xf32, #tpu.memory_space<vmem>>, vector<1x5xf32>
    %21 = vector.broadcast %20 : vector<1x5xf32> to vector<4x5xf32>
    %22 = arith.addf %19, %21 : vector<4x5xf32>
    %c0_17 = arith.constant 0 : index
    %c0_18 = arith.constant 0 : index
    %23 = vector.load %arg7[%c0_17, %c0_18] : memref<4x5xf32, #tpu.memory_space<vmem>>, vector<4x5xf32>
    tpu.vector_store %arg7[%c0_17, %c0_18], %22 {strides = array<i32>} : memref<4x5xf32, #tpu.memory_space<vmem>>, vector<4x5xf32>,
    return
  }
}

module attributes {stable_mosaic.version = 11 : i64} {
  func.func @conv_kernel(%arg0: memref<72x1024xf32, #tpu.memory_space<vmem>>, %arg1: memref<8x72xf32, #tpu.memory_space<vmem>>, %arg2: memref<8x1xf32, #tpu.memory_space<vmem>>, %arg3: memref<8x1xf32, #tpu.memory_space<vmem>>, %arg4: memref<8x1xf32, #tpu.memory_space<vmem>>, %arg5: memref<8x1024xf32, #tpu.memory_space<vmem>>) attributes {dimension_semantics = [], scalar_prefetch = 0 : i64, scratch_operands = 0 : i64, tpu.core_type = #tpu.core_type<tc>} {
    %c0 = arith.constant 0 : index
    %c0_0 = arith.constant 0 : index
    %0 = vector.load %arg1[%c0, %c0_0] : memref<8x72xf32, #tpu.memory_space<vmem>>, vector<8x72xf32>
    %c0_1 = arith.constant 0 : index
    %c0_2 = arith.constant 0 : index
    %1 = vector.load %arg0[%c0_1, %c0_2] : memref<72x1024xf32, #tpu.memory_space<vmem>>, vector<72x1024xf32>
    %cst = arith.constant dense<0.000000e+00> : vector<8x1024xf32>
    %2 = tpu.matmul %0, %1, %cst {dimension_numbers = #tpu.dot_dimension_numbers<[1], [0], [0], [1], [0, 0, 1, 1], [], []>} : vector<8x72xf32>, vector<72x1024xf32>, vector<8x1024xf32> -> vector<8x1024xf32>
    %c0_3 = arith.constant 0 : index
    %c0_4 = arith.constant 0 : index
    %3 = vector.load %arg2[%c0_3, %c0_4] : memref<8x1xf32, #tpu.memory_space<vmem>>, vector<8x1xf32>
    %4 = vector.broadcast %3 : vector<8x1xf32> to vector<8x1024xf32>
    %5 = arith.addf %2, %4 : vector<8x1024xf32>
    %cst_5 = arith.constant 0.000000e+00 : f32
    %6 = vector.broadcast %cst_5 : f32 to vector<8x1024xf32>
    %7 = arith.maximumf %5, %6 : vector<8x1024xf32>
    %c0_6 = arith.constant 0 : index
    %c0_7 = arith.constant 0 : index
    %8 = vector.load %arg3[%c0_6, %c0_7] : memref<8x1xf32, #tpu.memory_space<vmem>>, vector<8x1xf32>
    %9 = vector.broadcast %8 : vector<8x1xf32> to vector<8x1024xf32>
    %10 = arith.mulf %7, %9 : vector<8x1024xf32>
    %c0_8 = arith.constant 0 : index
    %c0_9 = arith.constant 0 : index
    %11 = vector.load %arg4[%c0_8, %c0_9] : memref<8x1xf32, #tpu.memory_space<vmem>>, vector<8x1xf32>
    %12 = vector.broadcast %11 : vector<8x1xf32> to vector<8x1024xf32>
    %13 = arith.addf %10, %12 : vector<8x1024xf32>
    %c0_10 = arith.constant 0 : index
    %c0_11 = arith.constant 0 : index
    %14 = vector.load %arg5[%c0_10, %c0_11] : memref<8x1024xf32, #tpu.memory_space<vmem>>, vector<8x1024xf32>
    tpu.vector_store %arg5[%c0_10, %c0_11], %13 {strides = array<i32>} : memref<8x1024xf32, #tpu.memory_space<vmem>>, vector<8x1024xf32>,
    return
  }
}

</mosaic_0001>

<llo_original>
// kernel: siamese_forward.4
$region0: #{siamese_forward.4}
  #allocation0 [shape = 'u32[]', space=smem, size = 0x4, offset = 0x4, fixed_abs, tag = 'smem constant byte address 0x4 - core index']
  #allocation1 [shape = 'u32[144,128]{1,0:T(1,128)}', space=vmem, size = 0x12000, scoped, tag = 'internal scratch']
  %s0 = inlined_call_operand.vmem [shape: f32[9,1024], index: 0, kind: input, shape index: {}]
  %s1 = inlined_call_operand.vmem [shape: f32[4,9], index: 1, kind: input, shape index: {}]
  %s2 = inlined_call_operand.vmem [shape: f32[4,1], index: 2, kind: input, shape index: {}]
  %s3 = inlined_call_operand.vmem [shape: f32[4,1], index: 3, kind: input, shape index: {}]
  %s4 = inlined_call_operand.vmem [shape: f32[4,1], index: 4, kind: input, shape index: {}]
  %s5 = inlined_call_operand.vmem [shape: f32[4,1024], index: 5, kind: output, shape index: {}]
  %s6 = sld [smem:[#allocation0]]
  $region30: #{siamese_forward.4} parent=0
    _
  %s8 = ssub.s32 1, %s6
  %s9 = scalar_select 0, %s8, %s6
  // Predicated region
  $region2: #{siamese_forward.4} parent=0 // pred_check
    _
  $region3: #{siamese_forward.4} parent=0 // pred_check_branch
    %11 = sbr.rel (0) target = $region5
  $region4: #{siamese_forward.4} parent=0 // pred_region
    _
  $region5: #{siamese_forward.4} parent=0 // pred_fallthru
    _
  // Predicated region
  $region6: #{siamese_forward.4} parent=0 // pred_check
    _
  $region7: #{siamese_forward.4} parent=0 // pred_check_branch
    %13 = sbr.rel (0) target = $region9
  $region8: #{siamese_forward.4} parent=0 // pred_region
    _
  $region9: #{siamese_forward.4} parent=0 // pred_fallthru
    _
  // Predicated region
  $region10: #{siamese_forward.4} parent=0 // pred_check
    _
  $region11: #{siamese_forward.4} parent=0 // pred_check_branch
    %15 = sbr.rel (0) target = $region13
  $region12: #{siamese_forward.4} parent=0 // pred_region
    _
  $region13: #{siamese_forward.4} parent=0 // pred_fallthru
    _
  // Predicated region
  $region14: #{siamese_forward.4} parent=0 // pred_check
    _
  $region15: #{siamese_forward.4} parent=0 // pred_check_branch
    %17 = sbr.rel (0) target = $region17
  $region16: #{siamese_forward.4} parent=0 // pred_region
    _
  $region17: #{siamese_forward.4} parent=0 // pred_fallthru
    _
  // Predicated region
  $region18: #{siamese_forward.4} parent=0 // pred_check
    _
  $region19: #{siamese_forward.4} parent=0 // pred_check_branch
    %19 = sbr.rel (0) target = $region21
  $region20: #{siamese_forward.4} parent=0 // pred_region
    _
  $region21: #{siamese_forward.4} parent=0 // pred_fallthru
    _
  %v20 = vld [vmem:[%s1] sm:$0xf]
  %v21 = vld [vmem:[%s0] sm:$0xff]
  %v22 = vld [vmem:[%s0 + $0x8] sm:$0xff]
  %v23 = vld [vmem:[%s0 + $0x10] sm:$0xff]
  %v24 = vld [vmem:[%s0 + $0x18] sm:$0xff]
  %v25 = vld [vmem:[%s0 + $0x20] sm:$0xff]
  %v26 = vld [vmem:[%s0 + $0x28] sm:$0xff]
  %v27 = vld [vmem:[%s0 + $0x30] sm:$0xff]
  %v28 = vld [vmem:[%s0 + $0x38] sm:$0xff]
  %v29 = vld [vmem:[%s0 + $0x40] sm:$0x1]
  %v30 = vld [vmem:[%s0 + $0x48] sm:$0x1]
  %v31 = vld [vmem:[%s0 + $0x50] sm:$0x1]
  %v32 = vld [vmem:[%s0 + $0x58] sm:$0x1]
  %v33 = vld [vmem:[%s0 + $0x60] sm:$0x1]
  %v34 = vld [vmem:[%s0 + $0x68] sm:$0x1]
  %v35 = vld [vmem:[%s0 + $0x70] sm:$0x1]
  %v36 = vld [vmem:[%s0 + $0x78] sm:$0x1]
  %v37 = vld [vmem:[%s2] sm:$0xf]
  %39 = vset.pattern.permute.xlu0 0
  %40 = vperm.xlu0 %39, %v37
  %v41 = vpop.permute.xlu0 %40
  %vm43 = vcmask 72704
  %v45 = vsel %vm43, %v20, 0
  %vm47 = vcmask 1040384
  %v49 = vsel %vm47, %v29, 0
  %v52 = vsel %vm47, %v30, 0
  %v55 = vsel %vm47, %v31, 0
  %v58 = vsel %vm47, %v32, 0
  %v61 = vsel %vm47, %v33, 0
  %v64 = vsel %vm47, %v34, 0
  %v67 = vsel %vm47, %v35, 0
  %v70 = vsel %vm47, %v36, 0
  %72 = vmatprep.subr.mxu0 %v22
  %73 = vmatpush1.msra.mxu0 %v21
  %74 = vmatprep.subr.mxu0 %v52
  %75 = vmatpush1.msra.mxu0 %v49
  %76 = vmatprep.subr.mxu0 0.0
  %77 = vmatpush1.msra.mxu0 0.0
  %78 = vmatprep.subr.mxu0 0.0
  %79 = vmatpush1.msra.mxu0 0.0
  %80 = vmatprep.subr.mxu0 0.0
  %81 = vmatpush1.msra.mxu0 0.0
  %82 = vmatprep.subr.mxu0 0.0
  %83 = vmatpush1.msra.mxu0 0.0
  %84 = vmatprep.subr.mxu0 0.0
  %85 = vmatpush1.msra.mxu0 0.0
  %86 = vmatprep.subr.mxu0 0.0
  %87 = vmatpush1.msra.mxu0 0.0
  %88 = vmatprep.subr.mxu0 0.0
  %89 = vmatpush1.msra.mxu0 0.0
  %90 = vmatprep.subr.mxu0 0.0
  %91 = vmatpush1.msra.mxu0 0.0
  %92 = vmatprep.subr.mxu0 0.0
  %93 = vmatpush1.msra.mxu0 0.0
  %94 = vmatprep.subr.mxu0 0.0
  %95 = vmatpush1.msra.mxu0 0.0
  %96 = vmatprep.subr.mxu0 0.0
  %97 = vmatpush1.msra.mxu0 0.0
  %98 = vmatprep.subr.mxu0 0.0
  %99 = vmatpush1.msra.mxu0 0.0
  %100 = vmatprep.subr.mxu0 0.0
  %101 = vmatpush1.msra.mxu0 0.0
  %102 = vmatprep.subr.mxu0 0.0
  %103 = vmatpush1.msra.mxu0 0.0
  %104 = vmatprep.subr.mxu0 0.0
  %105 = vmatpush1.msra.mxu0 0.0
  %106 = vmatprep.subr.mxu0 0.0
  %107 = vmatpush1.msra.mxu0 0.0
  %108 = vmatprep.subr.mxu0 0.0
  %109 = vmatpush1.msra.mxu0 0.0
  %110 = vmatprep.subr.mxu0 0.0
  %111 = vmatpush1.msra.mxu0 0.0
  %112 = vmatprep.subr.mxu0 0.0
  %113 = vmatpush1.msra.mxu0 0.0
  %114 = vmatprep.subr.mxu0 0.0
  %115 = vmatpush1.msra.mxu0 0.0
  %116 = vmatprep.subr.mxu0 0.0
  %117 = vmatpush1.msra.mxu0 0.0
  %118 = vmatprep.subr.mxu0 0.0
  %119 = vmatpush1.msra.mxu0 0.0
  %120 = vmatprep.subr.mxu0 0.0
  %121 = vmatpush1.msra.mxu0 0.0
  %122 = vmatprep.subr.mxu0 0.0
  %123 = vmatpush1.msra.mxu0 0.0
  %124 = vmatprep.subr.mxu0 0.0
  %125 = vmatpush1.msra.mxu0 0.0
  %126 = vmatprep.subr.mxu0 0.0
  %127 = vmatpush1.msra.mxu0 0.0
  %128 = vmatprep.subr.mxu0 0.0
  %129 = vmatpush1.msra.mxu0 0.0
  %130 = vmatprep.subr.mxu0 0.0
  %131 = vmatpush1.msra.mxu0 0.0
  %132 = vmatprep.subr.mxu0 0.0
  %133 = vmatpush1.msra.mxu0 0.0
  %134 = vmatprep.subr.mxu0 0.0
  %135 = vmatpush1.msra.mxu0 0.0
  %136 = vmatprep.mubr.f32.mxu0 0.0
  %137 = vmatmul.mubr.f32.gmra.mrb[0].mxu0 %v45
  %v138 = vpop.f32.mrb[0].mxu0
  %v139 = vadd.f32 %v41, %v138
  %v140 = vpop.f32.mrb[0].mxu0
  %v141 = vadd.f32 %v41, %v140
  %142 = vdwg.mxu0
  %143 = vmatprep.subr.mxu0 %v24
  %144 = vmatpush1.msra.mxu0 %v23
  %145 = vmatprep.subr.mxu0 %v58
  %146 = vmatpush1.msra.mxu0 %v55
  %147 = vmatprep.subr.mxu0 0.0
  %148 = vmatpush1.msra.mxu0 0.0
  %149 = vmatprep.subr.mxu0 0.0
  %150 = vmatpush1.msra.mxu0 0.0
  %151 = vmatprep.subr.mxu0 0.0
  %152 = vmatpush1.msra.mxu0 0.0
  %153 = vmatprep.subr.mxu0 0.0
  %154 = vmatpush1.msra.mxu0 0.0
  %155 = vmatprep.subr.mxu0 0.0
  %156 = vmatpush1.msra.mxu0 0.0
  %157 = vmatprep.subr.mxu0 0.0
  %158 = vmatpush1.msra.mxu0 0.0
  %159 = vmatprep.subr.mxu0 0.0
  %160 = vmatpush1.msra.mxu0 0.0
  %161 = vmatprep.subr.mxu0 0.0
  %162 = vmatpush1.msra.mxu0 0.0
  %163 = vmatprep.subr.mxu0 0.0
  %164 = vmatpush1.msra.mxu0 0.0
  %165 = vmatprep.subr.mxu0 0.0
  %166 = vmatpush1.msra.mxu0 0.0
  %167 = vmatprep.subr.mxu0 0.0
  %168 = vmatpush1.msra.mxu0 0.0
  %169 = vmatprep.subr.mxu0 0.0
  %170 = vmatpush1.msra.mxu0 0.0
  %171 = vmatprep.subr.mxu0 0.0
  %172 = vmatpush1.msra.mxu0 0.0
  %173 = vmatprep.subr.mxu0 0.0
  %174 = vmatpush1.msra.mxu0 0.0
  %175 = vmatprep.subr.mxu0 0.0
  %176 = vmatpush1.msra.mxu0 0.0
  %177 = vmatprep.subr.mxu0 0.0
  %178 = vmatpush1.msra.mxu0 0.0
  %179 = vmatprep.subr.mxu0 0.0
  %180 = vmatpush1.msra.mxu0 0.0
  %181 = vmatprep.subr.mxu0 0.0
  %182 = vmatpush1.msra.mxu0 0.0
  %183 = vmatprep.subr.mxu0 0.0
  %184 = vmatpush1.msra.mxu0 0.0
  %185 = vmatprep.subr.mxu0 0.0
  %186 = vmatpush1.msra.mxu0 0.0
  %187 = vmatprep.subr.mxu0 0.0
  %188 = vmatpush1.msra.mxu0 0.0
  %189 = vmatprep.subr.mxu0 0.0
  %190 = vmatpush1.msra.mxu0 0.0
  %191 = vmatprep.subr.mxu0 0.0
  %192 = vmatpush1.msra.mxu0 0.0
  %193 = vmatprep.subr.mxu0 0.0
  %194 = vmatpush1.msra.mxu0 0.0
  %195 = vmatprep.subr.mxu0 0.0
  %196 = vmatpush1.msra.mxu0 0.0
  %197 = vmatprep.subr.mxu0 0.0
  %198 = vmatpush1.msra.mxu0 0.0
  %199 = vmatprep.subr.mxu0 0.0
  %200 = vmatpush1.msra.mxu0 0.0
  %201 = vmatprep.subr.mxu0 0.0
  %202 = vmatpush1.msra.mxu0 0.0
  %203 = vmatprep.subr.mxu0 0.0
  %204 = vmatpush1.msra.mxu0 0.0
  %205 = vmatprep.subr.mxu0 0.0
  %206 = vmatpush1.msra.mxu0 0.0
  %207 = vmatprep.mubr.f32.mxu0 0.0
  %208 = vmatmul.mubr.f32.gmra.mrb[0].mxu0 %v45
  %v209 = vpop.f32.mrb[0].mxu0
  %v210 = vadd.f32 %v41, %v209
  %v211 = vpop.f32.mrb[0].mxu0
  %v212 = vadd.f32 %v41, %v211
  %213 = vdwg.mxu0
  %214 = vmatprep.subr.mxu0 %v26
  %215 = vmatpush1.msra.mxu0 %v25
  %216 = vmatprep.subr.mxu0 %v64
  %217 = vmatpush1.msra.mxu0 %v61
  %218 = vmatprep.subr.mxu0 0.0
  %219 = vmatpush1.msra.mxu0 0.0
  %220 = vmatprep.subr.mxu0 0.0
  %221 = vmatpush1.msra.mxu0 0.0
  %222 = vmatprep.subr.mxu0 0.0
  %223 = vmatpush1.msra.mxu0 0.0
  %224 = vmatprep.subr.mxu0 0.0
  %225 = vmatpush1.msra.mxu0 0.0
  %226 = vmatprep.subr.mxu0 0.0
  %227 = vmatpush1.msra.mxu0 0.0
  %228 = vmatprep.subr.mxu0 0.0
  %229 = vmatpush1.msra.mxu0 0.0
  %230 = vmatprep.subr.mxu0 0.0
  %231 = vmatpush1.msra.mxu0 0.0
  %232 = vmatprep.subr.mxu0 0.0
  %233 = vmatpush1.msra.mxu0 0.0
  %234 = vmatprep.subr.mxu0 0.0
  %235 = vmatpush1.msra.mxu0 0.0
  %236 = vmatprep.subr.mxu0 0.0
  %237 = vmatpush1.msra.mxu0 0.0
  %238 = vmatprep.subr.mxu0 0.0
  %239 = vmatpush1.msra.mxu0 0.0
  %240 = vmatprep.subr.mxu0 0.0
  %241 = vmatpush1.msra.mxu0 0.0
  %242 = vmatprep.subr.mxu0 0.0
  %243 = vmatpush1.msra.mxu0 0.0
  %244 = vmatprep.subr.mxu0 0.0
  %245 = vmatpush1.msra.mxu0 0.0
  %246 = vmatprep.subr.mxu0 0.0
  %247 = vmatpush1.msra.mxu0 0.0
  %248 = vmatprep.subr.mxu0 0.0
  %249 = vmatpush1.msra.mxu0 0.0
  %250 = vmatprep.subr.mxu0 0.0
  %251 = vmatpush1.msra.mxu0 0.0
  %252 = vmatprep.subr.mxu0 0.0
  %253 = vmatpush1.msra.mxu0 0.0
  %254 = vmatprep.subr.mxu0 0.0
  %255 = vmatpush1.msra.mxu0 0.0
  %256 = vmatprep.subr.mxu0 0.0
  %257 = vmatpush1.msra.mxu0 0.0
  %258 = vmatprep.subr.mxu0 0.0
  %259 = vmatpush1.msra.mxu0 0.0
  %260 = vmatprep.subr.mxu0 0.0
  %261 = vmatpush1.msra.mxu0 0.0
  %262 = vmatprep.subr.mxu0 0.0
  %263 = vmatpush1.msra.mxu0 0.0
  %264 = vmatprep.subr.mxu0 0.0
  %265 = vmatpush1.msra.mxu0 0.0
  %266 = vmatprep.subr.mxu0 0.0
  %267 = vmatpush1.msra.mxu0 0.0
  %268 = vmatprep.subr.mxu0 0.0
  %269 = vmatpush1.msra.mxu0 0.0
  %270 = vmatprep.subr.mxu0 0.0
  %271 = vmatpush1.msra.mxu0 0.0
  %272 = vmatprep.subr.mxu0 0.0
  %273 = vmatpush1.msra.mxu0 0.0
  %274 = vmatprep.subr.mxu0 0.0
  %275 = vmatpush1.msra.mxu0 0.0
  %276 = vmatprep.subr.mxu0 0.0
  %277 = vmatpush1.msra.mxu0 0.0
  %278 = vmatprep.mubr.f32.mxu0 0.0
  %279 = vmatmul.mubr.f32.gmra.mrb[0].mxu0 %v45
  %v280 = vpop.f32.mrb[0].mxu0
  %v281 = vadd.f32 %v41, %v280
  %v282 = vpop.f32.mrb[0].mxu0
  %v283 = vadd.f32 %v41, %v282
  %284 = vdwg.mxu0
  %285 = vmatprep.subr.mxu0 %v28
  %286 = vmatpush1.msra.mxu0 %v27
  %287 = vmatprep.subr.mxu0 %v70
  %288 = vmatpush1.msra.mxu0 %v67
  %289 = vmatprep.subr.mxu0 0.0
  %290 = vmatpush1.msra.mxu0 0.0
  %291 = vmatprep.subr.mxu0 0.0
  %292 = vmatpush1.msra.mxu0 0.0
  %293 = vmatprep.subr.mxu0 0.0
  %294 = vmatpush1.msra.mxu0 0.0
  %295 = vmatprep.subr.mxu0 0.0
  %296 = vmatpush1.msra.mxu0 0.0
  %297 = vmatprep.subr.mxu0 0.0
  %298 = vmatpush1.msra.mxu0 0.0
  %299 = vmatprep.subr.mxu0 0.0
  %300 = vmatpush1.msra.mxu0 0.0
  %301 = vmatprep.subr.mxu0 0.0
  %302 = vmatpush1.msra.mxu0 0.0
  %303 = vmatprep.subr.mxu0 0.0
  %304 = vmatpush1.msra.mxu0 0.0
  %305 = vmatprep.subr.mxu0 0.0
  %306 = vmatpush1.msra.mxu0 0.0
  %307 = vmatprep.subr.mxu0 0.0
  %308 = vmatpush1.msra.mxu0 0.0
  %309 = vmatprep.subr.mxu0 0.0
  %310 = vmatpush1.msra.mxu0 0.0
  %311 = vmatprep.subr.mxu0 0.0
  %312 = vmatpush1.msra.mxu0 0.0
  %313 = vmatprep.subr.mxu0 0.0
  %314 = vmatpush1.msra.mxu0 0.0
  %315 = vmatprep.subr.mxu0 0.0
  %316 = vmatpush1.msra.mxu0 0.0
  %317 = vmatprep.subr.mxu0 0.0
  %318 = vmatpush1.msra.mxu0 0.0
  %319 = vmatprep.subr.mxu0 0.0
  %320 = vmatpush1.msra.mxu0 0.0
  %321 = vmatprep.subr.mxu0 0.0
  %322 = vmatpush1.msra.mxu0 0.0
  %323 = vmatprep.subr.mxu0 0.0
  %324 = vmatpush1.msra.mxu0 0.0
  %325 = vmatprep.subr.mxu0 0.0
  %326 = vmatpush1.msra.mxu0 0.0
  %327 = vmatprep.subr.mxu0 0.0
  %328 = vmatpush1.msra.mxu0 0.0
  %329 = vmatprep.subr.mxu0 0.0
  %330 = vmatpush1.msra.mxu0 0.0
  %331 = vmatprep.subr.mxu0 0.0
  %332 = vmatpush1.msra.mxu0 0.0
  %333 = vmatprep.subr.mxu0 0.0
  %334 = vmatpush1.msra.mxu0 0.0
  %335 = vmatprep.subr.mxu0 0.0
  %336 = vmatpush1.msra.mxu0 0.0
  %337 = vmatprep.subr.mxu0 0.0
  %338 = vmatpush1.msra.mxu0 0.0
  %339 = vmatprep.subr.mxu0 0.0
  %340 = vmatpush1.msra.mxu0 0.0
  %341 = vmatprep.subr.mxu0 0.0
  %342 = vmatpush1.msra.mxu0 0.0
  %343 = vmatprep.subr.mxu0 0.0
  %344 = vmatpush1.msra.mxu0 0.0
  %345 = vmatprep.subr.mxu0 0.0
  %346 = vmatpush1.msra.mxu0 0.0
  %347 = vmatprep.subr.mxu0 0.0
  %348 = vmatpush1.msra.mxu0 0.0
  %349 = vmatprep.mubr.f32.mxu0 0.0
  %350 = vmatmul.mubr.f32.gmra.mrb[0].mxu0 %v45
  %v351 = vpop.f32.mrb[0].mxu0
  %v352 = vadd.f32 %v41, %v351
  %v353 = vpop.f32.mrb[0].mxu0
  %v354 = vadd.f32 %v41, %v353
  %355 = vdwg.mxu0
  %v356 = vmax.f32 %v139, 0.0
  %v357 = vmax.f32 %v141, 0.0
  %v358 = vmax.f32 %v210, 0.0
  %v359 = vmax.f32 %v212, 0.0
  %v360 = vmax.f32 %v281, 0.0
  %v361 = vmax.f32 %v283, 0.0
  %v362 = vmax.f32 %v352, 0.0
  %v363 = vmax.f32 %v354, 0.0
  %v364 = vld [vmem:[%s3] sm:$0xf]
  %366 = vset.pattern.permute.xlu0 0
  %367 = vperm.xlu0 %366, %v364
  %v368 = vpop.permute.xlu0 %367
  %v370 = vmul.f32 %v356, %v368
  %v371 = vmul.f32 %v357, %v368
  %v372 = vmul.f32 %v358, %v368
  %v373 = vmul.f32 %v359, %v368
  %v374 = vmul.f32 %v360, %v368
  %v375 = vmul.f32 %v361, %v368
  %v376 = vmul.f32 %v362, %v368
  %v377 = vmul.f32 %v363, %v368
  %v378 = vld [vmem:[%s4] sm:$0xf]
  %380 = vset.pattern.permute.xlu0 0
  %381 = vperm.xlu0 %380, %v378
  %v382 = vpop.permute.xlu0 %381
  %v384 = vadd.f32 %v370, %v382
  %v385 = vadd.f32 %v371, %v382
  %v386 = vadd.f32 %v372, %v382
  %v387 = vadd.f32 %v373, %v382
  %v388 = vadd.f32 %v374, %v382
  %v389 = vadd.f32 %v375, %v382
  %v390 = vadd.f32 %v376, %v382
  %v391 = vadd.f32 %v377, %v382
  %v400 = vcombine.low %v384, %v385
  %v401 = vcombine.low %v386, %v387
  %v402 = vcombine.low %v388, %v389
  %v403 = vcombine.low %v390, %v391
  %408 = vst [vmem:[%s5] sm:$0xff] %v400
  %409 = vst [vmem:[%s5 + $0x8] sm:$0xff] %v401
  %410 = vst [vmem:[%s5 + $0x10] sm:$0xff] %v402
  %411 = vst [vmem:[%s5 + $0x18] sm:$0xff] %v403
  // Predicated region
  $region22: #{siamese_forward.4} parent=0 // pred_check
    _
  $region23: #{siamese_forward.4} parent=0 // pred_check_branch
    %413 = sbr.rel (0) target = $region25
  $region24: #{siamese_forward.4} parent=0 // pred_region
    _
  $region25: #{siamese_forward.4} parent=0 // pred_fallthru
    _
  // Predicated region
  $region26: #{siamese_forward.4} parent=0 // pred_check
    _
  $region27: #{siamese_forward.4} parent=0 // pred_check_branch
    %415 = sbr.rel (0) target = $region29
  $region28: #{siamese_forward.4} parent=0 // pred_region
    _
  $region29: #{siamese_forward.4} parent=0 // pred_fallthru
    _

// kernel: siamese_forward.5
$region0: #{siamese_forward.5}
  #allocation0 [shape = 'u32[]', space=smem, size = 0x4, offset = 0x4, fixed_abs, tag = 'smem constant byte address 0x4 - core index']
  #allocation1 [shape = 'u32[144,128]{1,0:T(1,128)}', space=vmem, size = 0x12000, scoped, tag = 'internal scratch']
  %s0 = inlined_call_operand.vmem [shape: f32[36,1024], index: 0, kind: input, shape index: {}]
  %s1 = inlined_call_operand.vmem [shape: f32[8,36], index: 1, kind: input, shape index: {}]
  %s2 = inlined_call_operand.vmem [shape: f32[8,1], index: 2, kind: input, shape index: {}]
  %s3 = inlined_call_operand.vmem [shape: f32[8,1], index: 3, kind: input, shape index: {}]
  %s4 = inlined_call_operand.vmem [shape: f32[8,1], index: 4, kind: input, shape index: {}]
  %s5 = inlined_call_operand.vmem [shape: f32[8,1024], index: 5, kind: output, shape index: {}]
  %s6 = sld [smem:[#allocation0]]
  $region30: #{siamese_forward.5} parent=0
    _
  %s8 = ssub.s32 1, %s6
  %s9 = scalar_select 0, %s8, %s6
  // Predicated region
  $region2: #{siamese_forward.5} parent=0 // pred_check
    _
  $region3: #{siamese_forward.5} parent=0 // pred_check_branch
    %11 = sbr.rel (0) target = $region5
  $region4: #{siamese_forward.5} parent=0 // pred_region
    _
  $region5: #{siamese_forward.5} parent=0 // pred_fallthru
    _
  // Predicated region
  $region6: #{siamese_forward.5} parent=0 // pred_check
    _
  $region7: #{siamese_forward.5} parent=0 // pred_check_branch
    %13 = sbr.rel (0) target = $region9
  $region8: #{siamese_forward.5} parent=0 // pred_region
    _
  $region9: #{siamese_forward.5} parent=0 // pred_fallthru
    _
  // Predicated region
  $region10: #{siamese_forward.5} parent=0 // pred_check
    _
  $region11: #{siamese_forward.5} parent=0 // pred_check_branch
    %15 = sbr.rel (0) target = $region13
  $region12: #{siamese_forward.5} parent=0 // pred_region
    _
  $region13: #{siamese_forward.5} parent=0 // pred_fallthru
    _
  // Predicated region
  $region14: #{siamese_forward.5} parent=0 // pred_check
    _
  $region15: #{siamese_forward.5} parent=0 // pred_check_branch
    %17 = sbr.rel (0) target = $region17
  $region16: #{siamese_forward.5} parent=0 // pred_region
    _
  $region17: #{siamese_forward.5} parent=0 // pred_fallthru
    _
  // Predicated region
  $region18: #{siamese_forward.5} parent=0 // pred_check
    _
  $region19: #{siamese_forward.5} parent=0 // pred_check_branch
    %19 = sbr.rel (0) target = $region21
  $region20: #{siamese_forward.5} parent=0 // pred_region
    _
  $region21: #{siamese_forward.5} parent=0 // pred_fallthru
    _
  %v20 = vld [vmem:[%s1] sm:$0xff]
  %v21 = vld [vmem:[%s0] sm:$0xff]
  %v22 = vld [vmem:[%s0 + $0x8] sm:$0xff]
  %v23 = vld [vmem:[%s0 + $0x10] sm:$0xff]
  %v24 = vld [vmem:[%s0 + $0x18] sm:$0xff]
  %v25 = vld [vmem:[%s0 + $0x20] sm:$0xff]
  %v26 = vld [vmem:[%s0 + $0x28] sm:$0xff]
  %v27 = vld [vmem:[%s0 + $0x30] sm:$0xff]
  %v28 = vld [vmem:[%s0 + $0x38] sm:$0xff]
  %v29 = vld [vmem:[%s0 + $0x40] sm:$0xff]
  %v30 = vld [vmem:[%s0 + $0x48] sm:$0xff]
  %v31 = vld [vmem:[%s0 + $0x50] sm:$0xff]
  %v32 = vld [vmem:[%s0 + $0x58] sm:$0xff]
  %v33 = vld [vmem:[%s0 + $0x60] sm:$0xff]
  %v34 = vld [vmem:[%s0 + $0x68] sm:$0xff]
  %v35 = vld [vmem:[%s0 + $0x70] sm:$0xff]
  %v36 = vld [vmem:[%s0 + $0x78] sm:$0xff]
  %v37 = vld [vmem:[%s0 + $0x80] sm:$0xff]
  %v38 = vld [vmem:[%s0 + $0x88] sm:$0xff]
  %v39 = vld [vmem:[%s0 + $0x90] sm:$0xff]
  %v40 = vld [vmem:[%s0 + $0x98] sm:$0xff]
  %v41 = vld [vmem:[%s0 + $0xa0] sm:$0xff]
  %v42 = vld [vmem:[%s0 + $0xa8] sm:$0xff]
  %v43 = vld [vmem:[%s0 + $0xb0] sm:$0xff]
  %v44 = vld [vmem:[%s0 + $0xb8] sm:$0xff]
  %v45 = vld [vmem:[%s0 + $0xc0] sm:$0xff]
  %v46 = vld [vmem:[%s0 + $0xc8] sm:$0xff]
  %v47 = vld [vmem:[%s0 + $0xd0] sm:$0xff]
  %v48 = vld [vmem:[%s0 + $0xd8] sm:$0xff]
  %v49 = vld [vmem:[%s0 + $0xe0] sm:$0xff]
  %v50 = vld [vmem:[%s0 + $0xe8] sm:$0xff]
  %v51 = vld [vmem:[%s0 + $0xf0] sm:$0xff]
  %v52 = vld [vmem:[%s0 + $0xf8] sm:$0xff]
  %v53 = vld [vmem:[%s0 + $0x100] sm:$0xf]
  %v54 = vld [vmem:[%s0 + $0x108] sm:$0xf]
  %v55 = vld [vmem:[%s0 + $0x110] sm:$0xf]
  %v56 = vld [vmem:[%s0 + $0x118] sm:$0xf]
  %v57 = vld [vmem:[%s0 + $0x120] sm:$0xf]
  %v58 = vld [vmem:[%s0 + $0x128] sm:$0xf]
  %v59 = vld [vmem:[%s0 + $0x130] sm:$0xf]
  %v60 = vld [vmem:[%s0 + $0x138] sm:$0xf]
  %v61 = vld [vmem:[%s2] sm:$0xff]
  %63 = vset.pattern.permute.xlu0 0
  %64 = vperm.xlu0 %63, %v61
  %v65 = vpop.permute.xlu0 %64
  %vm67 = vcmask 293888
  %v69 = vsel %vm67, %v20, 0
  %vm71 = vcmask 1043456
  %v73 = vsel %vm71, %v53, 0
  %v76 = vsel %vm71, %v54, 0
  %v79 = vsel %vm71, %v55, 0
  %v82 = vsel %vm71, %v56, 0
  %v85 = vsel %vm71, %v57, 0
  %v88 = vsel %vm71, %v58, 0
  %v91 = vsel %vm71, %v59, 0
  %v94 = vsel %vm71, %v60, 0
  %96 = vmatprep.subr.mxu0 %v22
  %97 = vmatpush1.msra.mxu0 %v21
  %98 = vmatprep.subr.mxu0 %v30
  %99 = vmatpush1.msra.mxu0 %v29
  %100 = vmatprep.subr.mxu0 %v38
  %101 = vmatpush1.msra.mxu0 %v37
  %102 = vmatprep.subr.mxu0 %v46
  %103 = vmatpush1.msra.mxu0 %v45
  %104 = vmatprep.subr.mxu0 %v76
  %105 = vmatpush1.msra.mxu0 %v73
  %106 = vmatprep.subr.mxu0 0.0
  %107 = vmatpush1.msra.mxu0 0.0
  %108 = vmatprep.subr.mxu0 0.0
  %109 = vmatpush1.msra.mxu0 0.0
  %110 = vmatprep.subr.mxu0 0.0
  %111 = vmatpush1.msra.mxu0 0.0
  %112 = vmatprep.subr.mxu0 0.0
  %113 = vmatpush1.msra.mxu0 0.0
  %114 = vmatprep.subr.mxu0 0.0
  %115 = vmatpush1.msra.mxu0 0.0
  %116 = vmatprep.subr.mxu0 0.0
  %117 = vmatpush1.msra.mxu0 0.0
  %118 = vmatprep.subr.mxu0 0.0
  %119 = vmatpush1.msra.mxu0 0.0
  %120 = vmatprep.subr.mxu0 0.0
  %121 = vmatpush1.msra.mxu0 0.0
  %122 = vmatprep.subr.mxu0 0.0
  %123 = vmatpush1.msra.mxu0 0.0
  %124 = vmatprep.subr.mxu0 0.0
  %125 = vmatpush1.msra.mxu0 0.0
  %126 = vmatprep.subr.mxu0 0.0
  %127 = vmatpush1.msra.mxu0 0.0
  %128 = vmatprep.subr.mxu0 0.0
  %129 = vmatpush1.msra.mxu0 0.0
  %130 = vmatprep.subr.mxu0 0.0
  %131 = vmatpush1.msra.mxu0 0.0
  %132 = vmatprep.subr.mxu0 0.0
  %133 = vmatpush1.msra.mxu0 0.0
  %134 = vmatprep.subr.mxu0 0.0
  %135 = vmatpush1.msra.mxu0 0.0
  %136 = vmatprep.subr.mxu0 0.0
  %137 = vmatpush1.msra.mxu0 0.0
  %138 = vmatprep.subr.mxu0 0.0
  %139 = vmatpush1.msra.mxu0 0.0
  %140 = vmatprep.subr.mxu0 0.0
  %141 = vmatpush1.msra.mxu0 0.0
  %142 = vmatprep.subr.mxu0 0.0
  %143 = vmatpush1.msra.mxu0 0.0
  %144 = vmatprep.subr.mxu0 0.0
  %145 = vmatpush1.msra.mxu0 0.0
  %146 = vmatprep.subr.mxu0 0.0
  %147 = vmatpush1.msra.mxu0 0.0
  %148 = vmatprep.subr.mxu0 0.0
  %149 = vmatpush1.msra.mxu0 0.0
  %150 = vmatprep.subr.mxu0 0.0
  %151 = vmatpush1.msra.mxu0 0.0
  %152 = vmatprep.subr.mxu0 0.0
  %153 = vmatpush1.msra.mxu0 0.0
  %154 = vmatprep.subr.mxu0 0.0
  %155 = vmatpush1.msra.mxu0 0.0
  %156 = vmatprep.subr.mxu0 0.0
  %157 = vmatpush1.msra.mxu0 0.0
  %158 = vmatprep.subr.mxu0 0.0
  %159 = vmatpush1.msra.mxu0 0.0
  %160 = vmatprep.mubr.f32.mxu0 0.0
  %161 = vmatmul.mubr.f32.gmra.mrb[0].mxu0 %v69
  %v162 = vpop.f32.mrb[0].mxu0
  %v163 = vadd.f32 %v65, %v162
  %v164 = vpop.f32.mrb[0].mxu0
  %v165 = vadd.f32 %v65, %v164
  %166 = vdwg.mxu0
  %167 = vmatprep.subr.mxu0 %v24
  %168 = vmatpush1.msra.mxu0 %v23
  %169 = vmatprep.subr.mxu0 %v32
  %170 = vmatpush1.msra.mxu0 %v31
  %171 = vmatprep.subr.mxu0 %v40
  %172 = vmatpush1.msra.mxu0 %v39
  %173 = vmatprep.subr.mxu0 %v48
  %174 = vmatpush1.msra.mxu0 %v47
  %175 = vmatprep.subr.mxu0 %v82
  %176 = vmatpush1.msra.mxu0 %v79
  %177 = vmatprep.subr.mxu0 0.0
  %178 = vmatpush1.msra.mxu0 0.0
  %179 = vmatprep.subr.mxu0 0.0
  %180 = vmatpush1.msra.mxu0 0.0
  %181 = vmatprep.subr.mxu0 0.0
  %182 = vmatpush1.msra.mxu0 0.0
  %183 = vmatprep.subr.mxu0 0.0
  %184 = vmatpush1.msra.mxu0 0.0
  %185 = vmatprep.subr.mxu0 0.0
  %186 = vmatpush1.msra.mxu0 0.0
  %187 = vmatprep.subr.mxu0 0.0
  %188 = vmatpush1.msra.mxu0 0.0
  %189 = vmatprep.subr.mxu0 0.0
  %190 = vmatpush1.msra.mxu0 0.0
  %191 = vmatprep.subr.mxu0 0.0
  %192 = vmatpush1.msra.mxu0 0.0
  %193 = vmatprep.subr.mxu0 0.0
  %194 = vmatpush1.msra.mxu0 0.0
  %195 = vmatprep.subr.mxu0 0.0
  %196 = vmatpush1.msra.mxu0 0.0
  %197 = vmatprep.subr.mxu0 0.0
  %198 = vmatpush1.msra.mxu0 0.0
  %199 = vmatprep.subr.mxu0 0.0
  %200 = vmatpush1.msra.mxu0 0.0
  %201 = vmatprep.subr.mxu0 0.0
  %202 = vmatpush1.msra.mxu0 0.0
  %203 = vmatprep.subr.mxu0 0.0
  %204 = vmatpush1.msra.mxu0 0.0
  %205 = vmatprep.subr.mxu0 0.0
  %206 = vmatpush1.msra.mxu0 0.0
  %207 = vmatprep.subr.mxu0 0.0
  %208 = vmatpush1.msra.mxu0 0.0
  %209 = vmatprep.subr.mxu0 0.0
  %210 = vmatpush1.msra.mxu0 0.0
  %211 = vmatprep.subr.mxu0 0.0
  %212 = vmatpush1.msra.mxu0 0.0
  %213 = vmatprep.subr.mxu0 0.0
  %214 = vmatpush1.msra.mxu0 0.0
  %215 = vmatprep.subr.mxu0 0.0
  %216 = vmatpush1.msra.mxu0 0.0
  %217 = vmatprep.subr.mxu0 0.0
  %218 = vmatpush1.msra.mxu0 0.0
  %219 = vmatprep.subr.mxu0 0.0
  %220 = vmatpush1.msra.mxu0 0.0
  %221 = vmatprep.subr.mxu0 0.0
  %222 = vmatpush1.msra.mxu0 0.0
  %223 = vmatprep.subr.mxu0 0.0
  %224 = vmatpush1.msra.mxu0 0.0
  %225 = vmatprep.subr.mxu0 0.0
  %226 = vmatpush1.msra.mxu0 0.0
  %227 = vmatprep.subr.mxu0 0.0
  %228 = vmatpush1.msra.mxu0 0.0
  %229 = vmatprep.subr.mxu0 0.0
  %230 = vmatpush1.msra.mxu0 0.0
  %231 = vmatprep.mubr.f32.mxu0 0.0
  %232 = vmatmul.mubr.f32.gmra.mrb[0].mxu0 %v69
  %v233 = vpop.f32.mrb[0].mxu0
  %v234 = vadd.f32 %v65, %v233
  %v235 = vpop.f32.mrb[0].mxu0
  %v236 = vadd.f32 %v65, %v235
  %237 = vdwg.mxu0
  %238 = vmatprep.subr.mxu0 %v26
  %239 = vmatpush1.msra.mxu0 %v25
  %240 = vmatprep.subr.mxu0 %v34
  %241 = vmatpush1.msra.mxu0 %v33
  %242 = vmatprep.subr.mxu0 %v42
  %243 = vmatpush1.msra.mxu0 %v41
  %244 = vmatprep.subr.mxu0 %v50
  %245 = vmatpush1.msra.mxu0 %v49
  %246 = vmatprep.subr.mxu0 %v88
  %247 = vmatpush1.msra.mxu0 %v85
  %248 = vmatprep.subr.mxu0 0.0
  %249 = vmatpush1.msra.mxu0 0.0
  %250 = vmatprep.subr.mxu0 0.0
  %251 = vmatpush1.msra.mxu0 0.0
  %252 = vmatprep.subr.mxu0 0.0
  %253 = vmatpush1.msra.mxu0 0.0
  %254 = vmatprep.subr.mxu0 0.0
  %255 = vmatpush1.msra.mxu0 0.0
  %256 = vmatprep.subr.mxu0 0.0
  %257 = vmatpush1.msra.mxu0 0.0
  %258 = vmatprep.subr.mxu0 0.0
  %259 = vmatpush1.msra.mxu0 0.0
  %260 = vmatprep.subr.mxu0 0.0
  %261 = vmatpush1.msra.mxu0 0.0
  %262 = vmatprep.subr.mxu0 0.0
  %263 = vmatpush1.msra.mxu0 0.0
  %264 = vmatprep.subr.mxu0 0.0
  %265 = vmatpush1.msra.mxu0 0.0
  %266 = vmatprep.subr.mxu0 0.0
  %267 = vmatpush1.msra.mxu0 0.0
  %268 = vmatprep.subr.mxu0 0.0
  %269 = vmatpush1.msra.mxu0 0.0
  %270 = vmatprep.subr.mxu0 0.0
  %271 = vmatpush1.msra.mxu0 0.0
  %272 = vmatprep.subr.mxu0 0.0
  %273 = vmatpush1.msra.mxu0 0.0
  %274 = vmatprep.subr.mxu0 0.0
  %275 = vmatpush1.msra.mxu0 0.0
  %276 = vmatprep.subr.mxu0 0.0
  %277 = vmatpush1.msra.mxu0 0.0
  %278 = vmatprep.subr.mxu0 0.0
  %279 = vmatpush1.msra.mxu0 0.0
  %280 = vmatprep.subr.mxu0 0.0
  %281 = vmatpush1.msra.mxu0 0.0
  %282 = vmatprep.subr.mxu0 0.0
  %283 = vmatpush1.msra.mxu0 0.0
  %284 = vmatprep.subr.mxu0 0.0
  %285 = vmatpush1.msra.mxu0 0.0
  %286 = vmatprep.subr.mxu0 0.0
  %287 = vmatpush1.msra.mxu0 0.0
  %288 = vmatprep.subr.mxu0 0.0
  %289 = vmatpush1.msra.mxu0 0.0
  %290 = vmatprep.subr.mxu0 0.0
  %291 = vmatpush1.msra.mxu0 0.0
  %292 = vmatprep.subr.mxu0 0.0
  %293 = vmatpush1.msra.mxu0 0.0
  %294 = vmatprep.subr.mxu0 0.0
  %295 = vmatpush1.msra.mxu0 0.0
  %296 = vmatprep.subr.mxu0 0.0
  %297 = vmatpush1.msra.mxu0 0.0
  %298 = vmatprep.subr.mxu0 0.0
  %299 = vmatpush1.msra.mxu0 0.0
  %300 = vmatprep.subr.mxu0 0.0
  %301 = vmatpush1.msra.mxu0 0.0
  %302 = vmatprep.mubr.f32.mxu0 0.0
  %303 = vmatmul.mubr.f32.gmra.mrb[0].mxu0 %v69
  %v304 = vpop.f32.mrb[0].mxu0
  %v305 = vadd.f32 %v65, %v304
  %v306 = vpop.f32.mrb[0].mxu0
  %v307 = vadd.f32 %v65, %v306
  %308 = vdwg.mxu0
  %309 = vmatprep.subr.mxu0 %v28
  %310 = vmatpush1.msra.mxu0 %v27
  %311 = vmatprep.subr.mxu0 %v36
  %312 = vmatpush1.msra.mxu0 %v35
  %313 = vmatprep.subr.mxu0 %v44
  %314 = vmatpush1.msra.mxu0 %v43
  %315 = vmatprep.subr.mxu0 %v52
  %316 = vmatpush1.msra.mxu0 %v51
  %317 = vmatprep.subr.mxu0 %v94
  %318 = vmatpush1.msra.mxu0 %v91
  %319 = vmatprep.subr.mxu0 0.0
  %320 = vmatpush1.msra.mxu0 0.0
  %321 = vmatprep.subr.mxu0 0.0
  %322 = vmatpush1.msra.mxu0 0.0
  %323 = vmatprep.subr.mxu0 0.0
  %324 = vmatpush1.msra.mxu0 0.0
  %325 = vmatprep.subr.mxu0 0.0
  %326 = vmatpush1.msra.mxu0 0.0
  %327 = vmatprep.subr.mxu0 0.0
  %328 = vmatpush1.msra.mxu0 0.0
  %329 = vmatprep.subr.mxu0 0.0
  %330 = vmatpush1.msra.mxu0 0.0
  %331 = vmatprep.subr.mxu0 0.0
  %332 = vmatpush1.msra.mxu0 0.0
  %333 = vmatprep.subr.mxu0 0.0
  %334 = vmatpush1.msra.mxu0 0.0
  %335 = vmatprep.subr.mxu0 0.0
  %336 = vmatpush1.msra.mxu0 0.0
  %337 = vmatprep.subr.mxu0 0.0
  %338 = vmatpush1.msra.mxu0 0.0
  %339 = vmatprep.subr.mxu0 0.0
  %340 = vmatpush1.msra.mxu0 0.0
  %341 = vmatprep.subr.mxu0 0.0
  %342 = vmatpush1.msra.mxu0 0.0
  %343 = vmatprep.subr.mxu0 0.0
  %344 = vmatpush1.msra.mxu0 0.0
  %345 = vmatprep.subr.mxu0 0.0
  %346 = vmatpush1.msra.mxu0 0.0
  %347 = vmatprep.subr.mxu0 0.0
  %348 = vmatpush1.msra.mxu0 0.0
  %349 = vmatprep.subr.mxu0 0.0
  %350 = vmatpush1.msra.mxu0 0.0
  %351 = vmatprep.subr.mxu0 0.0
  %352 = vmatpush1.msra.mxu0 0.0
  %353 = vmatprep.subr.mxu0 0.0
  %354 = vmatpush1.msra.mxu0 0.0
  %355 = vmatprep.subr.mxu0 0.0
  %356 = vmatpush1.msra.mxu0 0.0
  %357 = vmatprep.subr.mxu0 0.0
  %358 = vmatpush1.msra.mxu0 0.0
  %359 = vmatprep.subr.mxu0 0.0
  %360 = vmatpush1.msra.mxu0 0.0
  %361 = vmatprep.subr.mxu0 0.0
  %362 = vmatpush1.msra.mxu0 0.0
  %363 = vmatprep.subr.mxu0 0.0
  %364 = vmatpush1.msra.mxu0 0.0
  %365 = vmatprep.subr.mxu0 0.0
  %366 = vmatpush1.msra.mxu0 0.0
  %367 = vmatprep.subr.mxu0 0.0
  %368 = vmatpush1.msra.mxu0 0.0
  %369 = vmatprep.subr.mxu0 0.0
  %370 = vmatpush1.msra.mxu0 0.0
  %371 = vmatprep.subr.mxu0 0.0
  %372 = vmatpush1.msra.mxu0 0.0
  %373 = vmatprep.mubr.f32.mxu0 0.0
  %374 = vmatmul.mubr.f32.gmra.mrb[0].mxu0 %v69
  %v375 = vpop.f32.mrb[0].mxu0
  %v376 = vadd.f32 %v65, %v375
  %v377 = vpop.f32.mrb[0].mxu0
  %v378 = vadd.f32 %v65, %v377
  %379 = vdwg.mxu0
  %v380 = vmax.f32 %v163, 0.0
  %v381 = vmax.f32 %v165, 0.0
  %v382 = vmax.f32 %v234, 0.0
  %v383 = vmax.f32 %v236, 0.0
  %v384 = vmax.f32 %v305, 0.0
  %v385 = vmax.f32 %v307, 0.0
  %v386 = vmax.f32 %v376, 0.0
  %v387 = vmax.f32 %v378, 0.0
  %v388 = vld [vmem:[%s3] sm:$0xff]
  %390 = vset.pattern.permute.xlu0 0
  %391 = vperm.xlu0 %390, %v388
  %v392 = vpop.permute.xlu0 %391
  %v394 = vmul.f32 %v380, %v392
  %v395 = vmul.f32 %v381, %v392
  %v396 = vmul.f32 %v382, %v392
  %v397 = vmul.f32 %v383, %v392
  %v398 = vmul.f32 %v384, %v392
  %v399 = vmul.f32 %v385, %v392
  %v400 = vmul.f32 %v386, %v392
  %v401 = vmul.f32 %v387, %v392
  %v402 = vld [vmem:[%s4] sm:$0xff]
  %404 = vset.pattern.permute.xlu0 0
  %405 = vperm.xlu0 %404, %v402
  %v406 = vpop.permute.xlu0 %405
  %v408 = vadd.f32 %v394, %v406
  %v409 = vadd.f32 %v395, %v406
  %v410 = vadd.f32 %v396, %v406
  %v411 = vadd.f32 %v397, %v406
  %v412 = vadd.f32 %v398, %v406
  %v413 = vadd.f32 %v399, %v406
  %v414 = vadd.f32 %v400, %v406
  %v415 = vadd.f32 %v401, %v406
  %416 = vst [vmem:[%s5] sm:$0xff] %v408
  %417 = vst [vmem:[%s5 + $0x8] sm:$0xff] %v409
  %418 = vst [vmem:[%s5 + $0x10] sm:$0xff] %v410
  %419 = vst [vmem:[%s5 + $0x18] sm:$0xff] %v411
  %420 = vst [vmem:[%s5 + $0x20] sm:$0xff] %v412
  %421 = vst [vmem:[%s5 + $0x28] sm:$0xff] %v413
  %422 = vst [vmem:[%s5 + $0x30] sm:$0xff] %v414
  %423 = vst [vmem:[%s5 + $0x38] sm:$0xff] %v415
  // Predicated region
  $region22: #{siamese_forward.5} parent=0 // pred_check
    _
  $region23: #{siamese_forward.5} parent=0 // pred_check_branch
    %425 = sbr.rel (0) target = $region25
  $region24: #{siamese_forward.5} parent=0 // pred_region
    _
  $region25: #{siamese_forward.5} parent=0 // pred_fallthru
    _
  // Predicated region
  $region26: #{siamese_forward.5} parent=0 // pred_check
    _
  $region27: #{siamese_forward.5} parent=0 // pred_check_branch
    %427 = sbr.rel (0) target = $region29
  $region28: #{siamese_forward.5} parent=0 // pred_region
    _
  $region29: #{siamese_forward.5} parent=0 // pred_fallthru
    _

// kernel: siamese_forward.6
$region0: #{siamese_forward.6}
  #allocation0 [shape = 'u32[]', space=smem, size = 0x4, offset = 0x4, fixed_abs, tag = 'smem constant byte address 0x4 - core index']
  #allocation1 [shape = 'u32[144,128]{1,0:T(1,128)}', space=vmem, size = 0x12000, scoped, tag = 'internal scratch']
  %s0 = inlined_call_operand.vmem [shape: f32[72,1024], index: 0, kind: input, shape index: {}]
  %s1 = inlined_call_operand.vmem [shape: f32[8,72], index: 1, kind: input, shape index: {}]
  %s2 = inlined_call_operand.vmem [shape: f32[8,1], index: 2, kind: input, shape index: {}]
  %s3 = inlined_call_operand.vmem [shape: f32[8,1], index: 3, kind: input, shape index: {}]
  %s4 = inlined_call_operand.vmem [shape: f32[8,1], index: 4, kind: input, shape index: {}]
  %s5 = inlined_call_operand.vmem [shape: f32[8,1024], index: 5, kind: output, shape index: {}]
  %s6 = sld [smem:[#allocation0]]
  $region30: #{siamese_forward.6} parent=0
    _
  %s8 = ssub.s32 1, %s6
  %s9 = scalar_select 0, %s8, %s6
  // Predicated region
  $region2: #{siamese_forward.6} parent=0 // pred_check
    _
  $region3: #{siamese_forward.6} parent=0 // pred_check_branch
    %11 = sbr.rel (0) target = $region5
  $region4: #{siamese_forward.6} parent=0 // pred_region
    _
  $region5: #{siamese_forward.6} parent=0 // pred_fallthru
    _
  // Predicated region
  $region6: #{siamese_forward.6} parent=0 // pred_check
    _
  $region7: #{siamese_forward.6} parent=0 // pred_check_branch
    %13 = sbr.rel (0) target = $region9
  $region8: #{siamese_forward.6} parent=0 // pred_region
    _
  $region9: #{siamese_forward.6} parent=0 // pred_fallthru
    _
  // Predicated region
  $region10: #{siamese_forward.6} parent=0 // pred_check
    _
  $region11: #{siamese_forward.6} parent=0 // pred_check_branch
    %15 = sbr.rel (0) target = $region13
  $region12: #{siamese_forward.6} parent=0 // pred_region
    _
  $region13: #{siamese_forward.6} parent=0 // pred_fallthru
    _
  // Predicated region
  $region14: #{siamese_forward.6} parent=0 // pred_check
    _
  $region15: #{siamese_forward.6} parent=0 // pred_check_branch
    %17 = sbr.rel (0) target = $region17
  $region16: #{siamese_forward.6} parent=0 // pred_region
    _
  $region17: #{siamese_forward.6} parent=0 // pred_fallthru
    _
  // Predicated region
  $region18: #{siamese_forward.6} parent=0 // pred_check
    _
  $region19: #{siamese_forward.6} parent=0 // pred_check_branch
    %19 = sbr.rel (0) target = $region21
  $region20: #{siamese_forward.6} parent=0 // pred_region
    _
  $region21: #{siamese_forward.6} parent=0 // pred_fallthru
    _
  %v20 = vld [vmem:[%s1] sm:$0xff]
  %v21 = vld [vmem:[%s0] sm:$0xff]
  %v22 = vld [vmem:[%s0 + $0x8] sm:$0xff]
  %v23 = vld [vmem:[%s0 + $0x10] sm:$0xff]
  %v24 = vld [vmem:[%s0 + $0x18] sm:$0xff]
  %v25 = vld [vmem:[%s0 + $0x20] sm:$0xff]
  %v26 = vld [vmem:[%s0 + $0x28] sm:$0xff]
  %v27 = vld [vmem:[%s0 + $0x30] sm:$0xff]
  %v28 = vld [vmem:[%s0 + $0x38] sm:$0xff]
  %v29 = vld [vmem:[%s0 + $0x40] sm:$0xff]
  %v30 = vld [vmem:[%s0 + $0x48] sm:$0xff]
  %v31 = vld [vmem:[%s0 + $0x50] sm:$0xff]
  %v32 = vld [vmem:[%s0 + $0x58] sm:$0xff]
  %v33 = vld [vmem:[%s0 + $0x60] sm:$0xff]
  %v34 = vld [vmem:[%s0 + $0x68] sm:$0xff]
  %v35 = vld [vmem:[%s0 + $0x70] sm:$0xff]
  %v36 = vld [vmem:[%s0 + $0x78] sm:$0xff]
  %v37 = vld [vmem:[%s0 + $0x80] sm:$0xff]
  %v38 = vld [vmem:[%s0 + $0x88] sm:$0xff]
  %v39 = vld [vmem:[%s0 + $0x90] sm:$0xff]
  %v40 = vld [vmem:[%s0 + $0x98] sm:$0xff]
  %v41 = vld [vmem:[%s0 + $0xa0] sm:$0xff]
  %v42 = vld [vmem:[%s0 + $0xa8] sm:$0xff]
  %v43 = vld [vmem:[%s0 + $0xb0] sm:$0xff]
  %v44 = vld [vmem:[%s0 + $0xb8] sm:$0xff]
  %v45 = vld [vmem:[%s0 + $0xc0] sm:$0xff]
  %v46 = vld [vmem:[%s0 + $0xc8] sm:$0xff]
  %v47 = vld [vmem:[%s0 + $0xd0] sm:$0xff]
  %v48 = vld [vmem:[%s0 + $0xd8] sm:$0xff]
  %v49 = vld [vmem:[%s0 + $0xe0] sm:$0xff]
  %v50 = vld [vmem:[%s0 + $0xe8] sm:$0xff]
  %v51 = vld [vmem:[%s0 + $0xf0] sm:$0xff]
  %v52 = vld [vmem:[%s0 + $0xf8] sm:$0xff]
  %v53 = vld [vmem:[%s0 + $0x100] sm:$0xff]
  %v54 = vld [vmem:[%s0 + $0x108] sm:$0xff]
  %v55 = vld [vmem:[%s0 + $0x110] sm:$0xff]
  %v56 = vld [vmem:[%s0 + $0x118] sm:$0xff]
  %v57 = vld [vmem:[%s0 + $0x120] sm:$0xff]
  %v58 = vld [vmem:[%s0 + $0x128] sm:$0xff]
  %v59 = vld [vmem:[%s0 + $0x130] sm:$0xff]
  %v60 = vld [vmem:[%s0 + $0x138] sm:$0xff]
  %v61 = vld [vmem:[%s0 + $0x140] sm:$0xff]
  %v62 = vld [vmem:[%s0 + $0x148] sm:$0xff]
  %v63 = vld [vmem:[%s0 + $0x150] sm:$0xff]
  %v64 = vld [vmem:[%s0 + $0x158] sm:$0xff]
  %v65 = vld [vmem:[%s0 + $0x160] sm:$0xff]
  %v66 = vld [vmem:[%s0 + $0x168] sm:$0xff]
  %v67 = vld [vmem:[%s0 + $0x170] sm:$0xff]
  %v68 = vld [vmem:[%s0 + $0x178] sm:$0xff]
  %v69 = vld [vmem:[%s0 + $0x180] sm:$0xff]
  %v70 = vld [vmem:[%s0 + $0x188] sm:$0xff]
  %v71 = vld [vmem:[%s0 + $0x190] sm:$0xff]
  %v72 = vld [vmem:[%s0 + $0x198] sm:$0xff]
  %v73 = vld [vmem:[%s0 + $0x1a0] sm:$0xff]
  %v74 = vld [vmem:[%s0 + $0x1a8] sm:$0xff]
  %v75 = vld [vmem:[%s0 + $0x1b0] sm:$0xff]
  %v76 = vld [vmem:[%s0 + $0x1b8] sm:$0xff]
  %v77 = vld [vmem:[%s0 + $0x1c0] sm:$0xff]
  %v78 = vld [vmem:[%s0 + $0x1c8] sm:$0xff]
  %v79 = vld [vmem:[%s0 + $0x1d0] sm:$0xff]
  %v80 = vld [vmem:[%s0 + $0x1d8] sm:$0xff]
  %v81 = vld [vmem:[%s0 + $0x1e0] sm:$0xff]
  %v82 = vld [vmem:[%s0 + $0x1e8] sm:$0xff]
  %v83 = vld [vmem:[%s0 + $0x1f0] sm:$0xff]
  %v84 = vld [vmem:[%s0 + $0x1f8] sm:$0xff]
  %v85 = vld [vmem:[%s0 + $0x200] sm:$0xff]
  %v86 = vld [vmem:[%s0 + $0x208] sm:$0xff]
  %v87 = vld [vmem:[%s0 + $0x210] sm:$0xff]
  %v88 = vld [vmem:[%s0 + $0x218] sm:$0xff]
  %v89 = vld [vmem:[%s0 + $0x220] sm:$0xff]
  %v90 = vld [vmem:[%s0 + $0x228] sm:$0xff]
  %v91 = vld [vmem:[%s0 + $0x230] sm:$0xff]
  %v92 = vld [vmem:[%s0 + $0x238] sm:$0xff]
  %v93 = vld [vmem:[%s2] sm:$0xff]
  %95 = vset.pattern.permute.xlu0 0
  %96 = vperm.xlu0 %95, %v93
  %v97 = vpop.permute.xlu0 %96
  %vm99 = vcmask 588800
  %v101 = vsel %vm99, %v20, 0
  %103 = vmatprep.subr.mxu0 %v22
  %104 = vmatpush1.msra.mxu0 %v21
  %105 = vmatprep.subr.mxu0 %v30
  %106 = vmatpush1.msra.mxu0 %v29
  %107 = vmatprep.subr.mxu0 %v38
  %108 = vmatpush1.msra.mxu0 %v37
  %109 = vmatprep.subr.mxu0 %v46
  %110 = vmatpush1.msra.mxu0 %v45
  %111 = vmatprep.subr.mxu0 %v54
  %112 = vmatpush1.msra.mxu0 %v53
  %113 = vmatprep.subr.mxu0 %v62
  %114 = vmatpush1.msra.mxu0 %v61
  %115 = vmatprep.subr.mxu0 %v70
  %116 = vmatpush1.msra.mxu0 %v69
  %117 = vmatprep.subr.mxu0 %v78
  %118 = vmatpush1.msra.mxu0 %v77
  %119 = vmatprep.subr.mxu0 %v86
  %120 = vmatpush1.msra.mxu0 %v85
  %121 = vmatprep.subr.mxu0 0.0
  %122 = vmatpush1.msra.mxu0 0.0
  %123 = vmatprep.subr.mxu0 0.0
  %124 = vmatpush1.msra.mxu0 0.0
  %125 = vmatprep.subr.mxu0 0.0
  %126 = vmatpush1.msra.mxu0 0.0
  %127 = vmatprep.subr.mxu0 0.0
  %128 = vmatpush1.msra.mxu0 0.0
  %129 = vmatprep.subr.mxu0 0.0
  %130 = vmatpush1.msra.mxu0 0.0
  %131 = vmatprep.subr.mxu0 0.0
  %132 = vmatpush1.msra.mxu0 0.0
  %133 = vmatprep.subr.mxu0 0.0
  %134 = vmatpush1.msra.mxu0 0.0
  %135 = vmatprep.subr.mxu0 0.0
  %136 = vmatpush1.msra.mxu0 0.0
  %137 = vmatprep.subr.mxu0 0.0
  %138 = vmatpush1.msra.mxu0 0.0
  %139 = vmatprep.subr.mxu0 0.0
  %140 = vmatpush1.msra.mxu0 0.0
  %141 = vmatprep.subr.mxu0 0.0
  %142 = vmatpush1.msra.mxu0 0.0
  %143 = vmatprep.subr.mxu0 0.0
  %144 = vmatpush1.msra.mxu0 0.0
  %145 = vmatprep.subr.mxu0 0.0
  %146 = vmatpush1.msra.mxu0 0.0
  %147 = vmatprep.subr.mxu0 0.0
  %148 = vmatpush1.msra.mxu0 0.0
  %149 = vmatprep.subr.mxu0 0.0
  %150 = vmatpush1.msra.mxu0 0.0
  %151 = vmatprep.subr.mxu0 0.0
  %152 = vmatpush1.msra.mxu0 0.0
  %153 = vmatprep.subr.mxu0 0.0
  %154 = vmatpush1.msra.mxu0 0.0
  %155 = vmatprep.subr.mxu0 0.0
  %156 = vmatpush1.msra.mxu0 0.0
  %157 = vmatprep.subr.mxu0 0.0
  %158 = vmatpush1.msra.mxu0 0.0
  %159 = vmatprep.subr.mxu0 0.0
  %160 = vmatpush1.msra.mxu0 0.0
  %161 = vmatprep.subr.mxu0 0.0
  %162 = vmatpush1.msra.mxu0 0.0
  %163 = vmatprep.subr.mxu0 0.0
  %164 = vmatpush1.msra.mxu0 0.0
  %165 = vmatprep.subr.mxu0 0.0
  %166 = vmatpush1.msra.mxu0 0.0
  %167 = vmatprep.mubr.f32.mxu0 0.0
  %168 = vmatmul.mubr.f32.gmra.mrb[0].mxu0 %v101
  %v169 = vpop.f32.mrb[0].mxu0
  %v170 = vadd.f32 %v97, %v169
  %v171 = vpop.f32.mrb[0].mxu0
  %v172 = vadd.f32 %v97, %v171
  %173 = vdwg.mxu0
  %174 = vmatprep.subr.mxu0 %v24
  %175 = vmatpush1.msra.mxu0 %v23
  %176 = vmatprep.subr.mxu0 %v32
  %177 = vmatpush1.msra.mxu0 %v31
  %178 = vmatprep.subr.mxu0 %v40
  %179 = vmatpush1.msra.mxu0 %v39
  %180 = vmatprep.subr.mxu0 %v48
  %181 = vmatpush1.msra.mxu0 %v47
  %182 = vmatprep.subr.mxu0 %v56
  %183 = vmatpush1.msra.mxu0 %v55
  %184 = vmatprep.subr.mxu0 %v64
  %185 = vmatpush1.msra.mxu0 %v63
  %186 = vmatprep.subr.mxu0 %v72
  %187 = vmatpush1.msra.mxu0 %v71
  %188 = vmatprep.subr.mxu0 %v80
  %189 = vmatpush1.msra.mxu0 %v79
  %190 = vmatprep.subr.mxu0 %v88
  %191 = vmatpush1.msra.mxu0 %v87
  %192 = vmatprep.subr.mxu0 0.0
  %193 = vmatpush1.msra.mxu0 0.0
  %194 = vmatprep.subr.mxu0 0.0
  %195 = vmatpush1.msra.mxu0 0.0
  %196 = vmatprep.subr.mxu0 0.0
  %197 = vmatpush1.msra.mxu0 0.0
  %198 = vmatprep.subr.mxu0 0.0
  %199 = vmatpush1.msra.mxu0 0.0
  %200 = vmatprep.subr.mxu0 0.0
  %201 = vmatpush1.msra.mxu0 0.0
  %202 = vmatprep.subr.mxu0 0.0
  %203 = vmatpush1.msra.mxu0 0.0
  %204 = vmatprep.subr.mxu0 0.0
  %205 = vmatpush1.msra.mxu0 0.0
  %206 = vmatprep.subr.mxu0 0.0
  %207 = vmatpush1.msra.mxu0 0.0
  %208 = vmatprep.subr.mxu0 0.0
  %209 = vmatpush1.msra.mxu0 0.0
  %210 = vmatprep.subr.mxu0 0.0
  %211 = vmatpush1.msra.mxu0 0.0
  %212 = vmatprep.subr.mxu0 0.0
  %213 = vmatpush1.msra.mxu0 0.0
  %214 = vmatprep.subr.mxu0 0.0
  %215 = vmatpush1.msra.mxu0 0.0
  %216 = vmatprep.subr.mxu0 0.0
  %217 = vmatpush1.msra.mxu0 0.0
  %218 = vmatprep.subr.mxu0 0.0
  %219 = vmatpush1.msra.mxu0 0.0
  %220 = vmatprep.subr.mxu0 0.0
  %221 = vmatpush1.msra.mxu0 0.0
  %222 = vmatprep.subr.mxu0 0.0
  %223 = vmatpush1.msra.mxu0 0.0
  %224 = vmatprep.subr.mxu0 0.0
  %225 = vmatpush1.msra.mxu0 0.0
  %226 = vmatprep.subr.mxu0 0.0
  %227 = vmatpush1.msra.mxu0 0.0
  %228 = vmatprep.subr.mxu0 0.0
  %229 = vmatpush1.msra.mxu0 0.0
  %230 = vmatprep.subr.mxu0 0.0
  %231 = vmatpush1.msra.mxu0 0.0
  %232 = vmatprep.subr.mxu0 0.0
  %233 = vmatpush1.msra.mxu0 0.0
  %234 = vmatprep.subr.mxu0 0.0
  %235 = vmatpush1.msra.mxu0 0.0
  %236 = vmatprep.subr.mxu0 0.0
  %237 = vmatpush1.msra.mxu0 0.0
  %238 = vmatprep.mubr.f32.mxu0 0.0
  %239 = vmatmul.mubr.f32.gmra.mrb[0].mxu0 %v101
  %v240 = vpop.f32.mrb[0].mxu0
  %v241 = vadd.f32 %v97, %v240
  %v242 = vpop.f32.mrb[0].mxu0
  %v243 = vadd.f32 %v97, %v242
  %244 = vdwg.mxu0
  %245 = vmatprep.subr.mxu0 %v26
  %246 = vmatpush1.msra.mxu0 %v25
  %247 = vmatprep.subr.mxu0 %v34
  %248 = vmatpush1.msra.mxu0 %v33
  %249 = vmatprep.subr.mxu0 %v42
  %250 = vmatpush1.msra.mxu0 %v41
  %251 = vmatprep.subr.mxu0 %v50
  %252 = vmatpush1.msra.mxu0 %v49
  %253 = vmatprep.subr.mxu0 %v58
  %254 = vmatpush1.msra.mxu0 %v57
  %255 = vmatprep.subr.mxu0 %v66
  %256 = vmatpush1.msra.mxu0 %v65
  %257 = vmatprep.subr.mxu0 %v74
  %258 = vmatpush1.msra.mxu0 %v73
  %259 = vmatprep.subr.mxu0 %v82
  %260 = vmatpush1.msra.mxu0 %v81
  %261 = vmatprep.subr.mxu0 %v90
  %262 = vmatpush1.msra.mxu0 %v89
  %263 = vmatprep.subr.mxu0 0.0
  %264 = vmatpush1.msra.mxu0 0.0
  %265 = vmatprep.subr.mxu0 0.0
  %266 = vmatpush1.msra.mxu0 0.0
  %267 = vmatprep.subr.mxu0 0.0
  %268 = vmatpush1.msra.mxu0 0.0
  %269 = vmatprep.subr.mxu0 0.0
  %270 = vmatpush1.msra.mxu0 0.0
  %271 = vmatprep.subr.mxu0 0.0
  %272 = vmatpush1.msra.mxu0 0.0
  %273 = vmatprep.subr.mxu0 0.0
  %274 = vmatpush1.msra.mxu0 0.0
  %275 = vmatprep.subr.mxu0 0.0
  %276 = vmatpush1.msra.mxu0 0.0
  %277 = vmatprep.subr.mxu0 0.0
  %278 = vmatpush1.msra.mxu0 0.0
  %279 = vmatprep.subr.mxu0 0.0
  %280 = vmatpush1.msra.mxu0 0.0
  %281 = vmatprep.subr.mxu0 0.0
  %282 = vmatpush1.msra.mxu0 0.0
  %283 = vmatprep.subr.mxu0 0.0
  %284 = vmatpush1.msra.mxu0 0.0
  %285 = vmatprep.subr.mxu0 0.0
  %286 = vmatpush1.msra.mxu0 0.0
  %287 = vmatprep.subr.mxu0 0.0
  %288 = vmatpush1.msra.mxu0 0.0
  %289 = vmatprep.subr.mxu0 0.0
  %290 = vmatpush1.msra.mxu0 0.0
  %291 = vmatprep.subr.mxu0 0.0
  %292 = vmatpush1.msra.mxu0 0.0
  %293 = vmatprep.subr.mxu0 0.0
  %294 = vmatpush1.msra.mxu0 0.0
  %295 = vmatprep.subr.mxu0 0.0
  %296 = vmatpush1.msra.mxu0 0.0
  %297 = vmatprep.subr.mxu0 0.0
  %298 = vmatpush1.msra.mxu0 0.0
  %299 = vmatprep.subr.mxu0 0.0
  %300 = vmatpush1.msra.mxu0 0.0
  %301 = vmatprep.subr.mxu0 0.0
  %302 = vmatpush1.msra.mxu0 0.0
  %303 = vmatprep.subr.mxu0 0.0
  %304 = vmatpush1.msra.mxu0 0.0
  %305 = vmatprep.subr.mxu0 0.0
  %306 = vmatpush1.msra.mxu0 0.0
  %307 = vmatprep.subr.mxu0 0.0
  %308 = vmatpush1.msra.mxu0 0.0
  %309 = vmatprep.mubr.f32.mxu0 0.0
  %310 = vmatmul.mubr.f32.gmra.mrb[0].mxu0 %v101
  %v311 = vpop.f32.mrb[0].mxu0
  %v312 = vadd.f32 %v97, %v311
  %v313 = vpop.f32.mrb[0].mxu0
  %v314 = vadd.f32 %v97, %v313
  %315 = vdwg.mxu0
  %316 = vmatprep.subr.mxu0 %v28
  %317 = vmatpush1.msra.mxu0 %v27
  %318 = vmatprep.subr.mxu0 %v36
  %319 = vmatpush1.msra.mxu0 %v35
  %320 = vmatprep.subr.mxu0 %v44
  %321 = vmatpush1.msra.mxu0 %v43
  %322 = vmatprep.subr.mxu0 %v52
  %323 = vmatpush1.msra.mxu0 %v51
  %324 = vmatprep.subr.mxu0 %v60
  %325 = vmatpush1.msra.mxu0 %v59
  %326 = vmatprep.subr.mxu0 %v68
  %327 = vmatpush1.msra.mxu0 %v67
  %328 = vmatprep.subr.mxu0 %v76
  %329 = vmatpush1.msra.mxu0 %v75
  %330 = vmatprep.subr.mxu0 %v84
  %331 = vmatpush1.msra.mxu0 %v83
  %332 = vmatprep.subr.mxu0 %v92
  %333 = vmatpush1.msra.mxu0 %v91
  %334 = vmatprep.subr.mxu0 0.0
  %335 = vmatpush1.msra.mxu0 0.0
  %336 = vmatprep.subr.mxu0 0.0
  %337 = vmatpush1.msra.mxu0 0.0
  %338 = vmatprep.subr.mxu0 0.0
  %339 = vmatpush1.msra.mxu0 0.0
  %340 = vmatprep.subr.mxu0 0.0
  %341 = vmatpush1.msra.mxu0 0.0
  %342 = vmatprep.subr.mxu0 0.0
  %343 = vmatpush1.msra.mxu0 0.0
  %344 = vmatprep.subr.mxu0 0.0
  %345 = vmatpush1.msra.mxu0 0.0
  %346 = vmatprep.subr.mxu0 0.0
  %347 = vmatpush1.msra.mxu0 0.0
  %348 = vmatprep.subr.mxu0 0.0
  %349 = vmatpush1.msra.mxu0 0.0
  %350 = vmatprep.subr.mxu0 0.0
  %351 = vmatpush1.msra.mxu0 0.0
  %352 = vmatprep.subr.mxu0 0.0
  %353 = vmatpush1.msra.mxu0 0.0
  %354 = vmatprep.subr.mxu0 0.0
  %355 = vmatpush1.msra.mxu0 0.0
  %356 = vmatprep.subr.mxu0 0.0
  %357 = vmatpush1.msra.mxu0 0.0
  %358 = vmatprep.subr.mxu0 0.0
  %359 = vmatpush1.msra.mxu0 0.0
  %360 = vmatprep.subr.mxu0 0.0
  %361 = vmatpush1.msra.mxu0 0.0
  %362 = vmatprep.subr.mxu0 0.0
  %363 = vmatpush1.msra.mxu0 0.0
  %364 = vmatprep.subr.mxu0 0.0
  %365 = vmatpush1.msra.mxu0 0.0
  %366 = vmatprep.subr.mxu0 0.0
  %367 = vmatpush1.msra.mxu0 0.0
  %368 = vmatprep.subr.mxu0 0.0
  %369 = vmatpush1.msra.mxu0 0.0
  %370 = vmatprep.subr.mxu0 0.0
  %371 = vmatpush1.msra.mxu0 0.0
  %372 = vmatprep.subr.mxu0 0.0
  %373 = vmatpush1.msra.mxu0 0.0
  %374 = vmatprep.subr.mxu0 0.0
  %375 = vmatpush1.msra.mxu0 0.0
  %376 = vmatprep.subr.mxu0 0.0
  %377 = vmatpush1.msra.mxu0 0.0
  %378 = vmatprep.subr.mxu0 0.0
  %379 = vmatpush1.msra.mxu0 0.0
  %380 = vmatprep.mubr.f32.mxu0 0.0
  %381 = vmatmul.mubr.f32.gmra.mrb[0].mxu0 %v101
  %v382 = vpop.f32.mrb[0].mxu0
  %v383 = vadd.f32 %v97, %v382
  %v384 = vpop.f32.mrb[0].mxu0
  %v385 = vadd.f32 %v97, %v384
  %386 = vdwg.mxu0
  %v387 = vmax.f32 %v170, 0.0
  %v388 = vmax.f32 %v172, 0.0
  %v389 = vmax.f32 %v241, 0.0
  %v390 = vmax.f32 %v243, 0.0
  %v391 = vmax.f32 %v312, 0.0
  %v392 = vmax.f32 %v314, 0.0
  %v393 = vmax.f32 %v383, 0.0
  %v394 = vmax.f32 %v385, 0.0
  %v395 = vld [vmem:[%s3] sm:$0xff]
  %397 = vset.pattern.permute.xlu0 0
  %398 = vperm.xlu0 %397, %v395
  %v399 = vpop.permute.xlu0 %398
  %v401 = vmul.f32 %v387, %v399
  %v402 = vmul.f32 %v388, %v399
  %v403 = vmul.f32 %v389, %v399
  %v404 = vmul.f32 %v390, %v399
  %v405 = vmul.f32 %v391, %v399
  %v406 = vmul.f32 %v392, %v399
  %v407 = vmul.f32 %v393, %v399
  %v408 = vmul.f32 %v394, %v399
  %v409 = vld [vmem:[%s4] sm:$0xff]
  %411 = vset.pattern.permute.xlu0 0
  %412 = vperm.xlu0 %411, %v409
  %v413 = vpop.permute.xlu0 %412
  %v415 = vadd.f32 %v401, %v413
  %v416 = vadd.f32 %v402, %v413
  %v417 = vadd.f32 %v403, %v413
  %v418 = vadd.f32 %v404, %v413
  %v419 = vadd.f32 %v405, %v413
  %v420 = vadd.f32 %v406, %v413
  %v421 = vadd.f32 %v407, %v413
  %v422 = vadd.f32 %v408, %v413
  %423 = vst [vmem:[%s5] sm:$0xff] %v415
  %424 = vst [vmem:[%s5 + $0x8] sm:$0xff] %v416
  %425 = vst [vmem:[%s5 + $0x10] sm:$0xff] %v417
  %426 = vst [vmem:[%s5 + $0x18] sm:$0xff] %v418
  %427 = vst [vmem:[%s5 + $0x20] sm:$0xff] %v419
  %428 = vst [vmem:[%s5 + $0x28] sm:$0xff] %v420
  %429 = vst [vmem:[%s5 + $0x30] sm:$0xff] %v421
  %430 = vst [vmem:[%s5 + $0x38] sm:$0xff] %v422
  // Predicated region
  $region22: #{siamese_forward.6} parent=0 // pred_check
    _
  $region23: #{siamese_forward.6} parent=0 // pred_check_branch
    %432 = sbr.rel (0) target = $region25
  $region24: #{siamese_forward.6} parent=0 // pred_region
    _
  $region25: #{siamese_forward.6} parent=0 // pred_fallthru
    _
  // Predicated region
  $region26: #{siamese_forward.6} parent=0 // pred_check
    _
  $region27: #{siamese_forward.6} parent=0 // pred_check_branch
    %434 = sbr.rel (0) target = $region29
  $region28: #{siamese_forward.6} parent=0 // pred_region
    _
  $region29: #{siamese_forward.6} parent=0 // pred_fallthru
    _

// kernel: siamese_forward.7
$region0: #{siamese_forward.7}
  #allocation0 [shape = 'u32[]', space=smem, size = 0x4, offset = 0x4, fixed_abs, tag = 'smem constant byte address 0x4 - core index']
  #allocation1 [shape = 'u32[144,128]{1,0:T(1,128)}', space=vmem, size = 0x12000, scoped, tag = 'internal scratch']
  %s0 = inlined_call_operand.vmem [shape: f32[4,2048], index: 0, kind: input, shape index: {}]
  %s1 = inlined_call_operand.vmem [shape: bf16[2048,512], index: 1, kind: input, shape index: {}]
  %s2 = inlined_call_operand.vmem [shape: f32[1,512], index: 2, kind: input, shape index: {}]
  %s3 = inlined_call_operand.vmem [shape: bf16[512,512], index: 3, kind: input, shape index: {}]
  %s4 = inlined_call_operand.vmem [shape: f32[1,512], index: 4, kind: input, shape index: {}]
  %s5 = inlined_call_operand.vmem [shape: bf16[512,5], index: 5, kind: input, shape index: {}]
  %s6 = inlined_call_operand.vmem [shape: f32[1,5], index: 6, kind: input, shape index: {}]
  %s7 = inlined_call_operand.vmem [shape: f32[4,5], index: 7, kind: output, shape index: {}]
  %s8 = sld [smem:[#allocation0]]
  $region38: #{siamese_forward.7} parent=0
    _
  %s10 = ssub.s32 1, %s8
  %s11 = scalar_select 0, %s10, %s8
  // Predicated region
  $region2: #{siamese_forward.7} parent=0 // pred_check
    _
  $region3: #{siamese_forward.7} parent=0 // pred_check_branch
    %13 = sbr.rel (0) target = $region5
  $region4: #{siamese_forward.7} parent=0 // pred_region
    _
  $region5: #{siamese_forward.7} parent=0 // pred_fallthru
    _
  // Predicated region
  $region6: #{siamese_forward.7} parent=0 // pred_check
    _
  $region7: #{siamese_forward.7} parent=0 // pred_check_branch
    %15 = sbr.rel (0) target = $region9
  $region8: #{siamese_forward.7} parent=0 // pred_region
    _
  $region9: #{siamese_forward.7} parent=0 // pred_fallthru
    _
  // Predicated region
  $region10: #{siamese_forward.7} parent=0 // pred_check
    _
  $region11: #{siamese_forward.7} parent=0 // pred_check_branch
    %17 = sbr.rel (0) target = $region13
  $region12: #{siamese_forward.7} parent=0 // pred_region
    _
  $region13: #{siamese_forward.7} parent=0 // pred_fallthru
    _
  // Predicated region
  $region14: #{siamese_forward.7} parent=0 // pred_check
    _
  $region15: #{siamese_forward.7} parent=0 // pred_check_branch
    %19 = sbr.rel (0) target = $region17
  $region16: #{siamese_forward.7} parent=0 // pred_region
    _
  $region17: #{siamese_forward.7} parent=0 // pred_fallthru
    _
  // Predicated region
  $region18: #{siamese_forward.7} parent=0 // pred_check
    _
  $region19: #{siamese_forward.7} parent=0 // pred_check_branch
    %21 = sbr.rel (0) target = $region21
  $region20: #{siamese_forward.7} parent=0 // pred_region
    _
  $region21: #{siamese_forward.7} parent=0 // pred_fallthru
    _
  // Predicated region
  $region22: #{siamese_forward.7} parent=0 // pred_check
    _
  $region23: #{siamese_forward.7} parent=0 // pred_check_branch
    %23 = sbr.rel (0) target = $region25
  $region24: #{siamese_forward.7} parent=0 // pred_region
    _
  $region25: #{siamese_forward.7} parent=0 // pred_fallthru
    _
  // Predicated region
  $region26: #{siamese_forward.7} parent=0 // pred_check
    _
  $region27: #{siamese_forward.7} parent=0 // pred_check_branch
    %25 = sbr.rel (0) target = $region29
  $region28: #{siamese_forward.7} parent=0 // pred_region
    _
  $region29: #{siamese_forward.7} parent=0 // pred_fallthru
    _
  %v27 = vld [vmem:[%s0] sm:$0xff]
  %v28 = vld [vmem:[%s0 + $0x8] sm:$0xff]
  %v29 = vld [vmem:[%s0 + $0x10] sm:$0xff]
  %v30 = vld [vmem:[%s0 + $0x18] sm:$0xff]
  %v31 = vld [vmem:[%s0 + $0x20] sm:$0xff]
  %v32 = vld [vmem:[%s0 + $0x28] sm:$0xff]
  %v33 = vld [vmem:[%s0 + $0x30] sm:$0xff]
  %v34 = vld [vmem:[%s0 + $0x38] sm:$0xff]
  %v43 = vcombine.high %v27, %v27
  %v44 = vcombine.high %v28, %v28
  %v45 = vcombine.high %v29, %v29
  %v46 = vcombine.high %v30, %v30
  %v47 = vcombine.high %v31, %v31
  %v48 = vcombine.high %v32, %v32
  %v49 = vcombine.high %v33, %v33
  %v50 = vcombine.high %v34, %v34
  %v59 = vpack.c.bf16 %v27, %v27
  %v60 = vpack.c.bf16 %v43, %v43
  %v61 = vpack.c.bf16 %v28, %v28
  %v62 = vpack.c.bf16 %v44, %v44
  %v63 = vpack.c.bf16 %v29, %v29
  %v64 = vpack.c.bf16 %v45, %v45
  %v65 = vpack.c.bf16 %v30, %v30
  %v66 = vpack.c.bf16 %v46, %v46
  %v67 = vpack.c.bf16 %v31, %v31
  %v68 = vpack.c.bf16 %v47, %v47
  %v69 = vpack.c.bf16 %v32, %v32
  %v70 = vpack.c.bf16 %v48, %v48
  %v71 = vpack.c.bf16 %v33, %v33
  %v72 = vpack.c.bf16 %v49, %v49
  %v73 = vpack.c.bf16 %v34, %v34
  %v74 = vpack.c.bf16 %v50, %v50
  %v75 = vld [vmem:[%s1] sm:$0xff]
  %v76 = vld [vmem:[%s1 + $0x8] sm:$0xff]
  %v77 = vld [vmem:[%s1 + $0x10] sm:$0xff]
  %v78 = vld [vmem:[%s1 + $0x18] sm:$0xff]
  %v79 = vld [vmem:[%s1 + $0x20] sm:$0xff]
  %v80 = vld [vmem:[%s1 + $0x28] sm:$0xff]
  %v81 = vld [vmem:[%s1 + $0x30] sm:$0xff]
  %v82 = vld [vmem:[%s1 + $0x38] sm:$0xff]
  %v83 = vld [vmem:[%s1 + $0x40] sm:$0xff]
  %v84 = vld [vmem:[%s1 + $0x48] sm:$0xff]
  %v85 = vld [vmem:[%s1 + $0x50] sm:$0xff]
  %v86 = vld [vmem:[%s1 + $0x58] sm:$0xff]
  %v87 = vld [vmem:[%s1 + $0x60] sm:$0xff]
  %v88 = vld [vmem:[%s1 + $0x68] sm:$0xff]
  %v89 = vld [vmem:[%s1 + $0x70] sm:$0xff]
  %v90 = vld [vmem:[%s1 + $0x78] sm:$0xff]
  %v91 = vld [vmem:[%s1 + $0x80] sm:$0xff]
  %v92 = vld [vmem:[%s1 + $0x88] sm:$0xff]
  %v93 = vld [vmem:[%s1 + $0x90] sm:$0xff]
  %v94 = vld [vmem:[%s1 + $0x98] sm:$0xff]
  %v95 = vld [vmem:[%s1 + $0xa0] sm:$0xff]
  %v96 = vld [vmem:[%s1 + $0xa8] sm:$0xff]
  %v97 = vld [vmem:[%s1 + $0xb0] sm:$0xff]
  %v98 = vld [vmem:[%s1 + $0xb8] sm:$0xff]
  %v99 = vld [vmem:[%s1 + $0xc0] sm:$0xff]
  %v100 = vld [vmem:[%s1 + $0xc8] sm:$0xff]
  %v101 = vld [vmem:[%s1 + $0xd0] sm:$0xff]
  %v102 = vld [vmem:[%s1 + $0xd8] sm:$0xff]
  %v103 = vld [vmem:[%s1 + $0xe0] sm:$0xff]
  %v104 = vld [vmem:[%s1 + $0xe8] sm:$0xff]
  %v105 = vld [vmem:[%s1 + $0xf0] sm:$0xff]
  %v106 = vld [vmem:[%s1 + $0xf8] sm:$0xff]
  %v107 = vld [vmem:[%s1 + $0x100] sm:$0xff]
  %v108 = vld [vmem:[%s1 + $0x108] sm:$0xff]
  %v109 = vld [vmem:[%s1 + $0x110] sm:$0xff]
  %v110 = vld [vmem:[%s1 + $0x118] sm:$0xff]
  %v111 = vld [vmem:[%s1 + $0x120] sm:$0xff]
  %v112 = vld [vmem:[%s1 + $0x128] sm:$0xff]
  %v113 = vld [vmem:[%s1 + $0x130] sm:$0xff]
  %v114 = vld [vmem:[%s1 + $0x138] sm:$0xff]
  %v115 = vld [vmem:[%s1 + $0x140] sm:$0xff]
  %v116 = vld [vmem:[%s1 + $0x148] sm:$0xff]
  %v117 = vld [vmem:[%s1 + $0x150] sm:$0xff]
  %v118 = vld [vmem:[%s1 + $0x158] sm:$0xff]
  %v119 = vld [vmem:[%s1 + $0x160] sm:$0xff]
  %v120 = vld [vmem:[%s1 + $0x168] sm:$0xff]
  %v121 = vld [vmem:[%s1 + $0x170] sm:$0xff]
  %v122 = vld [vmem:[%s1 + $0x178] sm:$0xff]
  %v123 = vld [vmem:[%s1 + $0x180] sm:$0xff]
  %v124 = vld [vmem:[%s1 + $0x188] sm:$0xff]
  %v125 = vld [vmem:[%s1 + $0x190] sm:$0xff]
  %v126 = vld [vmem:[%s1 + $0x198] sm:$0xff]
  %v127 = vld [vmem:[%s1 + $0x1a0] sm:$0xff]
  %v128 = vld [vmem:[%s1 + $0x1a8] sm:$0xff]
  %v129 = vld [vmem:[%s1 + $0x1b0] sm:$0xff]
  %v130 = vld [vmem:[%s1 + $0x1b8] sm:$0xff]
  %v131 = vld [vmem:[%s1 + $0x1c0] sm:$0xff]
  %v132 = vld [vmem:[%s1 + $0x1c8] sm:$0xff]
  %v133 = vld [vmem:[%s1 + $0x1d0] sm:$0xff]
  %v134 = vld [vmem:[%s1 + $0x1d8] sm:$0xff]
  %v135 = vld [vmem:[%s1 + $0x1e0] sm:$0xff]
  %v136 = vld [vmem:[%s1 + $0x1e8] sm:$0xff]
  %v137 = vld [vmem:[%s1 + $0x1f0] sm:$0xff]
  %v138 = vld [vmem:[%s1 + $0x1f8] sm:$0xff]
  %v139 = vld [vmem:[%s1 + $0x200] sm:$0xff]
  %v140 = vld [vmem:[%s1 + $0x208] sm:$0xff]
  %v141 = vld [vmem:[%s1 + $0x210] sm:$0xff]
  %v142 = vld [vmem:[%s1 + $0x218] sm:$0xff]
  %v143 = vld [vmem:[%s1 + $0x220] sm:$0xff]
  %v144 = vld [vmem:[%s1 + $0x228] sm:$0xff]
  %v145 = vld [vmem:[%s1 + $0x230] sm:$0xff]
  %v146 = vld [vmem:[%s1 + $0x238] sm:$0xff]
  %v147 = vld [vmem:[%s1 + $0x240] sm:$0xff]
  %v148 = vld [vmem:[%s1 + $0x248] sm:$0xff]
  %v149 = vld [vmem:[%s1 + $0x250] sm:$0xff]
  %v150 = vld [vmem:[%s1 + $0x258] sm:$0xff]
  %v151 = vld [vmem:[%s1 + $0x260] sm:$0xff]
  %v152 = vld [vmem:[%s1 + $0x268] sm:$0xff]
  %v153 = vld [vmem:[%s1 + $0x270] sm:$0xff]
  %v154 = vld [vmem:[%s1 + $0x278] sm:$0xff]
  %v155 = vld [vmem:[%s1 + $0x280] sm:$0xff]
  %v156 = vld [vmem:[%s1 + $0x288] sm:$0xff]
  %v157 = vld [vmem:[%s1 + $0x290] sm:$0xff]
  %v158 = vld [vmem:[%s1 + $0x298] sm:$0xff]
  %v159 = vld [vmem:[%s1 + $0x2a0] sm:$0xff]
  %v160 = vld [vmem:[%s1 + $0x2a8] sm:$0xff]
  %v161 = vld [vmem:[%s1 + $0x2b0] sm:$0xff]
  %v162 = vld [vmem:[%s1 + $0x2b8] sm:$0xff]
  %v163 = vld [vmem:[%s1 + $0x2c0] sm:$0xff]
  %v164 = vld [vmem:[%s1 + $0x2c8] sm:$0xff]
  %v165 = vld [vmem:[%s1 + $0x2d0] sm:$0xff]
  %v166 = vld [vmem:[%s1 + $0x2d8] sm:$0xff]
  %v167 = vld [vmem:[%s1 + $0x2e0] sm:$0xff]
  %v168 = vld [vmem:[%s1 + $0x2e8] sm:$0xff]
  %v169 = vld [vmem:[%s1 + $0x2f0] sm:$0xff]
  %v170 = vld [vmem:[%s1 + $0x2f8] sm:$0xff]
  %v171 = vld [vmem:[%s1 + $0x300] sm:$0xff]
  %v172 = vld [vmem:[%s1 + $0x308] sm:$0xff]
  %v173 = vld [vmem:[%s1 + $0x310] sm:$0xff]
  %v174 = vld [vmem:[%s1 + $0x318] sm:$0xff]
  %v175 = vld [vmem:[%s1 + $0x320] sm:$0xff]
  %v176 = vld [vmem:[%s1 + $0x328] sm:$0xff]
  %v177 = vld [vmem:[%s1 + $0x330] sm:$0xff]
  %v178 = vld [vmem:[%s1 + $0x338] sm:$0xff]
  %v179 = vld [vmem:[%s1 + $0x340] sm:$0xff]
  %v180 = vld [vmem:[%s1 + $0x348] sm:$0xff]
  %v181 = vld [vmem:[%s1 + $0x350] sm:$0xff]
  %v182 = vld [vmem:[%s1 + $0x358] sm:$0xff]
  %v183 = vld [vmem:[%s1 + $0x360] sm:$0xff]
  %v184 = vld [vmem:[%s1 + $0x368] sm:$0xff]
  %v185 = vld [vmem:[%s1 + $0x370] sm:$0xff]
  %v186 = vld [vmem:[%s1 + $0x378] sm:$0xff]
  %v187 = vld [vmem:[%s1 + $0x380] sm:$0xff]
  %v188 = vld [vmem:[%s1 + $0x388] sm:$0xff]
  %v189 = vld [vmem:[%s1 + $0x390] sm:$0xff]
  %v190 = vld [vmem:[%s1 + $0x398] sm:$0xff]
  %v191 = vld [vmem:[%s1 + $0x3a0] sm:$0xff]
  %v192 = vld [vmem:[%s1 + $0x3a8] sm:$0xff]
  %v193 = vld [vmem:[%s1 + $0x3b0] sm:$0xff]
  %v194 = vld [vmem:[%s1 + $0x3b8] sm:$0xff]
  %v195 = vld [vmem:[%s1 + $0x3c0] sm:$0xff]
  %v196 = vld [vmem:[%s1 + $0x3c8] sm:$0xff]
  %v197 = vld [vmem:[%s1 + $0x3d0] sm:$0xff]
  %v198 = vld [vmem:[%s1 + $0x3d8] sm:$0xff]
  %v199 = vld [vmem:[%s1 + $0x3e0] sm:$0xff]
  %v200 = vld [vmem:[%s1 + $0x3e8] sm:$0xff]
  %v201 = vld [vmem:[%s1 + $0x3f0] sm:$0xff]
  %v202 = vld [vmem:[%s1 + $0x3f8] sm:$0xff]
  %v203 = vld [vmem:[%s1 + $0x400] sm:$0xff]
  %v204 = vld [vmem:[%s1 + $0x408] sm:$0xff]
  %v205 = vld [vmem:[%s1 + $0x410] sm:$0xff]
  %v206 = vld [vmem:[%s1 + $0x418] sm:$0xff]
  %v207 = vld [vmem:[%s1 + $0x420] sm:$0xff]
  %v208 = vld [vmem:[%s1 + $0x428] sm:$0xff]
  %v209 = vld [vmem:[%s1 + $0x430] sm:$0xff]
  %v210 = vld [vmem:[%s1 + $0x438] sm:$0xff]
  %v211 = vld [vmem:[%s1 + $0x440] sm:$0xff]
  %v212 = vld [vmem:[%s1 + $0x448] sm:$0xff]
  %v213 = vld [vmem:[%s1 + $0x450] sm:$0xff]
  %v214 = vld [vmem:[%s1 + $0x458] sm:$0xff]
  %v215 = vld [vmem:[%s1 + $0x460] sm:$0xff]
  %v216 = vld [vmem:[%s1 + $0x468] sm:$0xff]
  %v217 = vld [vmem:[%s1 + $0x470] sm:$0xff]
  %v218 = vld [vmem:[%s1 + $0x478] sm:$0xff]
  %v219 = vld [vmem:[%s1 + $0x480] sm:$0xff]
  %v220 = vld [vmem:[%s1 + $0x488] sm:$0xff]
  %v221 = vld [vmem:[%s1 + $0x490] sm:$0xff]
  %v222 = vld [vmem:[%s1 + $0x498] sm:$0xff]
  %v223 = vld [vmem:[%s1 + $0x4a0] sm:$0xff]
  %v224 = vld [vmem:[%s1 + $0x4a8] sm:$0xff]
  %v225 = vld [vmem:[%s1 + $0x4b0] sm:$0xff]
  %v226 = vld [vmem:[%s1 + $0x4b8] sm:$0xff]
  %v227 = vld [vmem:[%s1 + $0x4c0] sm:$0xff]
  %v228 = vld [vmem:[%s1 + $0x4c8] sm:$0xff]
  %v229 = vld [vmem:[%s1 + $0x4d0] sm:$0xff]
  %v230 = vld [vmem:[%s1 + $0x4d8] sm:$0xff]
  %v231 = vld [vmem:[%s1 + $0x4e0] sm:$0xff]
  %v232 = vld [vmem:[%s1 + $0x4e8] sm:$0xff]
  %v233 = vld [vmem:[%s1 + $0x4f0] sm:$0xff]
  %v234 = vld [vmem:[%s1 + $0x4f8] sm:$0xff]
  %v235 = vld [vmem:[%s1 + $0x500] sm:$0xff]
  %v236 = vld [vmem:[%s1 + $0x508] sm:$0xff]
  %v237 = vld [vmem:[%s1 + $0x510] sm:$0xff]
  %v238 = vld [vmem:[%s1 + $0x518] sm:$0xff]
  %v239 = vld [vmem:[%s1 + $0x520] sm:$0xff]
  %v240 = vld [vmem:[%s1 + $0x528] sm:$0xff]
  %v241 = vld [vmem:[%s1 + $0x530] sm:$0xff]
  %v242 = vld [vmem:[%s1 + $0x538] sm:$0xff]
  %v243 = vld [vmem:[%s1 + $0x540] sm:$0xff]
  %v244 = vld [vmem:[%s1 + $0x548] sm:$0xff]
  %v245 = vld [vmem:[%s1 + $0x550] sm:$0xff]
  %v246 = vld [vmem:[%s1 + $0x558] sm:$0xff]
  %v247 = vld [vmem:[%s1 + $0x560] sm:$0xff]
  %v248 = vld [vmem:[%s1 + $0x568] sm:$0xff]
  %v249 = vld [vmem:[%s1 + $0x570] sm:$0xff]
  %v250 = vld [vmem:[%s1 + $0x578] sm:$0xff]
  %v251 = vld [vmem:[%s1 + $0x580] sm:$0xff]
  %v252 = vld [vmem:[%s1 + $0x588] sm:$0xff]
  %v253 = vld [vmem:[%s1 + $0x590] sm:$0xff]
  %v254 = vld [vmem:[%s1 + $0x598] sm:$0xff]
  %v255 = vld [vmem:[%s1 + $0x5a0] sm:$0xff]
  %v256 = vld [vmem:[%s1 + $0x5a8] sm:$0xff]
  %v257 = vld [vmem:[%s1 + $0x5b0] sm:$0xff]
  %v258 = vld [vmem:[%s1 + $0x5b8] sm:$0xff]
  %v259 = vld [vmem:[%s1 + $0x5c0] sm:$0xff]
  %v260 = vld [vmem:[%s1 + $0x5c8] sm:$0xff]
  %v261 = vld [vmem:[%s1 + $0x5d0] sm:$0xff]
  %v262 = vld [vmem:[%s1 + $0x5d8] sm:$0xff]
  %v263 = vld [vmem:[%s1 + $0x5e0] sm:$0xff]
  %v264 = vld [vmem:[%s1 + $0x5e8] sm:$0xff]
  %v265 = vld [vmem:[%s1 + $0x5f0] sm:$0xff]
  %v266 = vld [vmem:[%s1 + $0x5f8] sm:$0xff]
  %v267 = vld [vmem:[%s1 + $0x600] sm:$0xff]
  %v268 = vld [vmem:[%s1 + $0x608] sm:$0xff]
  %v269 = vld [vmem:[%s1 + $0x610] sm:$0xff]
  %v270 = vld [vmem:[%s1 + $0x618] sm:$0xff]
  %v271 = vld [vmem:[%s1 + $0x620] sm:$0xff]
  %v272 = vld [vmem:[%s1 + $0x628] sm:$0xff]
  %v273 = vld [vmem:[%s1 + $0x630] sm:$0xff]
  %v274 = vld [vmem:[%s1 + $0x638] sm:$0xff]
  %v275 = vld [vmem:[%s1 + $0x640] sm:$0xff]
  %v276 = vld [vmem:[%s1 + $0x648] sm:$0xff]
  %v277 = vld [vmem:[%s1 + $0x650] sm:$0xff]
  %v278 = vld [vmem:[%s1 + $0x658] sm:$0xff]
  %v279 = vld [vmem:[%s1 + $0x660] sm:$0xff]
  %v280 = vld [vmem:[%s1 + $0x668] sm:$0xff]
  %v281 = vld [vmem:[%s1 + $0x670] sm:$0xff]
  %v282 = vld [vmem:[%s1 + $0x678] sm:$0xff]
  %v283 = vld [vmem:[%s1 + $0x680] sm:$0xff]
  %v284 = vld [vmem:[%s1 + $0x688] sm:$0xff]
  %v285 = vld [vmem:[%s1 + $0x690] sm:$0xff]
  %v286 = vld [vmem:[%s1 + $0x698] sm:$0xff]
  %v287 = vld [vmem:[%s1 + $0x6a0] sm:$0xff]
  %v288 = vld [vmem:[%s1 + $0x6a8] sm:$0xff]
  %v289 = vld [vmem:[%s1 + $0x6b0] sm:$0xff]
  %v290 = vld [vmem:[%s1 + $0x6b8] sm:$0xff]
  %v291 = vld [vmem:[%s1 + $0x6c0] sm:$0xff]
  %v292 = vld [vmem:[%s1 + $0x6c8] sm:$0xff]
  %v293 = vld [vmem:[%s1 + $0x6d0] sm:$0xff]
  %v294 = vld [vmem:[%s1 + $0x6d8] sm:$0xff]
  %v295 = vld [vmem:[%s1 + $0x6e0] sm:$0xff]
  %v296 = vld [vmem:[%s1 + $0x6e8] sm:$0xff]
  %v297 = vld [vmem:[%s1 + $0x6f0] sm:$0xff]
  %v298 = vld [vmem:[%s1 + $0x6f8] sm:$0xff]
  %v299 = vld [vmem:[%s1 + $0x700] sm:$0xff]
  %v300 = vld [vmem:[%s1 + $0x708] sm:$0xff]
  %v301 = vld [vmem:[%s1 + $0x710] sm:$0xff]
  %v302 = vld [vmem:[%s1 + $0x718] sm:$0xff]
  %v303 = vld [vmem:[%s1 + $0x720] sm:$0xff]
  %v304 = vld [vmem:[%s1 + $0x728] sm:$0xff]
  %v305 = vld [vmem:[%s1 + $0x730] sm:$0xff]
  %v306 = vld [vmem:[%s1 + $0x738] sm:$0xff]
  %v307 = vld [vmem:[%s1 + $0x740] sm:$0xff]
  %v308 = vld [vmem:[%s1 + $0x748] sm:$0xff]
  %v309 = vld [vmem:[%s1 + $0x750] sm:$0xff]
  %v310 = vld [vmem:[%s1 + $0x758] sm:$0xff]
  %v311 = vld [vmem:[%s1 + $0x760] sm:$0xff]
  %v312 = vld [vmem:[%s1 + $0x768] sm:$0xff]
  %v313 = vld [vmem:[%s1 + $0x770] sm:$0xff]
  %v314 = vld [vmem:[%s1 + $0x778] sm:$0xff]
  %v315 = vld [vmem:[%s1 + $0x780] sm:$0xff]
  %v316 = vld [vmem:[%s1 + $0x788] sm:$0xff]
  %v317 = vld [vmem:[%s1 + $0x790] sm:$0xff]
  %v318 = vld [vmem:[%s1 + $0x798] sm:$0xff]
  %v319 = vld [vmem:[%s1 + $0x7a0] sm:$0xff]
  %v320 = vld [vmem:[%s1 + $0x7a8] sm:$0xff]
  %v321 = vld [vmem:[%s1 + $0x7b0] sm:$0xff]
  %v322 = vld [vmem:[%s1 + $0x7b8] sm:$0xff]
  %v323 = vld [vmem:[%s1 + $0x7c0] sm:$0xff]
  %v324 = vld [vmem:[%s1 + $0x7c8] sm:$0xff]
  %v325 = vld [vmem:[%s1 + $0x7d0] sm:$0xff]
  %v326 = vld [vmem:[%s1 + $0x7d8] sm:$0xff]
  %v327 = vld [vmem:[%s1 + $0x7e0] sm:$0xff]
  %v328 = vld [vmem:[%s1 + $0x7e8] sm:$0xff]
  %v329 = vld [vmem:[%s1 + $0x7f0] sm:$0xff]
  %v330 = vld [vmem:[%s1 + $0x7f8] sm:$0xff]
  %v331 = vld [vmem:[%s1 + $0x800] sm:$0xff]
  %v332 = vld [vmem:[%s1 + $0x808] sm:$0xff]
  %v333 = vld [vmem:[%s1 + $0x810] sm:$0xff]
  %v334 = vld [vmem:[%s1 + $0x818] sm:$0xff]
  %v335 = vld [vmem:[%s1 + $0x820] sm:$0xff]
  %v336 = vld [vmem:[%s1 + $0x828] sm:$0xff]
  %v337 = vld [vmem:[%s1 + $0x830] sm:$0xff]
  %v338 = vld [vmem:[%s1 + $0x838] sm:$0xff]
  %v339 = vld [vmem:[%s1 + $0x840] sm:$0xff]
  %v340 = vld [vmem:[%s1 + $0x848] sm:$0xff]
  %v341 = vld [vmem:[%s1 + $0x850] sm:$0xff]
  %v342 = vld [vmem:[%s1 + $0x858] sm:$0xff]
  %v343 = vld [vmem:[%s1 + $0x860] sm:$0xff]
  %v344 = vld [vmem:[%s1 + $0x868] sm:$0xff]
  %v345 = vld [vmem:[%s1 + $0x870] sm:$0xff]
  %v346 = vld [vmem:[%s1 + $0x878] sm:$0xff]
  %v347 = vld [vmem:[%s1 + $0x880] sm:$0xff]
  %v348 = vld [vmem:[%s1 + $0x888] sm:$0xff]
  %v349 = vld [vmem:[%s1 + $0x890] sm:$0xff]
  %v350 = vld [vmem:[%s1 + $0x898] sm:$0xff]
  %v351 = vld [vmem:[%s1 + $0x8a0] sm:$0xff]
  %v352 = vld [vmem:[%s1 + $0x8a8] sm:$0xff]
  %v353 = vld [vmem:[%s1 + $0x8b0] sm:$0xff]
  %v354 = vld [vmem:[%s1 + $0x8b8] sm:$0xff]
  %v355 = vld [vmem:[%s1 + $0x8c0] sm:$0xff]
  %v356 = vld [vmem:[%s1 + $0x8c8] sm:$0xff]
  %v357 = vld [vmem:[%s1 + $0x8d0] sm:$0xff]
  %v358 = vld [vmem:[%s1 + $0x8d8] sm:$0xff]
  %v359 = vld [vmem:[%s1 + $0x8e0] sm:$0xff]
  %v360 = vld [vmem:[%s1 + $0x8e8] sm:$0xff]
  %v361 = vld [vmem:[%s1 + $0x8f0] sm:$0xff]
  %v362 = vld [vmem:[%s1 + $0x8f8] sm:$0xff]
  %v363 = vld [vmem:[%s1 + $0x900] sm:$0xff]
  %v364 = vld [vmem:[%s1 + $0x908] sm:$0xff]
  %v365 = vld [vmem:[%s1 + $0x910] sm:$0xff]
  %v366 = vld [vmem:[%s1 + $0x918] sm:$0xff]
  %v367 = vld [vmem:[%s1 + $0x920] sm:$0xff]
  %v368 = vld [vmem:[%s1 + $0x928] sm:$0xff]
  %v369 = vld [vmem:[%s1 + $0x930] sm:$0xff]
  %v370 = vld [vmem:[%s1 + $0x938] sm:$0xff]
  %v371 = vld [vmem:[%s1 + $0x940] sm:$0xff]
  %v372 = vld [vmem:[%s1 + $0x948] sm:$0xff]
  %v373 = vld [vmem:[%s1 + $0x950] sm:$0xff]
  %v374 = vld [vmem:[%s1 + $0x958] sm:$0xff]
  %v375 = vld [vmem:[%s1 + $0x960] sm:$0xff]
  %v376 = vld [vmem:[%s1 + $0x968] sm:$0xff]
  %v377 = vld [vmem:[%s1 + $0x970] sm:$0xff]
  %v378 = vld [vmem:[%s1 + $0x978] sm:$0xff]
  %v379 = vld [vmem:[%s1 + $0x980] sm:$0xff]
  %v380 = vld [vmem:[%s1 + $0x988] sm:$0xff]
  %v381 = vld [vmem:[%s1 + $0x990] sm:$0xff]
  %v382 = vld [vmem:[%s1 + $0x998] sm:$0xff]
  %v383 = vld [vmem:[%s1 + $0x9a0] sm:$0xff]
  %v384 = vld [vmem:[%s1 + $0x9a8] sm:$0xff]
  %v385 = vld [vmem:[%s1 + $0x9b0] sm:$0xff]
  %v386 = vld [vmem:[%s1 + $0x9b8] sm:$0xff]
  %v387 = vld [vmem:[%s1 + $0x9c0] sm:$0xff]
  %v388 = vld [vmem:[%s1 + $0x9c8] sm:$0xff]
  %v389 = vld [vmem:[%s1 + $0x9d0] sm:$0xff]
  %v390 = vld [vmem:[%s1 + $0x9d8] sm:$0xff]
  %v391 = vld [vmem:[%s1 + $0x9e0] sm:$0xff]
  %v392 = vld [vmem:[%s1 + $0x9e8] sm:$0xff]
  %v393 = vld [vmem:[%s1 + $0x9f0] sm:$0xff]
  %v394 = vld [vmem:[%s1 + $0x9f8] sm:$0xff]
  %v395 = vld [vmem:[%s1 + $0xa00] sm:$0xff]
  %v396 = vld [vmem:[%s1 + $0xa08] sm:$0xff]
  %v397 = vld [vmem:[%s1 + $0xa10] sm:$0xff]
  %v398 = vld [vmem:[%s1 + $0xa18] sm:$0xff]
  %v399 = vld [vmem:[%s1 + $0xa20] sm:$0xff]
  %v400 = vld [vmem:[%s1 + $0xa28] sm:$0xff]
  %v401 = vld [vmem:[%s1 + $0xa30] sm:$0xff]
  %v402 = vld [vmem:[%s1 + $0xa38] sm:$0xff]
  %v403 = vld [vmem:[%s1 + $0xa40] sm:$0xff]
  %v404 = vld [vmem:[%s1 + $0xa48] sm:$0xff]
  %v405 = vld [vmem:[%s1 + $0xa50] sm:$0xff]
  %v406 = vld [vmem:[%s1 + $0xa58] sm:$0xff]
  %v407 = vld [vmem:[%s1 + $0xa60] sm:$0xff]
  %v408 = vld [vmem:[%s1 + $0xa68] sm:$0xff]
  %v409 = vld [vmem:[%s1 + $0xa70] sm:$0xff]
  %v410 = vld [vmem:[%s1 + $0xa78] sm:$0xff]
  %v411 = vld [vmem:[%s1 + $0xa80] sm:$0xff]
  %v412 = vld [vmem:[%s1 + $0xa88] sm:$0xff]
  %v413 = vld [vmem:[%s1 + $0xa90] sm:$0xff]
  %v414 = vld [vmem:[%s1 + $0xa98] sm:$0xff]
  %v415 = vld [vmem:[%s1 + $0xaa0] sm:$0xff]
  %v416 = vld [vmem:[%s1 + $0xaa8] sm:$0xff]
  %v417 = vld [vmem:[%s1 + $0xab0] sm:$0xff]
  %v418 = vld [vmem:[%s1 + $0xab8] sm:$0xff]
  %v419 = vld [vmem:[%s1 + $0xac0] sm:$0xff]
  %v420 = vld [vmem:[%s1 + $0xac8] sm:$0xff]
  %v421 = vld [vmem:[%s1 + $0xad0] sm:$0xff]
  %v422 = vld [vmem:[%s1 + $0xad8] sm:$0xff]
  %v423 = vld [vmem:[%s1 + $0xae0] sm:$0xff]
  %v424 = vld [vmem:[%s1 + $0xae8] sm:$0xff]
  %v425 = vld [vmem:[%s1 + $0xaf0] sm:$0xff]
  %v426 = vld [vmem:[%s1 + $0xaf8] sm:$0xff]
  %v427 = vld [vmem:[%s1 + $0xb00] sm:$0xff]
  %v428 = vld [vmem:[%s1 + $0xb08] sm:$0xff]
  %v429 = vld [vmem:[%s1 + $0xb10] sm:$0xff]
  %v430 = vld [vmem:[%s1 + $0xb18] sm:$0xff]
  %v431 = vld [vmem:[%s1 + $0xb20] sm:$0xff]
  %v432 = vld [vmem:[%s1 + $0xb28] sm:$0xff]
  %v433 = vld [vmem:[%s1 + $0xb30] sm:$0xff]
  %v434 = vld [vmem:[%s1 + $0xb38] sm:$0xff]
  %v435 = vld [vmem:[%s1 + $0xb40] sm:$0xff]
  %v436 = vld [vmem:[%s1 + $0xb48] sm:$0xff]
  %v437 = vld [vmem:[%s1 + $0xb50] sm:$0xff]
  %v438 = vld [vmem:[%s1 + $0xb58] sm:$0xff]
  %v439 = vld [vmem:[%s1 + $0xb60] sm:$0xff]
  %v440 = vld [vmem:[%s1 + $0xb68] sm:$0xff]
  %v441 = vld [vmem:[%s1 + $0xb70] sm:$0xff]
  %v442 = vld [vmem:[%s1 + $0xb78] sm:$0xff]
  %v443 = vld [vmem:[%s1 + $0xb80] sm:$0xff]
  %v444 = vld [vmem:[%s1 + $0xb88] sm:$0xff]
  %v445 = vld [vmem:[%s1 + $0xb90] sm:$0xff]
  %v446 = vld [vmem:[%s1 + $0xb98] sm:$0xff]
  %v447 = vld [vmem:[%s1 + $0xba0] sm:$0xff]
  %v448 = vld [vmem:[%s1 + $0xba8] sm:$0xff]
  %v449 = vld [vmem:[%s1 + $0xbb0] sm:$0xff]
  %v450 = vld [vmem:[%s1 + $0xbb8] sm:$0xff]
  %v451 = vld [vmem:[%s1 + $0xbc0] sm:$0xff]
  %v452 = vld [vmem:[%s1 + $0xbc8] sm:$0xff]
  %v453 = vld [vmem:[%s1 + $0xbd0] sm:$0xff]
  %v454 = vld [vmem:[%s1 + $0xbd8] sm:$0xff]
  %v455 = vld [vmem:[%s1 + $0xbe0] sm:$0xff]
  %v456 = vld [vmem:[%s1 + $0xbe8] sm:$0xff]
  %v457 = vld [vmem:[%s1 + $0xbf0] sm:$0xff]
  %v458 = vld [vmem:[%s1 + $0xbf8] sm:$0xff]
  %v459 = vld [vmem:[%s1 + $0xc00] sm:$0xff]
  %v460 = vld [vmem:[%s1 + $0xc08] sm:$0xff]
  %v461 = vld [vmem:[%s1 + $0xc10] sm:$0xff]
  %v462 = vld [vmem:[%s1 + $0xc18] sm:$0xff]
  %v463 = vld [vmem:[%s1 + $0xc20] sm:$0xff]
  %v464 = vld [vmem:[%s1 + $0xc28] sm:$0xff]
  %v465 = vld [vmem:[%s1 + $0xc30] sm:$0xff]
  %v466 = vld [vmem:[%s1 + $0xc38] sm:$0xff]
  %v467 = vld [vmem:[%s1 + $0xc40] sm:$0xff]
  %v468 = vld [vmem:[%s1 + $0xc48] sm:$0xff]
  %v469 = vld [vmem:[%s1 + $0xc50] sm:$0xff]
  %v470 = vld [vmem:[%s1 + $0xc58] sm:$0xff]
  %v471 = vld [vmem:[%s1 + $0xc60] sm:$0xff]
  %v472 = vld [vmem:[%s1 + $0xc68] sm:$0xff]
  %v473 = vld [vmem:[%s1 + $0xc70] sm:$0xff]
  %v474 = vld [vmem:[%s1 + $0xc78] sm:$0xff]
  %v475 = vld [vmem:[%s1 + $0xc80] sm:$0xff]
  %v476 = vld [vmem:[%s1 + $0xc88] sm:$0xff]
  %v477 = vld [vmem:[%s1 + $0xc90] sm:$0xff]
  %v478 = vld [vmem:[%s1 + $0xc98] sm:$0xff]
  %v479 = vld [vmem:[%s1 + $0xca0] sm:$0xff]
  %v480 = vld [vmem:[%s1 + $0xca8] sm:$0xff]
  %v481 = vld [vmem:[%s1 + $0xcb0] sm:$0xff]
  %v482 = vld [vmem:[%s1 + $0xcb8] sm:$0xff]
  %v483 = vld [vmem:[%s1 + $0xcc0] sm:$0xff]
  %v484 = vld [vmem:[%s1 + $0xcc8] sm:$0xff]
  %v485 = vld [vmem:[%s1 + $0xcd0] sm:$0xff]
  %v486 = vld [vmem:[%s1 + $0xcd8] sm:$0xff]
  %v487 = vld [vmem:[%s1 + $0xce0] sm:$0xff]
  %v488 = vld [vmem:[%s1 + $0xce8] sm:$0xff]
  %v489 = vld [vmem:[%s1 + $0xcf0] sm:$0xff]
  %v490 = vld [vmem:[%s1 + $0xcf8] sm:$0xff]
  %v491 = vld [vmem:[%s1 + $0xd00] sm:$0xff]
  %v492 = vld [vmem:[%s1 + $0xd08] sm:$0xff]
  %v493 = vld [vmem:[%s1 + $0xd10] sm:$0xff]
  %v494 = vld [vmem:[%s1 + $0xd18] sm:$0xff]
  %v495 = vld [vmem:[%s1 + $0xd20] sm:$0xff]
  %v496 = vld [vmem:[%s1 + $0xd28] sm:$0xff]
  %v497 = vld [vmem:[%s1 + $0xd30] sm:$0xff]
  %v498 = vld [vmem:[%s1 + $0xd38] sm:$0xff]
  %v499 = vld [vmem:[%s1 + $0xd40] sm:$0xff]
  %v500 = vld [vmem:[%s1 + $0xd48] sm:$0xff]
  %v501 = vld [vmem:[%s1 + $0xd50] sm:$0xff]
  %v502 = vld [vmem:[%s1 + $0xd58] sm:$0xff]
  %v503 = vld [vmem:[%s1 + $0xd60] sm:$0xff]
  %v504 = vld [vmem:[%s1 + $0xd68] sm:$0xff]
  %v505 = vld [vmem:[%s1 + $0xd70] sm:$0xff]
  %v506 = vld [vmem:[%s1 + $0xd78] sm:$0xff]
  %v507 = vld [vmem:[%s1 + $0xd80] sm:$0xff]
  %v508 = vld [vmem:[%s1 + $0xd88] sm:$0xff]
  %v509 = vld [vmem:[%s1 + $0xd90] sm:$0xff]
  %v510 = vld [vmem:[%s1 + $0xd98] sm:$0xff]
  %v511 = vld [vmem:[%s1 + $0xda0] sm:$0xff]
  %v512 = vld [vmem:[%s1 + $0xda8] sm:$0xff]
  %v513 = vld [vmem:[%s1 + $0xdb0] sm:$0xff]
  %v514 = vld [vmem:[%s1 + $0xdb8] sm:$0xff]
  %v515 = vld [vmem:[%s1 + $0xdc0] sm:$0xff]
  %v516 = vld [vmem:[%s1 + $0xdc8] sm:$0xff]
  %v517 = vld [vmem:[%s1 + $0xdd0] sm:$0xff]
  %v518 = vld [vmem:[%s1 + $0xdd8] sm:$0xff]
  %v519 = vld [vmem:[%s1 + $0xde0] sm:$0xff]
  %v520 = vld [vmem:[%s1 + $0xde8] sm:$0xff]
  %v521 = vld [vmem:[%s1 + $0xdf0] sm:$0xff]
  %v522 = vld [vmem:[%s1 + $0xdf8] sm:$0xff]
  %v523 = vld [vmem:[%s1 + $0xe00] sm:$0xff]
  %v524 = vld [vmem:[%s1 + $0xe08] sm:$0xff]
  %v525 = vld [vmem:[%s1 + $0xe10] sm:$0xff]
  %v526 = vld [vmem:[%s1 + $0xe18] sm:$0xff]
  %v527 = vld [vmem:[%s1 + $0xe20] sm:$0xff]
  %v528 = vld [vmem:[%s1 + $0xe28] sm:$0xff]
  %v529 = vld [vmem:[%s1 + $0xe30] sm:$0xff]
  %v530 = vld [vmem:[%s1 + $0xe38] sm:$0xff]
  %v531 = vld [vmem:[%s1 + $0xe40] sm:$0xff]
  %v532 = vld [vmem:[%s1 + $0xe48] sm:$0xff]
  %v533 = vld [vmem:[%s1 + $0xe50] sm:$0xff]
  %v534 = vld [vmem:[%s1 + $0xe58] sm:$0xff]
  %v535 = vld [vmem:[%s1 + $0xe60] sm:$0xff]
  %v536 = vld [vmem:[%s1 + $0xe68] sm:$0xff]
  %v537 = vld [vmem:[%s1 + $0xe70] sm:$0xff]
  %v538 = vld [vmem:[%s1 + $0xe78] sm:$0xff]
  %v539 = vld [vmem:[%s1 + $0xe80] sm:$0xff]
  %v540 = vld [vmem:[%s1 + $0xe88] sm:$0xff]
  %v541 = vld [vmem:[%s1 + $0xe90] sm:$0xff]
  %v542 = vld [vmem:[%s1 + $0xe98] sm:$0xff]
  %v543 = vld [vmem:[%s1 + $0xea0] sm:$0xff]
  %v544 = vld [vmem:[%s1 + $0xea8] sm:$0xff]
  %v545 = vld [vmem:[%s1 + $0xeb0] sm:$0xff]
  %v546 = vld [vmem:[%s1 + $0xeb8] sm:$0xff]
  %v547 = vld [vmem:[%s1 + $0xec0] sm:$0xff]
  %v548 = vld [vmem:[%s1 + $0xec8] sm:$0xff]
  %v549 = vld [vmem:[%s1 + $0xed0] sm:$0xff]
  %v550 = vld [vmem:[%s1 + $0xed8] sm:$0xff]
  %v551 = vld [vmem:[%s1 + $0xee0] sm:$0xff]
  %v552 = vld [vmem:[%s1 + $0xee8] sm:$0xff]
  %v553 = vld [vmem:[%s1 + $0xef0] sm:$0xff]
  %v554 = vld [vmem:[%s1 + $0xef8] sm:$0xff]
  %v555 = vld [vmem:[%s1 + $0xf00] sm:$0xff]
  %v556 = vld [vmem:[%s1 + $0xf08] sm:$0xff]
  %v557 = vld [vmem:[%s1 + $0xf10] sm:$0xff]
  %v558 = vld [vmem:[%s1 + $0xf18] sm:$0xff]
  %v559 = vld [vmem:[%s1 + $0xf20] sm:$0xff]
  %v560 = vld [vmem:[%s1 + $0xf28] sm:$0xff]
  %v561 = vld [vmem:[%s1 + $0xf30] sm:$0xff]
  %v562 = vld [vmem:[%s1 + $0xf38] sm:$0xff]
  %v563 = vld [vmem:[%s1 + $0xf40] sm:$0xff]
  %v564 = vld [vmem:[%s1 + $0xf48] sm:$0xff]
  %v565 = vld [vmem:[%s1 + $0xf50] sm:$0xff]
  %v566 = vld [vmem:[%s1 + $0xf58] sm:$0xff]
  %v567 = vld [vmem:[%s1 + $0xf60] sm:$0xff]
  %v568 = vld [vmem:[%s1 + $0xf68] sm:$0xff]
  %v569 = vld [vmem:[%s1 + $0xf70] sm:$0xff]
  %v570 = vld [vmem:[%s1 + $0xf78] sm:$0xff]
  %v571 = vld [vmem:[%s1 + $0xf80] sm:$0xff]
  %v572 = vld [vmem:[%s1 + $0xf88] sm:$0xff]
  %v573 = vld [vmem:[%s1 + $0xf90] sm:$0xff]
  %v574 = vld [vmem:[%s1 + $0xf98] sm:$0xff]
  %v575 = vld [vmem:[%s1 + $0xfa0] sm:$0xff]
  %v576 = vld [vmem:[%s1 + $0xfa8] sm:$0xff]
  %v577 = vld [vmem:[%s1 + $0xfb0] sm:$0xff]
  %v578 = vld [vmem:[%s1 + $0xfb8] sm:$0xff]
  %v579 = vld [vmem:[%s1 + $0xfc0] sm:$0xff]
  %v580 = vld [vmem:[%s1 + $0xfc8] sm:$0xff]
  %v581 = vld [vmem:[%s1 + $0xfd0] sm:$0xff]
  %v582 = vld [vmem:[%s1 + $0xfd8] sm:$0xff]
  %v583 = vld [vmem:[%s1 + $0xfe0] sm:$0xff]
  %v584 = vld [vmem:[%s1 + $0xfe8] sm:$0xff]
  %v585 = vld [vmem:[%s1 + $0xff0] sm:$0xff]
  %v586 = vld [vmem:[%s1 + $0xff8] sm:$0xff]
  %v587 = vld [vmem:[%s2] sm:$0xf]
  %v589 = vlaneseq
  %v590 = vshrl.u32 %v589, 7
  %v591 = vsub.s32 0, %v590
  %v592 = vrot.slane %v587, %v591
  %v593 = vlaneseq
  %v594 = vshrl.u32 %v593, 7
  %v595 = vsub.s32 1, %v594
  %v596 = vrot.slane %v587, %v595
  %v597 = vlaneseq
  %v598 = vshrl.u32 %v597, 7
  %v599 = vsub.s32 2, %v598
  %v600 = vrot.slane %v587, %v599
  %v601 = vlaneseq
  %v602 = vshrl.u32 %v601, 7
  %v603 = vsub.s32 3, %v602
  %v604 = vrot.slane %v587, %v603
  %v1121 = vunpack.c.l.b16 %v75
  %v1122 = vunpack.c.h.b16 %v75
  %v1123 = vunpack.c.l.b16 %v76
  %v1124 = vunpack.c.h.b16 %v76
  %v1125 = vunpack.c.l.b16 %v77
  %v1126 = vunpack.c.h.b16 %v77
  %v1127 = vunpack.c.l.b16 %v78
  %v1128 = vunpack.c.h.b16 %v78
  %v1129 = vunpack.c.l.b16 %v79
  %v1130 = vunpack.c.h.b16 %v79
  %v1131 = vunpack.c.l.b16 %v80
  %v1132 = vunpack.c.h.b16 %v80
  %v1133 = vunpack.c.l.b16 %v81
  %v1134 = vunpack.c.h.b16 %v81
  %v1135 = vunpack.c.l.b16 %v82
  %v1136 = vunpack.c.h.b16 %v82
  %v1137 = vunpack.c.l.b16 %v83
  %v1138 = vunpack.c.h.b16 %v83
  %v1139 = vunpack.c.l.b16 %v84
  %v1140 = vunpack.c.h.b16 %v84
  %v1141 = vunpack.c.l.b16 %v85
  %v1142 = vunpack.c.h.b16 %v85
  %v1143 = vunpack.c.l.b16 %v86
  %v1144 = vunpack.c.h.b16 %v86
  %v1145 = vunpack.c.l.b16 %v87
  %v1146 = vunpack.c.h.b16 %v87
  %v1147 = vunpack.c.l.b16 %v88
  %v1148 = vunpack.c.h.b16 %v88
  %v1149 = vunpack.c.l.b16 %v89
  %v1150 = vunpack.c.h.b16 %v89
  %v1151 = vunpack.c.l.b16 %v90
  %v1152 = vunpack.c.h.b16 %v90
  %v1153 = vunpack.c.l.b16 %v91
  %v1154 = vunpack.c.h.b16 %v91
  %v1155 = vunpack.c.l.b16 %v92
  %v1156 = vunpack.c.h.b16 %v92
  %v1157 = vunpack.c.l.b16 %v93
  %v1158 = vunpack.c.h.b16 %v93
  %v1159 = vunpack.c.l.b16 %v94
  %v1160 = vunpack.c.h.b16 %v94
  %v1161 = vunpack.c.l.b16 %v95
  %v1162 = vunpack.c.h.b16 %v95
  %v1163 = vunpack.c.l.b16 %v96
  %v1164 = vunpack.c.h.b16 %v96
  %v1165 = vunpack.c.l.b16 %v97
  %v1166 = vunpack.c.h.b16 %v97
  %v1167 = vunpack.c.l.b16 %v98
  %v1168 = vunpack.c.h.b16 %v98
  %v1169 = vunpack.c.l.b16 %v99
  %v1170 = vunpack.c.h.b16 %v99
  %v1171 = vunpack.c.l.b16 %v100
  %v1172 = vunpack.c.h.b16 %v100
  %v1173 = vunpack.c.l.b16 %v101
  %v1174 = vunpack.c.h.b16 %v101
  %v1175 = vunpack.c.l.b16 %v102
  %v1176 = vunpack.c.h.b16 %v102
  %v1177 = vunpack.c.l.b16 %v103
  %v1178 = vunpack.c.h.b16 %v103
  %v1179 = vunpack.c.l.b16 %v104
  %v1180 = vunpack.c.h.b16 %v104
  %v1181 = vunpack.c.l.b16 %v105
  %v1182 = vunpack.c.h.b16 %v105
  %v1183 = vunpack.c.l.b16 %v106
  %v1184 = vunpack.c.h.b16 %v106
  %v1185 = vunpack.c.l.b16 %v107
  %v1186 = vunpack.c.h.b16 %v107
  %v1187 = vunpack.c.l.b16 %v108
  %v1188 = vunpack.c.h.b16 %v108
  %v1189 = vunpack.c.l.b16 %v109
  %v1190 = vunpack.c.h.b16 %v109
  %v1191 = vunpack.c.l.b16 %v110
  %v1192 = vunpack.c.h.b16 %v110
  %v1193 = vunpack.c.l.b16 %v111
  %v1194 = vunpack.c.h.b16 %v111
  %v1195 = vunpack.c.l.b16 %v112
  %v1196 = vunpack.c.h.b16 %v112
  %v1197 = vunpack.c.l.b16 %v113
  %v1198 = vunpack.c.h.b16 %v113
  %v1199 = vunpack.c.l.b16 %v114
  %v1200 = vunpack.c.h.b16 %v114
  %v1201 = vunpack.c.l.b16 %v115
  %v1202 = vunpack.c.h.b16 %v115
  %v1203 = vunpack.c.l.b16 %v116
  %v1204 = vunpack.c.h.b16 %v116
  %v1205 = vunpack.c.l.b16 %v117
  %v1206 = vunpack.c.h.b16 %v117
  %v1207 = vunpack.c.l.b16 %v118
  %v1208 = vunpack.c.h.b16 %v118
  %v1209 = vunpack.c.l.b16 %v119
  %v1210 = vunpack.c.h.b16 %v119
  %v1211 = vunpack.c.l.b16 %v120
  %v1212 = vunpack.c.h.b16 %v120
  %v1213 = vunpack.c.l.b16 %v121
  %v1214 = vunpack.c.h.b16 %v121
  %v1215 = vunpack.c.l.b16 %v122
  %v1216 = vunpack.c.h.b16 %v122
  %v1217 = vunpack.c.l.b16 %v123
  %v1218 = vunpack.c.h.b16 %v123
  %v1219 = vunpack.c.l.b16 %v124
  %v1220 = vunpack.c.h.b16 %v124
  %v1221 = vunpack.c.l.b16 %v125
  %v1222 = vunpack.c.h.b16 %v125
  %v1223 = vunpack.c.l.b16 %v126
  %v1224 = vunpack.c.h.b16 %v126
  %v1225 = vunpack.c.l.b16 %v127
  %v1226 = vunpack.c.h.b16 %v127
  %v1227 = vunpack.c.l.b16 %v128
  %v1228 = vunpack.c.h.b16 %v128
  %v1229 = vunpack.c.l.b16 %v129
  %v1230 = vunpack.c.h.b16 %v129
  %v1231 = vunpack.c.l.b16 %v130
  %v1232 = vunpack.c.h.b16 %v130
  %v1233 = vunpack.c.l.b16 %v131
  %v1234 = vunpack.c.h.b16 %v131
  %v1235 = vunpack.c.l.b16 %v132
  %v1236 = vunpack.c.h.b16 %v132
  %v1237 = vunpack.c.l.b16 %v133
  %v1238 = vunpack.c.h.b16 %v133
  %v1239 = vunpack.c.l.b16 %v134
  %v1240 = vunpack.c.h.b16 %v134
  %v1241 = vunpack.c.l.b16 %v135
  %v1242 = vunpack.c.h.b16 %v135
  %v1243 = vunpack.c.l.b16 %v136
  %v1244 = vunpack.c.h.b16 %v136
  %v1245 = vunpack.c.l.b16 %v137
  %v1246 = vunpack.c.h.b16 %v137
  %v1247 = vunpack.c.l.b16 %v138
  %v1248 = vunpack.c.h.b16 %v138
  %v1249 = vunpack.c.l.b16 %v139
  %v1250 = vunpack.c.h.b16 %v139
  %v1251 = vunpack.c.l.b16 %v140
  %v1252 = vunpack.c.h.b16 %v140
  %v1253 = vunpack.c.l.b16 %v141
  %v1254 = vunpack.c.h.b16 %v141
  %v1255 = vunpack.c.l.b16 %v142
  %v1256 = vunpack.c.h.b16 %v142
  %v1257 = vunpack.c.l.b16 %v143
  %v1258 = vunpack.c.h.b16 %v143
  %v1259 = vunpack.c.l.b16 %v144
  %v1260 = vunpack.c.h.b16 %v144
  %v1261 = vunpack.c.l.b16 %v145
  %v1262 = vunpack.c.h.b16 %v145
  %v1263 = vunpack.c.l.b16 %v146
  %v1264 = vunpack.c.h.b16 %v146
  %v1265 = vunpack.c.l.b16 %v147
  %v1266 = vunpack.c.h.b16 %v147
  %v1267 = vunpack.c.l.b16 %v148
  %v1268 = vunpack.c.h.b16 %v148
  %v1269 = vunpack.c.l.b16 %v149
  %v1270 = vunpack.c.h.b16 %v149
  %v1271 = vunpack.c.l.b16 %v150
  %v1272 = vunpack.c.h.b16 %v150
  %v1273 = vunpack.c.l.b16 %v151
  %v1274 = vunpack.c.h.b16 %v151
  %v1275 = vunpack.c.l.b16 %v152
  %v1276 = vunpack.c.h.b16 %v152
  %v1277 = vunpack.c.l.b16 %v153
  %v1278 = vunpack.c.h.b16 %v153
  %v1279 = vunpack.c.l.b16 %v154
  %v1280 = vunpack.c.h.b16 %v154
  %v1281 = vunpack.c.l.b16 %v155
  %v1282 = vunpack.c.h.b16 %v155
  %v1283 = vunpack.c.l.b16 %v156
  %v1284 = vunpack.c.h.b16 %v156
  %v1285 = vunpack.c.l.b16 %v157
  %v1286 = vunpack.c.h.b16 %v157
  %v1287 = vunpack.c.l.b16 %v158
  %v1288 = vunpack.c.h.b16 %v158
  %v1289 = vunpack.c.l.b16 %v159
  %v1290 = vunpack.c.h.b16 %v159
  %v1291 = vunpack.c.l.b16 %v160
  %v1292 = vunpack.c.h.b16 %v160
  %v1293 = vunpack.c.l.b16 %v161
  %v1294 = vunpack.c.h.b16 %v161
  %v1295 = vunpack.c.l.b16 %v162
  %v1296 = vunpack.c.h.b16 %v162
  %v1297 = vunpack.c.l.b16 %v163
  %v1298 = vunpack.c.h.b16 %v163
  %v1299 = vunpack.c.l.b16 %v164
  %v1300 = vunpack.c.h.b16 %v164
  %v1301 = vunpack.c.l.b16 %v165
  %v1302 = vunpack.c.h.b16 %v165
  %v1303 = vunpack.c.l.b16 %v166
  %v1304 = vunpack.c.h.b16 %v166
  %v1305 = vunpack.c.l.b16 %v167
  %v1306 = vunpack.c.h.b16 %v167
  %v1307 = vunpack.c.l.b16 %v168
  %v1308 = vunpack.c.h.b16 %v168
  %v1309 = vunpack.c.l.b16 %v169
  %v1310 = vunpack.c.h.b16 %v169
  %v1311 = vunpack.c.l.b16 %v170
  %v1312 = vunpack.c.h.b16 %v170
  %v1313 = vunpack.c.l.b16 %v171
  %v1314 = vunpack.c.h.b16 %v171
  %v1315 = vunpack.c.l.b16 %v172
  %v1316 = vunpack.c.h.b16 %v172
  %v1317 = vunpack.c.l.b16 %v173
  %v1318 = vunpack.c.h.b16 %v173
  %v1319 = vunpack.c.l.b16 %v174
  %v1320 = vunpack.c.h.b16 %v174
  %v1321 = vunpack.c.l.b16 %v175
  %v1322 = vunpack.c.h.b16 %v175
  %v1323 = vunpack.c.l.b16 %v176
  %v1324 = vunpack.c.h.b16 %v176
  %v1325 = vunpack.c.l.b16 %v177
  %v1326 = vunpack.c.h.b16 %v177
  %v1327 = vunpack.c.l.b16 %v178
  %v1328 = vunpack.c.h.b16 %v178
  %v1329 = vunpack.c.l.b16 %v179
  %v1330 = vunpack.c.h.b16 %v179
  %v1331 = vunpack.c.l.b16 %v180
  %v1332 = vunpack.c.h.b16 %v180
  %v1333 = vunpack.c.l.b16 %v181
  %v1334 = vunpack.c.h.b16 %v181
  %v1335 = vunpack.c.l.b16 %v182
  %v1336 = vunpack.c.h.b16 %v182
  %v1337 = vunpack.c.l.b16 %v183
  %v1338 = vunpack.c.h.b16 %v183
  %v1339 = vunpack.c.l.b16 %v184
  %v1340 = vunpack.c.h.b16 %v184
  %v1341 = vunpack.c.l.b16 %v185
  %v1342 = vunpack.c.h.b16 %v185
  %v1343 = vunpack.c.l.b16 %v186
  %v1344 = vunpack.c.h.b16 %v186
  %v1345 = vunpack.c.l.b16 %v187
  %v1346 = vunpack.c.h.b16 %v187
  %v1347 = vunpack.c.l.b16 %v188
  %v1348 = vunpack.c.h.b16 %v188
  %v1349 = vunpack.c.l.b16 %v189
  %v1350 = vunpack.c.h.b16 %v189
  %v1351 = vunpack.c.l.b16 %v190
  %v1352 = vunpack.c.h.b16 %v190
  %v1353 = vunpack.c.l.b16 %v191
  %v1354 = vunpack.c.h.b16 %v191
  %v1355 = vunpack.c.l.b16 %v192
  %v1356 = vunpack.c.h.b16 %v192
  %v1357 = vunpack.c.l.b16 %v193
  %v1358 = vunpack.c.h.b16 %v193
  %v1359 = vunpack.c.l.b16 %v194
  %v1360 = vunpack.c.h.b16 %v194
  %v1361 = vunpack.c.l.b16 %v195
  %v1362 = vunpack.c.h.b16 %v195
  %v1363 = vunpack.c.l.b16 %v196
  %v1364 = vunpack.c.h.b16 %v196
  %v1365 = vunpack.c.l.b16 %v197
  %v1366 = vunpack.c.h.b16 %v197
  %v1367 = vunpack.c.l.b16 %v198
  %v1368 = vunpack.c.h.b16 %v198
  %v1369 = vunpack.c.l.b16 %v199
  %v1370 = vunpack.c.h.b16 %v199
  %v1371 = vunpack.c.l.b16 %v200
  %v1372 = vunpack.c.h.b16 %v200
  %v1373 = vunpack.c.l.b16 %v201
  %v1374 = vunpack.c.h.b16 %v201
  %v1375 = vunpack.c.l.b16 %v202
  %v1376 = vunpack.c.h.b16 %v202
  %v1377 = vunpack.c.l.b16 %v203
  %v1378 = vunpack.c.h.b16 %v203
  %v1379 = vunpack.c.l.b16 %v204
  %v1380 = vunpack.c.h.b16 %v204
  %v1381 = vunpack.c.l.b16 %v205
  %v1382 = vunpack.c.h.b16 %v205
  %v1383 = vunpack.c.l.b16 %v206
  %v1384 = vunpack.c.h.b16 %v206
  %v1385 = vunpack.c.l.b16 %v207
  %v1386 = vunpack.c.h.b16 %v207
  %v1387 = vunpack.c.l.b16 %v208
  %v1388 = vunpack.c.h.b16 %v208
  %v1389 = vunpack.c.l.b16 %v209
  %v1390 = vunpack.c.h.b16 %v209
  %v1391 = vunpack.c.l.b16 %v210
  %v1392 = vunpack.c.h.b16 %v210
  %v1393 = vunpack.c.l.b16 %v211
  %v1394 = vunpack.c.h.b16 %v211
  %v1395 = vunpack.c.l.b16 %v212
  %v1396 = vunpack.c.h.b16 %v212
  %v1397 = vunpack.c.l.b16 %v213
  %v1398 = vunpack.c.h.b16 %v213
  %v1399 = vunpack.c.l.b16 %v214
  %v1400 = vunpack.c.h.b16 %v214
  %v1401 = vunpack.c.l.b16 %v215
  %v1402 = vunpack.c.h.b16 %v215
  %v1403 = vunpack.c.l.b16 %v216
  %v1404 = vunpack.c.h.b16 %v216
  %v1405 = vunpack.c.l.b16 %v217
  %v1406 = vunpack.c.h.b16 %v217
  %v1407 = vunpack.c.l.b16 %v218
  %v1408 = vunpack.c.h.b16 %v218
  %v1409 = vunpack.c.l.b16 %v219
  %v1410 = vunpack.c.h.b16 %v219
  %v1411 = vunpack.c.l.b16 %v220
  %v1412 = vunpack.c.h.b16 %v220
  %v1413 = vunpack.c.l.b16 %v221
  %v1414 = vunpack.c.h.b16 %v221
  %v1415 = vunpack.c.l.b16 %v222
  %v1416 = vunpack.c.h.b16 %v222
  %v1417 = vunpack.c.l.b16 %v223
  %v1418 = vunpack.c.h.b16 %v223
  %v1419 = vunpack.c.l.b16 %v224
  %v1420 = vunpack.c.h.b16 %v224
  %v1421 = vunpack.c.l.b16 %v225
  %v1422 = vunpack.c.h.b16 %v225
  %v1423 = vunpack.c.l.b16 %v226
  %v1424 = vunpack.c.h.b16 %v226
  %v1425 = vunpack.c.l.b16 %v227
  %v1426 = vunpack.c.h.b16 %v227
  %v1427 = vunpack.c.l.b16 %v228
  %v1428 = vunpack.c.h.b16 %v228
  %v1429 = vunpack.c.l.b16 %v229
  %v1430 = vunpack.c.h.b16 %v229
  %v1431 = vunpack.c.l.b16 %v230
  %v1432 = vunpack.c.h.b16 %v230
  %v1433 = vunpack.c.l.b16 %v231
  %v1434 = vunpack.c.h.b16 %v231
  %v1435 = vunpack.c.l.b16 %v232
  %v1436 = vunpack.c.h.b16 %v232
  %v1437 = vunpack.c.l.b16 %v233
  %v1438 = vunpack.c.h.b16 %v233
  %v1439 = vunpack.c.l.b16 %v234
  %v1440 = vunpack.c.h.b16 %v234
  %v1441 = vunpack.c.l.b16 %v235
  %v1442 = vunpack.c.h.b16 %v235
  %v1443 = vunpack.c.l.b16 %v236
  %v1444 = vunpack.c.h.b16 %v236
  %v1445 = vunpack.c.l.b16 %v237
  %v1446 = vunpack.c.h.b16 %v237
  %v1447 = vunpack.c.l.b16 %v238
  %v1448 = vunpack.c.h.b16 %v238
  %v1449 = vunpack.c.l.b16 %v239
  %v1450 = vunpack.c.h.b16 %v239
  %v1451 = vunpack.c.l.b16 %v240
  %v1452 = vunpack.c.h.b16 %v240
  %v1453 = vunpack.c.l.b16 %v241
  %v1454 = vunpack.c.h.b16 %v241
  %v1455 = vunpack.c.l.b16 %v242
  %v1456 = vunpack.c.h.b16 %v242
  %v1457 = vunpack.c.l.b16 %v243
  %v1458 = vunpack.c.h.b16 %v243
  %v1459 = vunpack.c.l.b16 %v244
  %v1460 = vunpack.c.h.b16 %v244
  %v1461 = vunpack.c.l.b16 %v245
  %v1462 = vunpack.c.h.b16 %v245
  %v1463 = vunpack.c.l.b16 %v246
  %v1464 = vunpack.c.h.b16 %v246
  %v1465 = vunpack.c.l.b16 %v247
  %v1466 = vunpack.c.h.b16 %v247
  %v1467 = vunpack.c.l.b16 %v248
  %v1468 = vunpack.c.h.b16 %v248
  %v1469 = vunpack.c.l.b16 %v249
  %v1470 = vunpack.c.h.b16 %v249
  %v1471 = vunpack.c.l.b16 %v250
  %v1472 = vunpack.c.h.b16 %v250
  %v1473 = vunpack.c.l.b16 %v251
  %v1474 = vunpack.c.h.b16 %v251
  %v1475 = vunpack.c.l.b16 %v252
  %v1476 = vunpack.c.h.b16 %v252
  %v1477 = vunpack.c.l.b16 %v253
  %v1478 = vunpack.c.h.b16 %v253
  %v1479 = vunpack.c.l.b16 %v254
  %v1480 = vunpack.c.h.b16 %v254
  %v1481 = vunpack.c.l.b16 %v255
  %v1482 = vunpack.c.h.b16 %v255
  %v1483 = vunpack.c.l.b16 %v256
  %v1484 = vunpack.c.h.b16 %v256
  %v1485 = vunpack.c.l.b16 %v257
  %v1486 = vunpack.c.h.b16 %v257
  %v1487 = vunpack.c.l.b16 %v258
  %v1488 = vunpack.c.h.b16 %v258
  %v1489 = vunpack.c.l.b16 %v259
  %v1490 = vunpack.c.h.b16 %v259
  %v1491 = vunpack.c.l.b16 %v260
  %v1492 = vunpack.c.h.b16 %v260
  %v1493 = vunpack.c.l.b16 %v261
  %v1494 = vunpack.c.h.b16 %v261
  %v1495 = vunpack.c.l.b16 %v262
  %v1496 = vunpack.c.h.b16 %v262
  %v1497 = vunpack.c.l.b16 %v263
  %v1498 = vunpack.c.h.b16 %v263
  %v1499 = vunpack.c.l.b16 %v264
  %v1500 = vunpack.c.h.b16 %v264
  %v1501 = vunpack.c.l.b16 %v265
  %v1502 = vunpack.c.h.b16 %v265
  %v1503 = vunpack.c.l.b16 %v266
  %v1504 = vunpack.c.h.b16 %v266
  %v1505 = vunpack.c.l.b16 %v267
  %v1506 = vunpack.c.h.b16 %v267
  %v1507 = vunpack.c.l.b16 %v268
  %v1508 = vunpack.c.h.b16 %v268
  %v1509 = vunpack.c.l.b16 %v269
  %v1510 = vunpack.c.h.b16 %v269
  %v1511 = vunpack.c.l.b16 %v270
  %v1512 = vunpack.c.h.b16 %v270
  %v1513 = vunpack.c.l.b16 %v271
  %v1514 = vunpack.c.h.b16 %v271
  %v1515 = vunpack.c.l.b16 %v272
  %v1516 = vunpack.c.h.b16 %v272
  %v1517 = vunpack.c.l.b16 %v273
  %v1518 = vunpack.c.h.b16 %v273
  %v1519 = vunpack.c.l.b16 %v274
  %v1520 = vunpack.c.h.b16 %v274
  %v1521 = vunpack.c.l.b16 %v275
  %v1522 = vunpack.c.h.b16 %v275
  %v1523 = vunpack.c.l.b16 %v276
  %v1524 = vunpack.c.h.b16 %v276
  %v1525 = vunpack.c.l.b16 %v277
  %v1526 = vunpack.c.h.b16 %v277
  %v1527 = vunpack.c.l.b16 %v278
  %v1528 = vunpack.c.h.b16 %v278
  %v1529 = vunpack.c.l.b16 %v279
  %v1530 = vunpack.c.h.b16 %v279
  %v1531 = vunpack.c.l.b16 %v280
  %v1532 = vunpack.c.h.b16 %v280
  %v1533 = vunpack.c.l.b16 %v281
  %v1534 = vunpack.c.h.b16 %v281
  %v1535 = vunpack.c.l.b16 %v282
  %v1536 = vunpack.c.h.b16 %v282
  %v1537 = vunpack.c.l.b16 %v283
  %v1538 = vunpack.c.h.b16 %v283
  %v1539 = vunpack.c.l.b16 %v284
  %v1540 = vunpack.c.h.b16 %v284
  %v1541 = vunpack.c.l.b16 %v285
  %v1542 = vunpack.c.h.b16 %v285
  %v1543 = vunpack.c.l.b16 %v286
  %v1544 = vunpack.c.h.b16 %v286
  %v1545 = vunpack.c.l.b16 %v287
  %v1546 = vunpack.c.h.b16 %v287
  %v1547 = vunpack.c.l.b16 %v288
  %v1548 = vunpack.c.h.b16 %v288
  %v1549 = vunpack.c.l.b16 %v289
  %v1550 = vunpack.c.h.b16 %v289
  %v1551 = vunpack.c.l.b16 %v290
  %v1552 = vunpack.c.h.b16 %v290
  %v1553 = vunpack.c.l.b16 %v291
  %v1554 = vunpack.c.h.b16 %v291
  %v1555 = vunpack.c.l.b16 %v292
  %v1556 = vunpack.c.h.b16 %v292
  %v1557 = vunpack.c.l.b16 %v293
  %v1558 = vunpack.c.h.b16 %v293
  %v1559 = vunpack.c.l.b16 %v294
  %v1560 = vunpack.c.h.b16 %v294
  %v1561 = vunpack.c.l.b16 %v295
  %v1562 = vunpack.c.h.b16 %v295
  %v1563 = vunpack.c.l.b16 %v296
  %v1564 = vunpack.c.h.b16 %v296
  %v1565 = vunpack.c.l.b16 %v297
  %v1566 = vunpack.c.h.b16 %v297
  %v1567 = vunpack.c.l.b16 %v298
  %v1568 = vunpack.c.h.b16 %v298
  %v1569 = vunpack.c.l.b16 %v299
  %v1570 = vunpack.c.h.b16 %v299
  %v1571 = vunpack.c.l.b16 %v300
  %v1572 = vunpack.c.h.b16 %v300
  %v1573 = vunpack.c.l.b16 %v301
  %v1574 = vunpack.c.h.b16 %v301
  %v1575 = vunpack.c.l.b16 %v302
  %v1576 = vunpack.c.h.b16 %v302
  %v1577 = vunpack.c.l.b16 %v303
  %v1578 = vunpack.c.h.b16 %v303
  %v1579 = vunpack.c.l.b16 %v304
  %v1580 = vunpack.c.h.b16 %v304
  %v1581 = vunpack.c.l.b16 %v305
  %v1582 = vunpack.c.h.b16 %v305
  %v1583 = vunpack.c.l.b16 %v306
  %v1584 = vunpack.c.h.b16 %v306
  %v1585 = vunpack.c.l.b16 %v307
  %v1586 = vunpack.c.h.b16 %v307
  %v1587 = vunpack.c.l.b16 %v308
  %v1588 = vunpack.c.h.b16 %v308
  %v1589 = vunpack.c.l.b16 %v309
  %v1590 = vunpack.c.h.b16 %v309
  %v1591 = vunpack.c.l.b16 %v310
  %v1592 = vunpack.c.h.b16 %v310
  %v1593 = vunpack.c.l.b16 %v311
  %v1594 = vunpack.c.h.b16 %v311
  %v1595 = vunpack.c.l.b16 %v312
  %v1596 = vunpack.c.h.b16 %v312
  %v1597 = vunpack.c.l.b16 %v313
  %v1598 = vunpack.c.h.b16 %v313
  %v1599 = vunpack.c.l.b16 %v314
  %v1600 = vunpack.c.h.b16 %v314
  %v1601 = vunpack.c.l.b16 %v315
  %v1602 = vunpack.c.h.b16 %v315
  %v1603 = vunpack.c.l.b16 %v316
  %v1604 = vunpack.c.h.b16 %v316
  %v1605 = vunpack.c.l.b16 %v317
  %v1606 = vunpack.c.h.b16 %v317
  %v1607 = vunpack.c.l.b16 %v318
  %v1608 = vunpack.c.h.b16 %v318
  %v1609 = vunpack.c.l.b16 %v319
  %v1610 = vunpack.c.h.b16 %v319
  %v1611 = vunpack.c.l.b16 %v320
  %v1612 = vunpack.c.h.b16 %v320
  %v1613 = vunpack.c.l.b16 %v321
  %v1614 = vunpack.c.h.b16 %v321
  %v1615 = vunpack.c.l.b16 %v322
  %v1616 = vunpack.c.h.b16 %v322
  %v1617 = vunpack.c.l.b16 %v323
  %v1618 = vunpack.c.h.b16 %v323
  %v1619 = vunpack.c.l.b16 %v324
  %v1620 = vunpack.c.h.b16 %v324
  %v1621 = vunpack.c.l.b16 %v325
  %v1622 = vunpack.c.h.b16 %v325
  %v1623 = vunpack.c.l.b16 %v326
  %v1624 = vunpack.c.h.b16 %v326
  %v1625 = vunpack.c.l.b16 %v327
  %v1626 = vunpack.c.h.b16 %v327
  %v1627 = vunpack.c.l.b16 %v328
  %v1628 = vunpack.c.h.b16 %v328
  %v1629 = vunpack.c.l.b16 %v329
  %v1630 = vunpack.c.h.b16 %v329
  %v1631 = vunpack.c.l.b16 %v330
  %v1632 = vunpack.c.h.b16 %v330
  %v1633 = vunpack.c.l.b16 %v331
  %v1634 = vunpack.c.h.b16 %v331
  %v1635 = vunpack.c.l.b16 %v332
  %v1636 = vunpack.c.h.b16 %v332
  %v1637 = vunpack.c.l.b16 %v333
  %v1638 = vunpack.c.h.b16 %v333
  %v1639 = vunpack.c.l.b16 %v334
  %v1640 = vunpack.c.h.b16 %v334
  %v1641 = vunpack.c.l.b16 %v335
  %v1642 = vunpack.c.h.b16 %v335
  %v1643 = vunpack.c.l.b16 %v336
  %v1644 = vunpack.c.h.b16 %v336
  %v1645 = vunpack.c.l.b16 %v337
  %v1646 = vunpack.c.h.b16 %v337
  %v1647 = vunpack.c.l.b16 %v338
  %v1648 = vunpack.c.h.b16 %v338
  %v1649 = vunpack.c.l.b16 %v339
  %v1650 = vunpack.c.h.b16 %v339
  %v1651 = vunpack.c.l.b16 %v340
  %v1652 = vunpack.c.h.b16 %v340
  %v1653 = vunpack.c.l.b16 %v341
  %v1654 = vunpack.c.h.b16 %v341
  %v1655 = vunpack.c.l.b16 %v342
  %v1656 = vunpack.c.h.b16 %v342
  %v1657 = vunpack.c.l.b16 %v343
  %v1658 = vunpack.c.h.b16 %v343
  %v1659 = vunpack.c.l.b16 %v344
  %v1660 = vunpack.c.h.b16 %v344
  %v1661 = vunpack.c.l.b16 %v345
  %v1662 = vunpack.c.h.b16 %v345
  %v1663 = vunpack.c.l.b16 %v346
  %v1664 = vunpack.c.h.b16 %v346
  %v1665 = vunpack.c.l.b16 %v347
  %v1666 = vunpack.c.h.b16 %v347
  %v1667 = vunpack.c.l.b16 %v348
  %v1668 = vunpack.c.h.b16 %v348
  %v1669 = vunpack.c.l.b16 %v349
  %v1670 = vunpack.c.h.b16 %v349
  %v1671 = vunpack.c.l.b16 %v350
  %v1672 = vunpack.c.h.b16 %v350
  %v1673 = vunpack.c.l.b16 %v351
  %v1674 = vunpack.c.h.b16 %v351
  %v1675 = vunpack.c.l.b16 %v352
  %v1676 = vunpack.c.h.b16 %v352
  %v1677 = vunpack.c.l.b16 %v353
  %v1678 = vunpack.c.h.b16 %v353
  %v1679 = vunpack.c.l.b16 %v354
  %v1680 = vunpack.c.h.b16 %v354
  %v1681 = vunpack.c.l.b16 %v355
  %v1682 = vunpack.c.h.b16 %v355
  %v1683 = vunpack.c.l.b16 %v356
  %v1684 = vunpack.c.h.b16 %v356
  %v1685 = vunpack.c.l.b16 %v357
  %v1686 = vunpack.c.h.b16 %v357
  %v1687 = vunpack.c.l.b16 %v358
  %v1688 = vunpack.c.h.b16 %v358
  %v1689 = vunpack.c.l.b16 %v359
  %v1690 = vunpack.c.h.b16 %v359
  %v1691 = vunpack.c.l.b16 %v360
  %v1692 = vunpack.c.h.b16 %v360
  %v1693 = vunpack.c.l.b16 %v361
  %v1694 = vunpack.c.h.b16 %v361
  %v1695 = vunpack.c.l.b16 %v362
  %v1696 = vunpack.c.h.b16 %v362
  %v1697 = vunpack.c.l.b16 %v363
  %v1698 = vunpack.c.h.b16 %v363
  %v1699 = vunpack.c.l.b16 %v364
  %v1700 = vunpack.c.h.b16 %v364
  %v1701 = vunpack.c.l.b16 %v365
  %v1702 = vunpack.c.h.b16 %v365
  %v1703 = vunpack.c.l.b16 %v366
  %v1704 = vunpack.c.h.b16 %v366
  %v1705 = vunpack.c.l.b16 %v367
  %v1706 = vunpack.c.h.b16 %v367
  %v1707 = vunpack.c.l.b16 %v368
  %v1708 = vunpack.c.h.b16 %v368
  %v1709 = vunpack.c.l.b16 %v369
  %v1710 = vunpack.c.h.b16 %v369
  %v1711 = vunpack.c.l.b16 %v370
  %v1712 = vunpack.c.h.b16 %v370
  %v1713 = vunpack.c.l.b16 %v371
  %v1714 = vunpack.c.h.b16 %v371
  %v1715 = vunpack.c.l.b16 %v372
  %v1716 = vunpack.c.h.b16 %v372
  %v1717 = vunpack.c.l.b16 %v373
  %v1718 = vunpack.c.h.b16 %v373
  %v1719 = vunpack.c.l.b16 %v374
  %v1720 = vunpack.c.h.b16 %v374
  %v1721 = vunpack.c.l.b16 %v375
  %v1722 = vunpack.c.h.b16 %v375
  %v1723 = vunpack.c.l.b16 %v376
  %v1724 = vunpack.c.h.b16 %v376
  %v1725 = vunpack.c.l.b16 %v377
  %v1726 = vunpack.c.h.b16 %v377
  %v1727 = vunpack.c.l.b16 %v378
  %v1728 = vunpack.c.h.b16 %v378
  %v1729 = vunpack.c.l.b16 %v379
  %v1730 = vunpack.c.h.b16 %v379
  %v1731 = vunpack.c.l.b16 %v380
  %v1732 = vunpack.c.h.b16 %v380
  %v1733 = vunpack.c.l.b16 %v381
  %v1734 = vunpack.c.h.b16 %v381
  %v1735 = vunpack.c.l.b16 %v382
  %v1736 = vunpack.c.h.b16 %v382
  %v1737 = vunpack.c.l.b16 %v383
  %v1738 = vunpack.c.h.b16 %v383
  %v1739 = vunpack.c.l.b16 %v384
  %v1740 = vunpack.c.h.b16 %v384
  %v1741 = vunpack.c.l.b16 %v385
  %v1742 = vunpack.c.h.b16 %v385
  %v1743 = vunpack.c.l.b16 %v386
  %v1744 = vunpack.c.h.b16 %v386
  %v1745 = vunpack.c.l.b16 %v387
  %v1746 = vunpack.c.h.b16 %v387
  %v1747 = vunpack.c.l.b16 %v388
  %v1748 = vunpack.c.h.b16 %v388
  %v1749 = vunpack.c.l.b16 %v389
  %v1750 = vunpack.c.h.b16 %v389
  %v1751 = vunpack.c.l.b16 %v390
  %v1752 = vunpack.c.h.b16 %v390
  %v1753 = vunpack.c.l.b16 %v391
  %v1754 = vunpack.c.h.b16 %v391
  %v1755 = vunpack.c.l.b16 %v392
  %v1756 = vunpack.c.h.b16 %v392
  %v1757 = vunpack.c.l.b16 %v393
  %v1758 = vunpack.c.h.b16 %v393
  %v1759 = vunpack.c.l.b16 %v394
  %v1760 = vunpack.c.h.b16 %v394
  %v1761 = vunpack.c.l.b16 %v395
  %v1762 = vunpack.c.h.b16 %v395
  %v1763 = vunpack.c.l.b16 %v396
  %v1764 = vunpack.c.h.b16 %v396
  %v1765 = vunpack.c.l.b16 %v397
  %v1766 = vunpack.c.h.b16 %v397
  %v1767 = vunpack.c.l.b16 %v398
  %v1768 = vunpack.c.h.b16 %v398
  %v1769 = vunpack.c.l.b16 %v399
  %v1770 = vunpack.c.h.b16 %v399
  %v1771 = vunpack.c.l.b16 %v400
  %v1772 = vunpack.c.h.b16 %v400
  %v1773 = vunpack.c.l.b16 %v401
  %v1774 = vunpack.c.h.b16 %v401
  %v1775 = vunpack.c.l.b16 %v402
  %v1776 = vunpack.c.h.b16 %v402
  %v1777 = vunpack.c.l.b16 %v403
  %v1778 = vunpack.c.h.b16 %v403
  %v1779 = vunpack.c.l.b16 %v404
  %v1780 = vunpack.c.h.b16 %v404
  %v1781 = vunpack.c.l.b16 %v405
  %v1782 = vunpack.c.h.b16 %v405
  %v1783 = vunpack.c.l.b16 %v406
  %v1784 = vunpack.c.h.b16 %v406
  %v1785 = vunpack.c.l.b16 %v407
  %v1786 = vunpack.c.h.b16 %v407
  %v1787 = vunpack.c.l.b16 %v408
  %v1788 = vunpack.c.h.b16 %v408
  %v1789 = vunpack.c.l.b16 %v409
  %v1790 = vunpack.c.h.b16 %v409
  %v1791 = vunpack.c.l.b16 %v410
  %v1792 = vunpack.c.h.b16 %v410
  %v1793 = vunpack.c.l.b16 %v411
  %v1794 = vunpack.c.h.b16 %v411
  %v1795 = vunpack.c.l.b16 %v412
  %v1796 = vunpack.c.h.b16 %v412
  %v1797 = vunpack.c.l.b16 %v413
  %v1798 = vunpack.c.h.b16 %v413
  %v1799 = vunpack.c.l.b16 %v414
  %v1800 = vunpack.c.h.b16 %v414
  %v1801 = vunpack.c.l.b16 %v415
  %v1802 = vunpack.c.h.b16 %v415
  %v1803 = vunpack.c.l.b16 %v416
  %v1804 = vunpack.c.h.b16 %v416
  %v1805 = vunpack.c.l.b16 %v417
  %v1806 = vunpack.c.h.b16 %v417
  %v1807 = vunpack.c.l.b16 %v418
  %v1808 = vunpack.c.h.b16 %v418
  %v1809 = vunpack.c.l.b16 %v419
  %v1810 = vunpack.c.h.b16 %v419
  %v1811 = vunpack.c.l.b16 %v420
  %v1812 = vunpack.c.h.b16 %v420
  %v1813 = vunpack.c.l.b16 %v421
  %v1814 = vunpack.c.h.b16 %v421
  %v1815 = vunpack.c.l.b16 %v422
  %v1816 = vunpack.c.h.b16 %v422
  %v1817 = vunpack.c.l.b16 %v423
  %v1818 = vunpack.c.h.b16 %v423
  %v1819 = vunpack.c.l.b16 %v424
  %v1820 = vunpack.c.h.b16 %v424
  %v1821 = vunpack.c.l.b16 %v425
  %v1822 = vunpack.c.h.b16 %v425
  %v1823 = vunpack.c.l.b16 %v426
  %v1824 = vunpack.c.h.b16 %v426
  %v1825 = vunpack.c.l.b16 %v427
  %v1826 = vunpack.c.h.b16 %v427
  %v1827 = vunpack.c.l.b16 %v428
  %v1828 = vunpack.c.h.b16 %v428
  %v1829 = vunpack.c.l.b16 %v429
  %v1830 = vunpack.c.h.b16 %v429
  %v1831 = vunpack.c.l.b16 %v430
  %v1832 = vunpack.c.h.b16 %v430
  %v1833 = vunpack.c.l.b16 %v431
  %v1834 = vunpack.c.h.b16 %v431
  %v1835 = vunpack.c.l.b16 %v432
  %v1836 = vunpack.c.h.b16 %v432
  %v1837 = vunpack.c.l.b16 %v433
  %v1838 = vunpack.c.h.b16 %v433
  %v1839 = vunpack.c.l.b16 %v434
  %v1840 = vunpack.c.h.b16 %v434
  %v1841 = vunpack.c.l.b16 %v435
  %v1842 = vunpack.c.h.b16 %v435
  %v1843 = vunpack.c.l.b16 %v436
  %v1844 = vunpack.c.h.b16 %v436
  %v1845 = vunpack.c.l.b16 %v437
  %v1846 = vunpack.c.h.b16 %v437
  %v1847 = vunpack.c.l.b16 %v438
  %v1848 = vunpack.c.h.b16 %v438
  %v1849 = vunpack.c.l.b16 %v439
  %v1850 = vunpack.c.h.b16 %v439
  %v1851 = vunpack.c.l.b16 %v440
  %v1852 = vunpack.c.h.b16 %v440
  %v1853 = vunpack.c.l.b16 %v441
  %v1854 = vunpack.c.h.b16 %v441
  %v1855 = vunpack.c.l.b16 %v442
  %v1856 = vunpack.c.h.b16 %v442
  %v1857 = vunpack.c.l.b16 %v443
  %v1858 = vunpack.c.h.b16 %v443
  %v1859 = vunpack.c.l.b16 %v444
  %v1860 = vunpack.c.h.b16 %v444
  %v1861 = vunpack.c.l.b16 %v445
  %v1862 = vunpack.c.h.b16 %v445
  %v1863 = vunpack.c.l.b16 %v446
  %v1864 = vunpack.c.h.b16 %v446
  %v1865 = vunpack.c.l.b16 %v447
  %v1866 = vunpack.c.h.b16 %v447
  %v1867 = vunpack.c.l.b16 %v448
  %v1868 = vunpack.c.h.b16 %v448
  %v1869 = vunpack.c.l.b16 %v449
  %v1870 = vunpack.c.h.b16 %v449
  %v1871 = vunpack.c.l.b16 %v450
  %v1872 = vunpack.c.h.b16 %v450
  %v1873 = vunpack.c.l.b16 %v451
  %v1874 = vunpack.c.h.b16 %v451
  %v1875 = vunpack.c.l.b16 %v452
  %v1876 = vunpack.c.h.b16 %v452
  %v1877 = vunpack.c.l.b16 %v453
  %v1878 = vunpack.c.h.b16 %v453
  %v1879 = vunpack.c.l.b16 %v454
  %v1880 = vunpack.c.h.b16 %v454
  %v1881 = vunpack.c.l.b16 %v455
  %v1882 = vunpack.c.h.b16 %v455
  %v1883 = vunpack.c.l.b16 %v456
  %v1884 = vunpack.c.h.b16 %v456
  %v1885 = vunpack.c.l.b16 %v457
  %v1886 = vunpack.c.h.b16 %v457
  %v1887 = vunpack.c.l.b16 %v458
  %v1888 = vunpack.c.h.b16 %v458
  %v1889 = vunpack.c.l.b16 %v459
  %v1890 = vunpack.c.h.b16 %v459
  %v1891 = vunpack.c.l.b16 %v460
  %v1892 = vunpack.c.h.b16 %v460
  %v1893 = vunpack.c.l.b16 %v461
  %v1894 = vunpack.c.h.b16 %v461
  %v1895 = vunpack.c.l.b16 %v462
  %v1896 = vunpack.c.h.b16 %v462
  %v1897 = vunpack.c.l.b16 %v463
  %v1898 = vunpack.c.h.b16 %v463
  %v1899 = vunpack.c.l.b16 %v464
  %v1900 = vunpack.c.h.b16 %v464
  %v1901 = vunpack.c.l.b16 %v465
  %v1902 = vunpack.c.h.b16 %v465
  %v1903 = vunpack.c.l.b16 %v466
  %v1904 = vunpack.c.h.b16 %v466
  %v1905 = vunpack.c.l.b16 %v467
  %v1906 = vunpack.c.h.b16 %v467
  %v1907 = vunpack.c.l.b16 %v468
  %v1908 = vunpack.c.h.b16 %v468
  %v1909 = vunpack.c.l.b16 %v469
  %v1910 = vunpack.c.h.b16 %v469
  %v1911 = vunpack.c.l.b16 %v470
  %v1912 = vunpack.c.h.b16 %v470
  %v1913 = vunpack.c.l.b16 %v471
  %v1914 = vunpack.c.h.b16 %v471
  %v1915 = vunpack.c.l.b16 %v472
  %v1916 = vunpack.c.h.b16 %v472
  %v1917 = vunpack.c.l.b16 %v473
  %v1918 = vunpack.c.h.b16 %v473
  %v1919 = vunpack.c.l.b16 %v474
  %v1920 = vunpack.c.h.b16 %v474
  %v1921 = vunpack.c.l.b16 %v475
  %v1922 = vunpack.c.h.b16 %v475
  %v1923 = vunpack.c.l.b16 %v476
  %v1924 = vunpack.c.h.b16 %v476
  %v1925 = vunpack.c.l.b16 %v477
  %v1926 = vunpack.c.h.b16 %v477
  %v1927 = vunpack.c.l.b16 %v478
  %v1928 = vunpack.c.h.b16 %v478
  %v1929 = vunpack.c.l.b16 %v479
  %v1930 = vunpack.c.h.b16 %v479
  %v1931 = vunpack.c.l.b16 %v480
  %v1932 = vunpack.c.h.b16 %v480
  %v1933 = vunpack.c.l.b16 %v481
  %v1934 = vunpack.c.h.b16 %v481
  %v1935 = vunpack.c.l.b16 %v482
  %v1936 = vunpack.c.h.b16 %v482
  %v1937 = vunpack.c.l.b16 %v483
  %v1938 = vunpack.c.h.b16 %v483
  %v1939 = vunpack.c.l.b16 %v484
  %v1940 = vunpack.c.h.b16 %v484
  %v1941 = vunpack.c.l.b16 %v485
  %v1942 = vunpack.c.h.b16 %v485
  %v1943 = vunpack.c.l.b16 %v486
  %v1944 = vunpack.c.h.b16 %v486
  %v1945 = vunpack.c.l.b16 %v487
  %v1946 = vunpack.c.h.b16 %v487
  %v1947 = vunpack.c.l.b16 %v488
  %v1948 = vunpack.c.h.b16 %v488
  %v1949 = vunpack.c.l.b16 %v489
  %v1950 = vunpack.c.h.b16 %v489
  %v1951 = vunpack.c.l.b16 %v490
  %v1952 = vunpack.c.h.b16 %v490
  %v1953 = vunpack.c.l.b16 %v491
  %v1954 = vunpack.c.h.b16 %v491
  %v1955 = vunpack.c.l.b16 %v492
  %v1956 = vunpack.c.h.b16 %v492
  %v1957 = vunpack.c.l.b16 %v493
  %v1958 = vunpack.c.h.b16 %v493
  %v1959 = vunpack.c.l.b16 %v494
  %v1960 = vunpack.c.h.b16 %v494
  %v1961 = vunpack.c.l.b16 %v495
  %v1962 = vunpack.c.h.b16 %v495
  %v1963 = vunpack.c.l.b16 %v496
  %v1964 = vunpack.c.h.b16 %v496
  %v1965 = vunpack.c.l.b16 %v497
  %v1966 = vunpack.c.h.b16 %v497
  %v1967 = vunpack.c.l.b16 %v498
  %v1968 = vunpack.c.h.b16 %v498
  %v1969 = vunpack.c.l.b16 %v499
  %v1970 = vunpack.c.h.b16 %v499
  %v1971 = vunpack.c.l.b16 %v500
  %v1972 = vunpack.c.h.b16 %v500
  %v1973 = vunpack.c.l.b16 %v501
  %v1974 = vunpack.c.h.b16 %v501
  %v1975 = vunpack.c.l.b16 %v502
  %v1976 = vunpack.c.h.b16 %v502
  %v1977 = vunpack.c.l.b16 %v503
  %v1978 = vunpack.c.h.b16 %v503
  %v1979 = vunpack.c.l.b16 %v504
  %v1980 = vunpack.c.h.b16 %v504
  %v1981 = vunpack.c.l.b16 %v505
  %v1982 = vunpack.c.h.b16 %v505
  %v1983 = vunpack.c.l.b16 %v506
  %v1984 = vunpack.c.h.b16 %v506
  %v1985 = vunpack.c.l.b16 %v507
  %v1986 = vunpack.c.h.b16 %v507
  %v1987 = vunpack.c.l.b16 %v508
  %v1988 = vunpack.c.h.b16 %v508
  %v1989 = vunpack.c.l.b16 %v509
  %v1990 = vunpack.c.h.b16 %v509
  %v1991 = vunpack.c.l.b16 %v510
  %v1992 = vunpack.c.h.b16 %v510
  %v1993 = vunpack.c.l.b16 %v511
  %v1994 = vunpack.c.h.b16 %v511
  %v1995 = vunpack.c.l.b16 %v512
  %v1996 = vunpack.c.h.b16 %v512
  %v1997 = vunpack.c.l.b16 %v513
  %v1998 = vunpack.c.h.b16 %v513
  %v1999 = vunpack.c.l.b16 %v514
  %v2000 = vunpack.c.h.b16 %v514
  %v2001 = vunpack.c.l.b16 %v515
  %v2002 = vunpack.c.h.b16 %v515
  %v2003 = vunpack.c.l.b16 %v516
  %v2004 = vunpack.c.h.b16 %v516
  %v2005 = vunpack.c.l.b16 %v517
  %v2006 = vunpack.c.h.b16 %v517
  %v2007 = vunpack.c.l.b16 %v518
  %v2008 = vunpack.c.h.b16 %v518
  %v2009 = vunpack.c.l.b16 %v519
  %v2010 = vunpack.c.h.b16 %v519
  %v2011 = vunpack.c.l.b16 %v520
  %v2012 = vunpack.c.h.b16 %v520
  %v2013 = vunpack.c.l.b16 %v521
  %v2014 = vunpack.c.h.b16 %v521
  %v2015 = vunpack.c.l.b16 %v522
  %v2016 = vunpack.c.h.b16 %v522
  %v2017 = vunpack.c.l.b16 %v523
  %v2018 = vunpack.c.h.b16 %v523
  %v2019 = vunpack.c.l.b16 %v524
  %v2020 = vunpack.c.h.b16 %v524
  %v2021 = vunpack.c.l.b16 %v525
  %v2022 = vunpack.c.h.b16 %v525
  %v2023 = vunpack.c.l.b16 %v526
  %v2024 = vunpack.c.h.b16 %v526
  %v2025 = vunpack.c.l.b16 %v527
  %v2026 = vunpack.c.h.b16 %v527
  %v2027 = vunpack.c.l.b16 %v528
  %v2028 = vunpack.c.h.b16 %v528
  %v2029 = vunpack.c.l.b16 %v529
  %v2030 = vunpack.c.h.b16 %v529
  %v2031 = vunpack.c.l.b16 %v530
  %v2032 = vunpack.c.h.b16 %v530
  %v2033 = vunpack.c.l.b16 %v531
  %v2034 = vunpack.c.h.b16 %v531
  %v2035 = vunpack.c.l.b16 %v532
  %v2036 = vunpack.c.h.b16 %v532
  %v2037 = vunpack.c.l.b16 %v533
  %v2038 = vunpack.c.h.b16 %v533
  %v2039 = vunpack.c.l.b16 %v534
  %v2040 = vunpack.c.h.b16 %v534
  %v2041 = vunpack.c.l.b16 %v535
  %v2042 = vunpack.c.h.b16 %v535
  %v2043 = vunpack.c.l.b16 %v536
  %v2044 = vunpack.c.h.b16 %v536
  %v2045 = vunpack.c.l.b16 %v537
  %v2046 = vunpack.c.h.b16 %v537
  %v2047 = vunpack.c.l.b16 %v538
  %v2048 = vunpack.c.h.b16 %v538
  %v2049 = vunpack.c.l.b16 %v539
  %v2050 = vunpack.c.h.b16 %v539
  %v2051 = vunpack.c.l.b16 %v540
  %v2052 = vunpack.c.h.b16 %v540
  %v2053 = vunpack.c.l.b16 %v541
  %v2054 = vunpack.c.h.b16 %v541
  %v2055 = vunpack.c.l.b16 %v542
  %v2056 = vunpack.c.h.b16 %v542
  %v2057 = vunpack.c.l.b16 %v543
  %v2058 = vunpack.c.h.b16 %v543
  %v2059 = vunpack.c.l.b16 %v544
  %v2060 = vunpack.c.h.b16 %v544
  %v2061 = vunpack.c.l.b16 %v545
  %v2062 = vunpack.c.h.b16 %v545
  %v2063 = vunpack.c.l.b16 %v546
  %v2064 = vunpack.c.h.b16 %v546
  %v2065 = vunpack.c.l.b16 %v547
  %v2066 = vunpack.c.h.b16 %v547
  %v2067 = vunpack.c.l.b16 %v548
  %v2068 = vunpack.c.h.b16 %v548
  %v2069 = vunpack.c.l.b16 %v549
  %v2070 = vunpack.c.h.b16 %v549
  %v2071 = vunpack.c.l.b16 %v550
  %v2072 = vunpack.c.h.b16 %v550
  %v2073 = vunpack.c.l.b16 %v551
  %v2074 = vunpack.c.h.b16 %v551
  %v2075 = vunpack.c.l.b16 %v552
  %v2076 = vunpack.c.h.b16 %v552
  %v2077 = vunpack.c.l.b16 %v553
  %v2078 = vunpack.c.h.b16 %v553
  %v2079 = vunpack.c.l.b16 %v554
  %v2080 = vunpack.c.h.b16 %v554
  %v2081 = vunpack.c.l.b16 %v555
  %v2082 = vunpack.c.h.b16 %v555
  %v2083 = vunpack.c.l.b16 %v556
  %v2084 = vunpack.c.h.b16 %v556
  %v2085 = vunpack.c.l.b16 %v557
  %v2086 = vunpack.c.h.b16 %v557
  %v2087 = vunpack.c.l.b16 %v558
  %v2088 = vunpack.c.h.b16 %v558
  %v2089 = vunpack.c.l.b16 %v559
  %v2090 = vunpack.c.h.b16 %v559
  %v2091 = vunpack.c.l.b16 %v560
  %v2092 = vunpack.c.h.b16 %v560
  %v2093 = vunpack.c.l.b16 %v561
  %v2094 = vunpack.c.h.b16 %v561
  %v2095 = vunpack.c.l.b16 %v562
  %v2096 = vunpack.c.h.b16 %v562
  %v2097 = vunpack.c.l.b16 %v563
  %v2098 = vunpack.c.h.b16 %v563
  %v2099 = vunpack.c.l.b16 %v564
  %v2100 = vunpack.c.h.b16 %v564
  %v2101 = vunpack.c.l.b16 %v565
  %v2102 = vunpack.c.h.b16 %v565
  %v2103 = vunpack.c.l.b16 %v566
  %v2104 = vunpack.c.h.b16 %v566
  %v2105 = vunpack.c.l.b16 %v567
  %v2106 = vunpack.c.h.b16 %v567
  %v2107 = vunpack.c.l.b16 %v568
  %v2108 = vunpack.c.h.b16 %v568
  %v2109 = vunpack.c.l.b16 %v569
  %v2110 = vunpack.c.h.b16 %v569
  %v2111 = vunpack.c.l.b16 %v570
  %v2112 = vunpack.c.h.b16 %v570
  %v2113 = vunpack.c.l.b16 %v571
  %v2114 = vunpack.c.h.b16 %v571
  %v2115 = vunpack.c.l.b16 %v572
  %v2116 = vunpack.c.h.b16 %v572
  %v2117 = vunpack.c.l.b16 %v573
  %v2118 = vunpack.c.h.b16 %v573
  %v2119 = vunpack.c.l.b16 %v574
  %v2120 = vunpack.c.h.b16 %v574
  %v2121 = vunpack.c.l.b16 %v575
  %v2122 = vunpack.c.h.b16 %v575
  %v2123 = vunpack.c.l.b16 %v576
  %v2124 = vunpack.c.h.b16 %v576
  %v2125 = vunpack.c.l.b16 %v577
  %v2126 = vunpack.c.h.b16 %v577
  %v2127 = vunpack.c.l.b16 %v578
  %v2128 = vunpack.c.h.b16 %v578
  %v2129 = vunpack.c.l.b16 %v579
  %v2130 = vunpack.c.h.b16 %v579
  %v2131 = vunpack.c.l.b16 %v580
  %v2132 = vunpack.c.h.b16 %v580
  %v2133 = vunpack.c.l.b16 %v581
  %v2134 = vunpack.c.h.b16 %v581
  %v2135 = vunpack.c.l.b16 %v582
  %v2136 = vunpack.c.h.b16 %v582
  %v2137 = vunpack.c.l.b16 %v583
  %v2138 = vunpack.c.h.b16 %v583
  %v2139 = vunpack.c.l.b16 %v584
  %v2140 = vunpack.c.h.b16 %v584
  %v2141 = vunpack.c.l.b16 %v585
  %v2142 = vunpack.c.h.b16 %v585
  %v2143 = vunpack.c.l.b16 %v586
  %v2144 = vunpack.c.h.b16 %v586
  %v2145 = vpack.c.b16 %v1125, %v1121
  %v2146 = vpack.c.b16 %v1126, %v1122
  %v2147 = vpack.c.b16 %v1127, %v1123
  %v2148 = vpack.c.b16 %v1128, %v1124
  %v2149 = vpack.c.b16 %v1133, %v1129
  %v2150 = vpack.c.b16 %v1134, %v1130
  %v2151 = vpack.c.b16 %v1135, %v1131
  %v2152 = vpack.c.b16 %v1136, %v1132
  %v2153 = vpack.c.b16 %v1141, %v1137
  %v2154 = vpack.c.b16 %v1142, %v1138
  %v2155 = vpack.c.b16 %v1143, %v1139
  %v2156 = vpack.c.b16 %v1144, %v1140
  %v2157 = vpack.c.b16 %v1149, %v1145
  %v2158 = vpack.c.b16 %v1150, %v1146
  %v2159 = vpack.c.b16 %v1151, %v1147
  %v2160 = vpack.c.b16 %v1152, %v1148
  %v2161 = vpack.c.b16 %v1157, %v1153
  %v2162 = vpack.c.b16 %v1158, %v1154
  %v2163 = vpack.c.b16 %v1159, %v1155
  %v2164 = vpack.c.b16 %v1160, %v1156
  %v2165 = vpack.c.b16 %v1165, %v1161
  %v2166 = vpack.c.b16 %v1166, %v1162
  %v2167 = vpack.c.b16 %v1167, %v1163
  %v2168 = vpack.c.b16 %v1168, %v1164
  %v2169 = vpack.c.b16 %v1173, %v1169
  %v2170 = vpack.c.b16 %v1174, %v1170
  %v2171 = vpack.c.b16 %v1175, %v1171
  %v2172 = vpack.c.b16 %v1176, %v1172
  %v2173 = vpack.c.b16 %v1181, %v1177
  %v2174 = vpack.c.b16 %v1182, %v1178
  %v2175 = vpack.c.b16 %v1183, %v1179
  %v2176 = vpack.c.b16 %v1184, %v1180
  %v2177 = vpack.c.b16 %v1189, %v1185
  %v2178 = vpack.c.b16 %v1190, %v1186
  %v2179 = vpack.c.b16 %v1191, %v1187
  %v2180 = vpack.c.b16 %v1192, %v1188
  %v2181 = vpack.c.b16 %v1197, %v1193
  %v2182 = vpack.c.b16 %v1198, %v1194
  %v2183 = vpack.c.b16 %v1199, %v1195
  %v2184 = vpack.c.b16 %v1200, %v1196
  %v2185 = vpack.c.b16 %v1205, %v1201
  %v2186 = vpack.c.b16 %v1206, %v1202
  %v2187 = vpack.c.b16 %v1207, %v1203
  %v2188 = vpack.c.b16 %v1208, %v1204
  %v2189 = vpack.c.b16 %v1213, %v1209
  %v2190 = vpack.c.b16 %v1214, %v1210
  %v2191 = vpack.c.b16 %v1215, %v1211
  %v2192 = vpack.c.b16 %v1216, %v1212
  %v2193 = vpack.c.b16 %v1221, %v1217
  %v2194 = vpack.c.b16 %v1222, %v1218
  %v2195 = vpack.c.b16 %v1223, %v1219
  %v2196 = vpack.c.b16 %v1224, %v1220
  %v2197 = vpack.c.b16 %v1229, %v1225
  %v2198 = vpack.c.b16 %v1230, %v1226
  %v2199 = vpack.c.b16 %v1231, %v1227
  %v2200 = vpack.c.b16 %v1232, %v1228
  %v2201 = vpack.c.b16 %v1237, %v1233
  %v2202 = vpack.c.b16 %v1238, %v1234
  %v2203 = vpack.c.b16 %v1239, %v1235
  %v2204 = vpack.c.b16 %v1240, %v1236
  %v2205 = vpack.c.b16 %v1245, %v1241
  %v2206 = vpack.c.b16 %v1246, %v1242
  %v2207 = vpack.c.b16 %v1247, %v1243
  %v2208 = vpack.c.b16 %v1248, %v1244
  %v2209 = vpack.c.b16 %v1253, %v1249
  %v2210 = vpack.c.b16 %v1254, %v1250
  %v2211 = vpack.c.b16 %v1255, %v1251
  %v2212 = vpack.c.b16 %v1256, %v1252
  %v2213 = vpack.c.b16 %v1261, %v1257
  %v2214 = vpack.c.b16 %v1262, %v1258
  %v2215 = vpack.c.b16 %v1263, %v1259
  %v2216 = vpack.c.b16 %v1264, %v1260
  %v2217 = vpack.c.b16 %v1269, %v1265
  %v2218 = vpack.c.b16 %v1270, %v1266
  %v2219 = vpack.c.b16 %v1271, %v1267
  %v2220 = vpack.c.b16 %v1272, %v1268
  %v2221 = vpack.c.b16 %v1277, %v1273
  %v2222 = vpack.c.b16 %v1278, %v1274
  %v2223 = vpack.c.b16 %v1279, %v1275
  %v2224 = vpack.c.b16 %v1280, %v1276
  %v2225 = vpack.c.b16 %v1285, %v1281
  %v2226 = vpack.c.b16 %v1286, %v1282
  %v2227 = vpack.c.b16 %v1287, %v1283
  %v2228 = vpack.c.b16 %v1288, %v1284
  %v2229 = vpack.c.b16 %v1293, %v1289
  %v2230 = vpack.c.b16 %v1294, %v1290
  %v2231 = vpack.c.b16 %v1295, %v1291
  %v2232 = vpack.c.b16 %v1296, %v1292
  %v2233 = vpack.c.b16 %v1301, %v1297
  %v2234 = vpack.c.b16 %v1302, %v1298
  %v2235 = vpack.c.b16 %v1303, %v1299
  %v2236 = vpack.c.b16 %v1304, %v1300
  %v2237 = vpack.c.b16 %v1309, %v1305
  %v2238 = vpack.c.b16 %v1310, %v1306
  %v2239 = vpack.c.b16 %v1311, %v1307
  %v2240 = vpack.c.b16 %v1312, %v1308
  %v2241 = vpack.c.b16 %v1317, %v1313
  %v2242 = vpack.c.b16 %v1318, %v1314
  %v2243 = vpack.c.b16 %v1319, %v1315
  %v2244 = vpack.c.b16 %v1320, %v1316
  %v2245 = vpack.c.b16 %v1325, %v1321
  %v2246 = vpack.c.b16 %v1326, %v1322
  %v2247 = vpack.c.b16 %v1327, %v1323
  %v2248 = vpack.c.b16 %v1328, %v1324
  %v2249 = vpack.c.b16 %v1333, %v1329
  %v2250 = vpack.c.b16 %v1334, %v1330
  %v2251 = vpack.c.b16 %v1335, %v1331
  %v2252 = vpack.c.b16 %v1336, %v1332
  %v2253 = vpack.c.b16 %v1341, %v1337
  %v2254 = vpack.c.b16 %v1342, %v1338
  %v2255 = vpack.c.b16 %v1343, %v1339
  %v2256 = vpack.c.b16 %v1344, %v1340
  %v2257 = vpack.c.b16 %v1349, %v1345
  %v2258 = vpack.c.b16 %v1350, %v1346
  %v2259 = vpack.c.b16 %v1351, %v1347
  %v2260 = vpack.c.b16 %v1352, %v1348
  %v2261 = vpack.c.b16 %v1357, %v1353
  %v2262 = vpack.c.b16 %v1358, %v1354
  %v2263 = vpack.c.b16 %v1359, %v1355
  %v2264 = vpack.c.b16 %v1360, %v1356
  %v2265 = vpack.c.b16 %v1365, %v1361
  %v2266 = vpack.c.b16 %v1366, %v1362
  %v2267 = vpack.c.b16 %v1367, %v1363
  %v2268 = vpack.c.b16 %v1368, %v1364
  %v2269 = vpack.c.b16 %v1373, %v1369
  %v2270 = vpack.c.b16 %v1374, %v1370
  %v2271 = vpack.c.b16 %v1375, %v1371
  %v2272 = vpack.c.b16 %v1376, %v1372
  %v2273 = vpack.c.b16 %v1381, %v1377
  %v2274 = vpack.c.b16 %v1382, %v1378
  %v2275 = vpack.c.b16 %v1383, %v1379
  %v2276 = vpack.c.b16 %v1384, %v1380
  %v2277 = vpack.c.b16 %v1389, %v1385
  %v2278 = vpack.c.b16 %v1390, %v1386
  %v2279 = vpack.c.b16 %v1391, %v1387
  %v2280 = vpack.c.b16 %v1392, %v1388
  %v2281 = vpack.c.b16 %v1397, %v1393
  %v2282 = vpack.c.b16 %v1398, %v1394
  %v2283 = vpack.c.b16 %v1399, %v1395
  %v2284 = vpack.c.b16 %v1400, %v1396
  %v2285 = vpack.c.b16 %v1405, %v1401
  %v2286 = vpack.c.b16 %v1406, %v1402
  %v2287 = vpack.c.b16 %v1407, %v1403
  %v2288 = vpack.c.b16 %v1408, %v1404
  %v2289 = vpack.c.b16 %v1413, %v1409
  %v2290 = vpack.c.b16 %v1414, %v1410
  %v2291 = vpack.c.b16 %v1415, %v1411
  %v2292 = vpack.c.b16 %v1416, %v1412
  %v2293 = vpack.c.b16 %v1421, %v1417
  %v2294 = vpack.c.b16 %v1422, %v1418
  %v2295 = vpack.c.b16 %v1423, %v1419
  %v2296 = vpack.c.b16 %v1424, %v1420
  %v2297 = vpack.c.b16 %v1429, %v1425
  %v2298 = vpack.c.b16 %v1430, %v1426
  %v2299 = vpack.c.b16 %v1431, %v1427
  %v2300 = vpack.c.b16 %v1432, %v1428
  %v2301 = vpack.c.b16 %v1437, %v1433
  %v2302 = vpack.c.b16 %v1438, %v1434
  %v2303 = vpack.c.b16 %v1439, %v1435
  %v2304 = vpack.c.b16 %v1440, %v1436
  %v2305 = vpack.c.b16 %v1445, %v1441
  %v2306 = vpack.c.b16 %v1446, %v1442
  %v2307 = vpack.c.b16 %v1447, %v1443
  %v2308 = vpack.c.b16 %v1448, %v1444
  %v2309 = vpack.c.b16 %v1453, %v1449
  %v2310 = vpack.c.b16 %v1454, %v1450
  %v2311 = vpack.c.b16 %v1455, %v1451
  %v2312 = vpack.c.b16 %v1456, %v1452
  %v2313 = vpack.c.b16 %v1461, %v1457
  %v2314 = vpack.c.b16 %v1462, %v1458
  %v2315 = vpack.c.b16 %v1463, %v1459
  %v2316 = vpack.c.b16 %v1464, %v1460
  %v2317 = vpack.c.b16 %v1469, %v1465
  %v2318 = vpack.c.b16 %v1470, %v1466
  %v2319 = vpack.c.b16 %v1471, %v1467
  %v2320 = vpack.c.b16 %v1472, %v1468
  %v2321 = vpack.c.b16 %v1477, %v1473
  %v2322 = vpack.c.b16 %v1478, %v1474
  %v2323 = vpack.c.b16 %v1479, %v1475
  %v2324 = vpack.c.b16 %v1480, %v1476
  %v2325 = vpack.c.b16 %v1485, %v1481
  %v2326 = vpack.c.b16 %v1486, %v1482
  %v2327 = vpack.c.b16 %v1487, %v1483
  %v2328 = vpack.c.b16 %v1488, %v1484
  %v2329 = vpack.c.b16 %v1493, %v1489
  %v2330 = vpack.c.b16 %v1494, %v1490
  %v2331 = vpack.c.b16 %v1495, %v1491
  %v2332 = vpack.c.b16 %v1496, %v1492
  %v2333 = vpack.c.b16 %v1501, %v1497
  %v2334 = vpack.c.b16 %v1502, %v1498
  %v2335 = vpack.c.b16 %v1503, %v1499
  %v2336 = vpack.c.b16 %v1504, %v1500
  %v2337 = vpack.c.b16 %v1509, %v1505
  %v2338 = vpack.c.b16 %v1510, %v1506
  %v2339 = vpack.c.b16 %v1511, %v1507
  %v2340 = vpack.c.b16 %v1512, %v1508
  %v2341 = vpack.c.b16 %v1517, %v1513
  %v2342 = vpack.c.b16 %v1518, %v1514
  %v2343 = vpack.c.b16 %v1519, %v1515
  %v2344 = vpack.c.b16 %v1520, %v1516
  %v2345 = vpack.c.b16 %v1525, %v1521
  %v2346 = vpack.c.b16 %v1526, %v1522
  %v2347 = vpack.c.b16 %v1527, %v1523
  %v2348 = vpack.c.b16 %v1528, %v1524
  %v2349 = vpack.c.b16 %v1533, %v1529
  %v2350 = vpack.c.b16 %v1534, %v1530
  %v2351 = vpack.c.b16 %v1535, %v1531
  %v2352 = vpack.c.b16 %v1536, %v1532
  %v2353 = vpack.c.b16 %v1541, %v1537
  %v2354 = vpack.c.b16 %v1542, %v1538
  %v2355 = vpack.c.b16 %v1543, %v1539
  %v2356 = vpack.c.b16 %v1544, %v1540
  %v2357 = vpack.c.b16 %v1549, %v1545
  %v2358 = vpack.c.b16 %v1550, %v1546
  %v2359 = vpack.c.b16 %v1551, %v1547
  %v2360 = vpack.c.b16 %v1552, %v1548
  %v2361 = vpack.c.b16 %v1557, %v1553
  %v2362 = vpack.c.b16 %v1558, %v1554
  %v2363 = vpack.c.b16 %v1559, %v1555
  %v2364 = vpack.c.b16 %v1560, %v1556
  %v2365 = vpack.c.b16 %v1565, %v1561
  %v2366 = vpack.c.b16 %v1566, %v1562
  %v2367 = vpack.c.b16 %v1567, %v1563
  %v2368 = vpack.c.b16 %v1568, %v1564
  %v2369 = vpack.c.b16 %v1573, %v1569
  %v2370 = vpack.c.b16 %v1574, %v1570
  %v2371 = vpack.c.b16 %v1575, %v1571
  %v2372 = vpack.c.b16 %v1576, %v1572
  %v2373 = vpack.c.b16 %v1581, %v1577
  %v2374 = vpack.c.b16 %v1582, %v1578
  %v2375 = vpack.c.b16 %v1583, %v1579
  %v2376 = vpack.c.b16 %v1584, %v1580
  %v2377 = vpack.c.b16 %v1589, %v1585
  %v2378 = vpack.c.b16 %v1590, %v1586
  %v2379 = vpack.c.b16 %v1591, %v1587
  %v2380 = vpack.c.b16 %v1592, %v1588
  %v2381 = vpack.c.b16 %v1597, %v1593
  %v2382 = vpack.c.b16 %v1598, %v1594
  %v2383 = vpack.c.b16 %v1599, %v1595
  %v2384 = vpack.c.b16 %v1600, %v1596
  %v2385 = vpack.c.b16 %v1605, %v1601
  %v2386 = vpack.c.b16 %v1606, %v1602
  %v2387 = vpack.c.b16 %v1607, %v1603
  %v2388 = vpack.c.b16 %v1608, %v1604
  %v2389 = vpack.c.b16 %v1613, %v1609
  %v2390 = vpack.c.b16 %v1614, %v1610
  %v2391 = vpack.c.b16 %v1615, %v1611
  %v2392 = vpack.c.b16 %v1616, %v1612
  %v2393 = vpack.c.b16 %v1621, %v1617
  %v2394 = vpack.c.b16 %v1622, %v1618
  %v2395 = vpack.c.b16 %v1623, %v1619
  %v2396 = vpack.c.b16 %v1624, %v1620
  %v2397 = vpack.c.b16 %v1629, %v1625
  %v2398 = vpack.c.b16 %v1630, %v1626
  %v2399 = vpack.c.b16 %v1631, %v1627
  %v2400 = vpack.c.b16 %v1632, %v1628
  %v2401 = vpack.c.b16 %v1637, %v1633
  %v2402 = vpack.c.b16 %v1638, %v1634
  %v2403 = vpack.c.b16 %v1639, %v1635
  %v2404 = vpack.c.b16 %v1640, %v1636
  %v2405 = vpack.c.b16 %v1645, %v1641
  %v2406 = vpack.c.b16 %v1646, %v1642
  %v2407 = vpack.c.b16 %v1647, %v1643
  %v2408 = vpack.c.b16 %v1648, %v1644
  %v2409 = vpack.c.b16 %v1653, %v1649
  %v2410 = vpack.c.b16 %v1654, %v1650
  %v2411 = vpack.c.b16 %v1655, %v1651
  %v2412 = vpack.c.b16 %v1656, %v1652
  %v2413 = vpack.c.b16 %v1661, %v1657
  %v2414 = vpack.c.b16 %v1662, %v1658
  %v2415 = vpack.c.b16 %v1663, %v1659
  %v2416 = vpack.c.b16 %v1664, %v1660
  %v2417 = vpack.c.b16 %v1669, %v1665
  %v2418 = vpack.c.b16 %v1670, %v1666
  %v2419 = vpack.c.b16 %v1671, %v1667
  %v2420 = vpack.c.b16 %v1672, %v1668
  %v2421 = vpack.c.b16 %v1677, %v1673
  %v2422 = vpack.c.b16 %v1678, %v1674
  %v2423 = vpack.c.b16 %v1679, %v1675
  %v2424 = vpack.c.b16 %v1680, %v1676
  %v2425 = vpack.c.b16 %v1685, %v1681
  %v2426 = vpack.c.b16 %v1686, %v1682
  %v2427 = vpack.c.b16 %v1687, %v1683
  %v2428 = vpack.c.b16 %v1688, %v1684
  %v2429 = vpack.c.b16 %v1693, %v1689
  %v2430 = vpack.c.b16 %v1694, %v1690
  %v2431 = vpack.c.b16 %v1695, %v1691
  %v2432 = vpack.c.b16 %v1696, %v1692
  %v2433 = vpack.c.b16 %v1701, %v1697
  %v2434 = vpack.c.b16 %v1702, %v1698
  %v2435 = vpack.c.b16 %v1703, %v1699
  %v2436 = vpack.c.b16 %v1704, %v1700
  %v2437 = vpack.c.b16 %v1709, %v1705
  %v2438 = vpack.c.b16 %v1710, %v1706
  %v2439 = vpack.c.b16 %v1711, %v1707
  %v2440 = vpack.c.b16 %v1712, %v1708
  %v2441 = vpack.c.b16 %v1717, %v1713
  %v2442 = vpack.c.b16 %v1718, %v1714
  %v2443 = vpack.c.b16 %v1719, %v1715
  %v2444 = vpack.c.b16 %v1720, %v1716
  %v2445 = vpack.c.b16 %v1725, %v1721
  %v2446 = vpack.c.b16 %v1726, %v1722
  %v2447 = vpack.c.b16 %v1727, %v1723
  %v2448 = vpack.c.b16 %v1728, %v1724
  %v2449 = vpack.c.b16 %v1733, %v1729
  %v2450 = vpack.c.b16 %v1734, %v1730
  %v2451 = vpack.c.b16 %v1735, %v1731
  %v2452 = vpack.c.b16 %v1736, %v1732
  %v2453 = vpack.c.b16 %v1741, %v1737
  %v2454 = vpack.c.b16 %v1742, %v1738
  %v2455 = vpack.c.b16 %v1743, %v1739
  %v2456 = vpack.c.b16 %v1744, %v1740
  %v2457 = vpack.c.b16 %v1749, %v1745
  %v2458 = vpack.c.b16 %v1750, %v1746
  %v2459 = vpack.c.b16 %v1751, %v1747
  %v2460 = vpack.c.b16 %v1752, %v1748
  %v2461 = vpack.c.b16 %v1757, %v1753
  %v2462 = vpack.c.b16 %v1758, %v1754
  %v2463 = vpack.c.b16 %v1759, %v1755
  %v2464 = vpack.c.b16 %v1760, %v1756
  %v2465 = vpack.c.b16 %v1765, %v1761
  %v2466 = vpack.c.b16 %v1766, %v1762
  %v2467 = vpack.c.b16 %v1767, %v1763
  %v2468 = vpack.c.b16 %v1768, %v1764
  %v2469 = vpack.c.b16 %v1773, %v1769
  %v2470 = vpack.c.b16 %v1774, %v1770
  %v2471 = vpack.c.b16 %v1775, %v1771
  %v2472 = vpack.c.b16 %v1776, %v1772
  %v2473 = vpack.c.b16 %v1781, %v1777
  %v2474 = vpack.c.b16 %v1782, %v1778
  %v2475 = vpack.c.b16 %v1783, %v1779
  %v2476 = vpack.c.b16 %v1784, %v1780
  %v2477 = vpack.c.b16 %v1789, %v1785
  %v2478 = vpack.c.b16 %v1790, %v1786
  %v2479 = vpack.c.b16 %v1791, %v1787
  %v2480 = vpack.c.b16 %v1792, %v1788
  %v2481 = vpack.c.b16 %v1797, %v1793
  %v2482 = vpack.c.b16 %v1798, %v1794
  %v2483 = vpack.c.b16 %v1799, %v1795
  %v2484 = vpack.c.b16 %v1800, %v1796
  %v2485 = vpack.c.b16 %v1805, %v1801
  %v2486 = vpack.c.b16 %v1806, %v1802
  %v2487 = vpack.c.b16 %v1807, %v1803
  %v2488 = vpack.c.b16 %v1808, %v1804
  %v2489 = vpack.c.b16 %v1813, %v1809
  %v2490 = vpack.c.b16 %v1814, %v1810
  %v2491 = vpack.c.b16 %v1815, %v1811
  %v2492 = vpack.c.b16 %v1816, %v1812
  %v2493 = vpack.c.b16 %v1821, %v1817
  %v2494 = vpack.c.b16 %v1822, %v1818
  %v2495 = vpack.c.b16 %v1823, %v1819
  %v2496 = vpack.c.b16 %v1824, %v1820
  %v2497 = vpack.c.b16 %v1829, %v1825
  %v2498 = vpack.c.b16 %v1830, %v1826
  %v2499 = vpack.c.b16 %v1831, %v1827
  %v2500 = vpack.c.b16 %v1832, %v1828
  %v2501 = vpack.c.b16 %v1837, %v1833
  %v2502 = vpack.c.b16 %v1838, %v1834
  %v2503 = vpack.c.b16 %v1839, %v1835
  %v2504 = vpack.c.b16 %v1840, %v1836
  %v2505 = vpack.c.b16 %v1845, %v1841
  %v2506 = vpack.c.b16 %v1846, %v1842
  %v2507 = vpack.c.b16 %v1847, %v1843
  %v2508 = vpack.c.b16 %v1848, %v1844
  %v2509 = vpack.c.b16 %v1853, %v1849
  %v2510 = vpack.c.b16 %v1854, %v1850
  %v2511 = vpack.c.b16 %v1855, %v1851
  %v2512 = vpack.c.b16 %v1856, %v1852
  %v2513 = vpack.c.b16 %v1861, %v1857
  %v2514 = vpack.c.b16 %v1862, %v1858
  %v2515 = vpack.c.b16 %v1863, %v1859
  %v2516 = vpack.c.b16 %v1864, %v1860
  %v2517 = vpack.c.b16 %v1869, %v1865
  %v2518 = vpack.c.b16 %v1870, %v1866
  %v2519 = vpack.c.b16 %v1871, %v1867
  %v2520 = vpack.c.b16 %v1872, %v1868
  %v2521 = vpack.c.b16 %v1877, %v1873
  %v2522 = vpack.c.b16 %v1878, %v1874
  %v2523 = vpack.c.b16 %v1879, %v1875
  %v2524 = vpack.c.b16 %v1880, %v1876
  %v2525 = vpack.c.b16 %v1885, %v1881
  %v2526 = vpack.c.b16 %v1886, %v1882
  %v2527 = vpack.c.b16 %v1887, %v1883
  %v2528 = vpack.c.b16 %v1888, %v1884
  %v2529 = vpack.c.b16 %v1893, %v1889
  %v2530 = vpack.c.b16 %v1894, %v1890
  %v2531 = vpack.c.b16 %v1895, %v1891
  %v2532 = vpack.c.b16 %v1896, %v1892
  %v2533 = vpack.c.b16 %v1901, %v1897
  %v2534 = vpack.c.b16 %v1902, %v1898
  %v2535 = vpack.c.b16 %v1903, %v1899
  %v2536 = vpack.c.b16 %v1904, %v1900
  %v2537 = vpack.c.b16 %v1909, %v1905
  %v2538 = vpack.c.b16 %v1910, %v1906
  %v2539 = vpack.c.b16 %v1911, %v1907
  %v2540 = vpack.c.b16 %v1912, %v1908
  %v2541 = vpack.c.b16 %v1917, %v1913
  %v2542 = vpack.c.b16 %v1918, %v1914
  %v2543 = vpack.c.b16 %v1919, %v1915
  %v2544 = vpack.c.b16 %v1920, %v1916
  %v2545 = vpack.c.b16 %v1925, %v1921
  %v2546 = vpack.c.b16 %v1926, %v1922
  %v2547 = vpack.c.b16 %v1927, %v1923
  %v2548 = vpack.c.b16 %v1928, %v1924
  %v2549 = vpack.c.b16 %v1933, %v1929
  %v2550 = vpack.c.b16 %v1934, %v1930
  %v2551 = vpack.c.b16 %v1935, %v1931
  %v2552 = vpack.c.b16 %v1936, %v1932
  %v2553 = vpack.c.b16 %v1941, %v1937
  %v2554 = vpack.c.b16 %v1942, %v1938
  %v2555 = vpack.c.b16 %v1943, %v1939
  %v2556 = vpack.c.b16 %v1944, %v1940
  %v2557 = vpack.c.b16 %v1949, %v1945
  %v2558 = vpack.c.b16 %v1950, %v1946
  %v2559 = vpack.c.b16 %v1951, %v1947
  %v2560 = vpack.c.b16 %v1952, %v1948
  %v2561 = vpack.c.b16 %v1957, %v1953
  %v2562 = vpack.c.b16 %v1958, %v1954
  %v2563 = vpack.c.b16 %v1959, %v1955
  %v2564 = vpack.c.b16 %v1960, %v1956
  %v2565 = vpack.c.b16 %v1965, %v1961
  %v2566 = vpack.c.b16 %v1966, %v1962
  %v2567 = vpack.c.b16 %v1967, %v1963
  %v2568 = vpack.c.b16 %v1968, %v1964
  %v2569 = vpack.c.b16 %v1973, %v1969
  %v2570 = vpack.c.b16 %v1974, %v1970
  %v2571 = vpack.c.b16 %v1975, %v1971
  %v2572 = vpack.c.b16 %v1976, %v1972
  %v2573 = vpack.c.b16 %v1981, %v1977
  %v2574 = vpack.c.b16 %v1982, %v1978
  %v2575 = vpack.c.b16 %v1983, %v1979
  %v2576 = vpack.c.b16 %v1984, %v1980
  %v2577 = vpack.c.b16 %v1989, %v1985
  %v2578 = vpack.c.b16 %v1990, %v1986
  %v2579 = vpack.c.b16 %v1991, %v1987
  %v2580 = vpack.c.b16 %v1992, %v1988
  %v2581 = vpack.c.b16 %v1997, %v1993
  %v2582 = vpack.c.b16 %v1998, %v1994
  %v2583 = vpack.c.b16 %v1999, %v1995
  %v2584 = vpack.c.b16 %v2000, %v1996
  %v2585 = vpack.c.b16 %v2005, %v2001
  %v2586 = vpack.c.b16 %v2006, %v2002
  %v2587 = vpack.c.b16 %v2007, %v2003
  %v2588 = vpack.c.b16 %v2008, %v2004
  %v2589 = vpack.c.b16 %v2013, %v2009
  %v2590 = vpack.c.b16 %v2014, %v2010
  %v2591 = vpack.c.b16 %v2015, %v2011
  %v2592 = vpack.c.b16 %v2016, %v2012
  %v2593 = vpack.c.b16 %v2021, %v2017
  %v2594 = vpack.c.b16 %v2022, %v2018
  %v2595 = vpack.c.b16 %v2023, %v2019
  %v2596 = vpack.c.b16 %v2024, %v2020
  %v2597 = vpack.c.b16 %v2029, %v2025
  %v2598 = vpack.c.b16 %v2030, %v2026
  %v2599 = vpack.c.b16 %v2031, %v2027
  %v2600 = vpack.c.b16 %v2032, %v2028
  %v2601 = vpack.c.b16 %v2037, %v2033
  %v2602 = vpack.c.b16 %v2038, %v2034
  %v2603 = vpack.c.b16 %v2039, %v2035
  %v2604 = vpack.c.b16 %v2040, %v2036
  %v2605 = vpack.c.b16 %v2045, %v2041
  %v2606 = vpack.c.b16 %v2046, %v2042
  %v2607 = vpack.c.b16 %v2047, %v2043
  %v2608 = vpack.c.b16 %v2048, %v2044
  %v2609 = vpack.c.b16 %v2053, %v2049
  %v2610 = vpack.c.b16 %v2054, %v2050
  %v2611 = vpack.c.b16 %v2055, %v2051
  %v2612 = vpack.c.b16 %v2056, %v2052
  %v2613 = vpack.c.b16 %v2061, %v2057
  %v2614 = vpack.c.b16 %v2062, %v2058
  %v2615 = vpack.c.b16 %v2063, %v2059
  %v2616 = vpack.c.b16 %v2064, %v2060
  %v2617 = vpack.c.b16 %v2069, %v2065
  %v2618 = vpack.c.b16 %v2070, %v2066
  %v2619 = vpack.c.b16 %v2071, %v2067
  %v2620 = vpack.c.b16 %v2072, %v2068
  %v2621 = vpack.c.b16 %v2077, %v2073
  %v2622 = vpack.c.b16 %v2078, %v2074
  %v2623 = vpack.c.b16 %v2079, %v2075
  %v2624 = vpack.c.b16 %v2080, %v2076
  %v2625 = vpack.c.b16 %v2085, %v2081
  %v2626 = vpack.c.b16 %v2086, %v2082
  %v2627 = vpack.c.b16 %v2087, %v2083
  %v2628 = vpack.c.b16 %v2088, %v2084
  %v2629 = vpack.c.b16 %v2093, %v2089
  %v2630 = vpack.c.b16 %v2094, %v2090
  %v2631 = vpack.c.b16 %v2095, %v2091
  %v2632 = vpack.c.b16 %v2096, %v2092
  %v2633 = vpack.c.b16 %v2101, %v2097
  %v2634 = vpack.c.b16 %v2102, %v2098
  %v2635 = vpack.c.b16 %v2103, %v2099
  %v2636 = vpack.c.b16 %v2104, %v2100
  %v2637 = vpack.c.b16 %v2109, %v2105
  %v2638 = vpack.c.b16 %v2110, %v2106
  %v2639 = vpack.c.b16 %v2111, %v2107
  %v2640 = vpack.c.b16 %v2112, %v2108
  %v2641 = vpack.c.b16 %v2117, %v2113
  %v2642 = vpack.c.b16 %v2118, %v2114
  %v2643 = vpack.c.b16 %v2119, %v2115
  %v2644 = vpack.c.b16 %v2120, %v2116
  %v2645 = vpack.c.b16 %v2125, %v2121
  %v2646 = vpack.c.b16 %v2126, %v2122
  %v2647 = vpack.c.b16 %v2127, %v2123
  %v2648 = vpack.c.b16 %v2128, %v2124
  %v2649 = vpack.c.b16 %v2133, %v2129
  %v2650 = vpack.c.b16 %v2134, %v2130
  %v2651 = vpack.c.b16 %v2135, %v2131
  %v2652 = vpack.c.b16 %v2136, %v2132
  %v2653 = vpack.c.b16 %v2141, %v2137
  %v2654 = vpack.c.b16 %v2142, %v2138
  %v2655 = vpack.c.b16 %v2143, %v2139
  %v2656 = vpack.c.b16 %v2144, %v2140
  %3169 = vmatprep.subr.bf16.mxu0 %v2146
  %3170 = vmatpush1.bf16.msra.mxu0 %v2145
  %3171 = vmatprep.subr.bf16.mxu0 %v2150
  %3172 = vmatpush1.bf16.msra.mxu0 %v2149
  %3173 = vmatprep.subr.bf16.mxu0 %v2154
  %3174 = vmatpush1.bf16.msra.mxu0 %v2153
  %3175 = vmatprep.subr.bf16.mxu0 %v2158
  %3176 = vmatpush1.bf16.msra.mxu0 %v2157
  %3177 = vmatprep.subr.bf16.mxu0 %v2162
  %3178 = vmatpush1.bf16.msra.mxu0 %v2161
  %3179 = vmatprep.subr.bf16.mxu0 %v2166
  %3180 = vmatpush1.bf16.msra.mxu0 %v2165
  %3181 = vmatprep.subr.bf16.mxu0 %v2170
  %3182 = vmatpush1.bf16.msra.mxu0 %v2169
  %3183 = vmatprep.subr.bf16.mxu0 %v2174
  %3184 = vmatpush1.bf16.msra.mxu0 %v2173
  %3185 = vmatprep.subr.bf16.mxu0 %v2178
  %3186 = vmatpush1.bf16.msra.mxu0 %v2177
  %3187 = vmatprep.subr.bf16.mxu0 %v2182
  %3188 = vmatpush1.bf16.msra.mxu0 %v2181
  %3189 = vmatprep.subr.bf16.mxu0 %v2186
  %3190 = vmatpush1.bf16.msra.mxu0 %v2185
  %3191 = vmatprep.subr.bf16.mxu0 %v2190
  %3192 = vmatpush1.bf16.msra.mxu0 %v2189
  %3193 = vmatprep.subr.bf16.mxu0 %v2194
  %3194 = vmatpush1.bf16.msra.mxu0 %v2193
  %3195 = vmatprep.subr.bf16.mxu0 %v2198
  %3196 = vmatpush1.bf16.msra.mxu0 %v2197
  %3197 = vmatprep.subr.bf16.mxu0 %v2202
  %3198 = vmatpush1.bf16.msra.mxu0 %v2201
  %3199 = vmatprep.subr.bf16.mxu0 %v2206
  %3200 = vmatpush1.bf16.msra.mxu0 %v2205
  %3201 = vmatprep.mubr.bf16.mxu0 %v60
  %3202 = vmatmul.mubr.bf16.gmra.mrb[0].mxu0 %v59
  %v3203 = vpop.f32.mrb[0].mxu0
  %v3204 = vadd.f32 %v592, %v3203
  %v3205 = vpop.f32.mrb[0].mxu0
  %v3206 = vadd.f32 %v596, %v3205
  %v3207 = vpop.f32.mrb[0].mxu0
  %v3208 = vpop.f32.mrb[0].mxu0
  %3209 = vdwg.mxu0
  %3210 = vmatprep.subr.bf16.mxu0 %v2210
  %3211 = vmatpush1.bf16.msra.mxu0 %v2209
  %3212 = vmatprep.subr.bf16.mxu0 %v2214
  %3213 = vmatpush1.bf16.msra.mxu0 %v2213
  %3214 = vmatprep.subr.bf16.mxu0 %v2218
  %3215 = vmatpush1.bf16.msra.mxu0 %v2217
  %3216 = vmatprep.subr.bf16.mxu0 %v2222
  %3217 = vmatpush1.bf16.msra.mxu0 %v2221
  %3218 = vmatprep.subr.bf16.mxu0 %v2226
  %3219 = vmatpush1.bf16.msra.mxu0 %v2225
  %3220 = vmatprep.subr.bf16.mxu0 %v2230
  %3221 = vmatpush1.bf16.msra.mxu0 %v2229
  %3222 = vmatprep.subr.bf16.mxu0 %v2234
  %3223 = vmatpush1.bf16.msra.mxu0 %v2233
  %3224 = vmatprep.subr.bf16.mxu0 %v2238
  %3225 = vmatpush1.bf16.msra.mxu0 %v2237
  %3226 = vmatprep.subr.bf16.mxu0 %v2242
  %3227 = vmatpush1.bf16.msra.mxu0 %v2241
  %3228 = vmatprep.subr.bf16.mxu0 %v2246
  %3229 = vmatpush1.bf16.msra.mxu0 %v2245
  %3230 = vmatprep.subr.bf16.mxu0 %v2250
  %3231 = vmatpush1.bf16.msra.mxu0 %v2249
  %3232 = vmatprep.subr.bf16.mxu0 %v2254
  %3233 = vmatpush1.bf16.msra.mxu0 %v2253
  %3234 = vmatprep.subr.bf16.mxu0 %v2258
  %3235 = vmatpush1.bf16.msra.mxu0 %v2257
  %3236 = vmatprep.subr.bf16.mxu0 %v2262
  %3237 = vmatpush1.bf16.msra.mxu0 %v2261
  %3238 = vmatprep.subr.bf16.mxu0 %v2266
  %3239 = vmatpush1.bf16.msra.mxu0 %v2265
  %3240 = vmatprep.subr.bf16.mxu0 %v2270
  %3241 = vmatpush1.bf16.msra.mxu0 %v2269
  %3242 = vmatprep.mubr.bf16.mxu0 %v62
  %3243 = vmatmul.mubr.bf16.gmra.mrb[0].mxu0 %v61
  %v3244 = vpop.f32.mrb[0].mxu0
  %v3245 = vadd.f32 %v3204, %v3244
  %v3246 = vpop.f32.mrb[0].mxu0
  %v3247 = vadd.f32 %v3206, %v3246
  %v3248 = vpop.f32.mrb[0].mxu0
  %v3249 = vpop.f32.mrb[0].mxu0
  %3250 = vdwg.mxu0
  %3251 = vmatprep.subr.bf16.mxu0 %v2274
  %3252 = vmatpush1.bf16.msra.mxu0 %v2273
  %3253 = vmatprep.subr.bf16.mxu0 %v2278
  %3254 = vmatpush1.bf16.msra.mxu0 %v2277
  %3255 = vmatprep.subr.bf16.mxu0 %v2282
  %3256 = vmatpush1.bf16.msra.mxu0 %v2281
  %3257 = vmatprep.subr.bf16.mxu0 %v2286
  %3258 = vmatpush1.bf16.msra.mxu0 %v2285
  %3259 = vmatprep.subr.bf16.mxu0 %v2290
  %3260 = vmatpush1.bf16.msra.mxu0 %v2289
  %3261 = vmatprep.subr.bf16.mxu0 %v2294
  %3262 = vmatpush1.bf16.msra.mxu0 %v2293
  %3263 = vmatprep.subr.bf16.mxu0 %v2298
  %3264 = vmatpush1.bf16.msra.mxu0 %v2297
  %3265 = vmatprep.subr.bf16.mxu0 %v2302
  %3266 = vmatpush1.bf16.msra.mxu0 %v2301
  %3267 = vmatprep.subr.bf16.mxu0 %v2306
  %3268 = vmatpush1.bf16.msra.mxu0 %v2305
  %3269 = vmatprep.subr.bf16.mxu0 %v2310
  %3270 = vmatpush1.bf16.msra.mxu0 %v2309
  %3271 = vmatprep.subr.bf16.mxu0 %v2314
  %3272 = vmatpush1.bf16.msra.mxu0 %v2313
  %3273 = vmatprep.subr.bf16.mxu0 %v2318
  %3274 = vmatpush1.bf16.msra.mxu0 %v2317
  %3275 = vmatprep.subr.bf16.mxu0 %v2322
  %3276 = vmatpush1.bf16.msra.mxu0 %v2321
  %3277 = vmatprep.subr.bf16.mxu0 %v2326
  %3278 = vmatpush1.bf16.msra.mxu0 %v2325
  %3279 = vmatprep.subr.bf16.mxu0 %v2330
  %3280 = vmatpush1.bf16.msra.mxu0 %v2329
  %3281 = vmatprep.subr.bf16.mxu0 %v2334
  %3282 = vmatpush1.bf16.msra.mxu0 %v2333
  %3283 = vmatprep.mubr.bf16.mxu0 %v64
  %3284 = vmatmul.mubr.bf16.gmra.mrb[0].mxu0 %v63
  %v3285 = vpop.f32.mrb[0].mxu0
  %v3286 = vadd.f32 %v3245, %v3285
  %v3287 = vpop.f32.mrb[0].mxu0
  %v3288 = vadd.f32 %v3247, %v3287
  %v3289 = vpop.f32.mrb[0].mxu0
  %v3290 = vpop.f32.mrb[0].mxu0
  %3291 = vdwg.mxu0
  %3292 = vmatprep.subr.bf16.mxu0 %v2338
  %3293 = vmatpush1.bf16.msra.mxu0 %v2337
  %3294 = vmatprep.subr.bf16.mxu0 %v2342
  %3295 = vmatpush1.bf16.msra.mxu0 %v2341
  %3296 = vmatprep.subr.bf16.mxu0 %v2346
  %3297 = vmatpush1.bf16.msra.mxu0 %v2345
  %3298 = vmatprep.subr.bf16.mxu0 %v2350
  %3299 = vmatpush1.bf16.msra.mxu0 %v2349
  %3300 = vmatprep.subr.bf16.mxu0 %v2354
  %3301 = vmatpush1.bf16.msra.mxu0 %v2353
  %3302 = vmatprep.subr.bf16.mxu0 %v2358
  %3303 = vmatpush1.bf16.msra.mxu0 %v2357
  %3304 = vmatprep.subr.bf16.mxu0 %v2362
  %3305 = vmatpush1.bf16.msra.mxu0 %v2361
  %3306 = vmatprep.subr.bf16.mxu0 %v2366
  %3307 = vmatpush1.bf16.msra.mxu0 %v2365
  %3308 = vmatprep.subr.bf16.mxu0 %v2370
  %3309 = vmatpush1.bf16.msra.mxu0 %v2369
  %3310 = vmatprep.subr.bf16.mxu0 %v2374
  %3311 = vmatpush1.bf16.msra.mxu0 %v2373
  %3312 = vmatprep.subr.bf16.mxu0 %v2378
  %3313 = vmatpush1.bf16.msra.mxu0 %v2377
  %3314 = vmatprep.subr.bf16.mxu0 %v2382
  %3315 = vmatpush1.bf16.msra.mxu0 %v2381
  %3316 = vmatprep.subr.bf16.mxu0 %v2386
  %3317 = vmatpush1.bf16.msra.mxu0 %v2385
  %3318 = vmatprep.subr.bf16.mxu0 %v2390
  %3319 = vmatpush1.bf16.msra.mxu0 %v2389
  %3320 = vmatprep.subr.bf16.mxu0 %v2394
  %3321 = vmatpush1.bf16.msra.mxu0 %v2393
  %3322 = vmatprep.subr.bf16.mxu0 %v2398
  %3323 = vmatpush1.bf16.msra.mxu0 %v2397
  %3324 = vmatprep.mubr.bf16.mxu0 %v66
  %3325 = vmatmul.mubr.bf16.gmra.mrb[0].mxu0 %v65
  %v3326 = vpop.f32.mrb[0].mxu0
  %v3327 = vadd.f32 %v3286, %v3326
  %v3328 = vpop.f32.mrb[0].mxu0
  %v3329 = vadd.f32 %v3288, %v3328
  %v3330 = vpop.f32.mrb[0].mxu0
  %v3331 = vpop.f32.mrb[0].mxu0
  %3332 = vdwg.mxu0
  %3333 = vmatprep.subr.bf16.mxu0 %v2402
  %3334 = vmatpush1.bf16.msra.mxu0 %v2401
  %3335 = vmatprep.subr.bf16.mxu0 %v2406
  %3336 = vmatpush1.bf16.msra.mxu0 %v2405
  %3337 = vmatprep.subr.bf16.mxu0 %v2410
  %3338 = vmatpush1.bf16.msra.mxu0 %v2409
  %3339 = vmatprep.subr.bf16.mxu0 %v2414
  %3340 = vmatpush1.bf16.msra.mxu0 %v2413
  %3341 = vmatprep.subr.bf16.mxu0 %v2418
  %3342 = vmatpush1.bf16.msra.mxu0 %v2417
  %3343 = vmatprep.subr.bf16.mxu0 %v2422
  %3344 = vmatpush1.bf16.msra.mxu0 %v2421
  %3345 = vmatprep.subr.bf16.mxu0 %v2426
  %3346 = vmatpush1.bf16.msra.mxu0 %v2425
  %3347 = vmatprep.subr.bf16.mxu0 %v2430
  %3348 = vmatpush1.bf16.msra.mxu0 %v2429
  %3349 = vmatprep.subr.bf16.mxu0 %v2434
  %3350 = vmatpush1.bf16.msra.mxu0 %v2433
  %3351 = vmatprep.subr.bf16.mxu0 %v2438
  %3352 = vmatpush1.bf16.msra.mxu0 %v2437
  %3353 = vmatprep.subr.bf16.mxu0 %v2442
  %3354 = vmatpush1.bf16.msra.mxu0 %v2441
  %3355 = vmatprep.subr.bf16.mxu0 %v2446
  %3356 = vmatpush1.bf16.msra.mxu0 %v2445
  %3357 = vmatprep.subr.bf16.mxu0 %v2450
  %3358 = vmatpush1.bf16.msra.mxu0 %v2449
  %3359 = vmatprep.subr.bf16.mxu0 %v2454
  %3360 = vmatpush1.bf16.msra.mxu0 %v2453
  %3361 = vmatprep.subr.bf16.mxu0 %v2458
  %3362 = vmatpush1.bf16.msra.mxu0 %v2457
  %3363 = vmatprep.subr.bf16.mxu0 %v2462
  %3364 = vmatpush1.bf16.msra.mxu0 %v2461
  %3365 = vmatprep.mubr.bf16.mxu0 %v68
  %3366 = vmatmul.mubr.bf16.gmra.mrb[0].mxu0 %v67
  %v3367 = vpop.f32.mrb[0].mxu0
  %v3368 = vadd.f32 %v3327, %v3367
  %v3369 = vpop.f32.mrb[0].mxu0
  %v3370 = vadd.f32 %v3329, %v3369
  %v3371 = vpop.f32.mrb[0].mxu0
  %v3372 = vpop.f32.mrb[0].mxu0
  %3373 = vdwg.mxu0
  %3374 = vmatprep.subr.bf16.mxu0 %v2466
  %3375 = vmatpush1.bf16.msra.mxu0 %v2465
  %3376 = vmatprep.subr.bf16.mxu0 %v2470
  %3377 = vmatpush1.bf16.msra.mxu0 %v2469
  %3378 = vmatprep.subr.bf16.mxu0 %v2474
  %3379 = vmatpush1.bf16.msra.mxu0 %v2473
  %3380 = vmatprep.subr.bf16.mxu0 %v2478
  %3381 = vmatpush1.bf16.msra.mxu0 %v2477
  %3382 = vmatprep.subr.bf16.mxu0 %v2482
  %3383 = vmatpush1.bf16.msra.mxu0 %v2481
  %3384 = vmatprep.subr.bf16.mxu0 %v2486
  %3385 = vmatpush1.bf16.msra.mxu0 %v2485
  %3386 = vmatprep.subr.bf16.mxu0 %v2490
  %3387 = vmatpush1.bf16.msra.mxu0 %v2489
  %3388 = vmatprep.subr.bf16.mxu0 %v2494
  %3389 = vmatpush1.bf16.msra.mxu0 %v2493
  %3390 = vmatprep.subr.bf16.mxu0 %v2498
  %3391 = vmatpush1.bf16.msra.mxu0 %v2497
  %3392 = vmatprep.subr.bf16.mxu0 %v2502
  %3393 = vmatpush1.bf16.msra.mxu0 %v2501
  %3394 = vmatprep.subr.bf16.mxu0 %v2506
  %3395 = vmatpush1.bf16.msra.mxu0 %v2505
  %3396 = vmatprep.subr.bf16.mxu0 %v2510
  %3397 = vmatpush1.bf16.msra.mxu0 %v2509
  %3398 = vmatprep.subr.bf16.mxu0 %v2514
  %3399 = vmatpush1.bf16.msra.mxu0 %v2513
  %3400 = vmatprep.subr.bf16.mxu0 %v2518
  %3401 = vmatpush1.bf16.msra.mxu0 %v2517
  %3402 = vmatprep.subr.bf16.mxu0 %v2522
  %3403 = vmatpush1.bf16.msra.mxu0 %v2521
  %3404 = vmatprep.subr.bf16.mxu0 %v2526
  %3405 = vmatpush1.bf16.msra.mxu0 %v2525
  %3406 = vmatprep.mubr.bf16.mxu0 %v70
  %3407 = vmatmul.mubr.bf16.gmra.mrb[0].mxu0 %v69
  %v3408 = vpop.f32.mrb[0].mxu0
  %v3409 = vadd.f32 %v3368, %v3408
  %v3410 = vpop.f32.mrb[0].mxu0
  %v3411 = vadd.f32 %v3370, %v3410
  %v3412 = vpop.f32.mrb[0].mxu0
  %v3413 = vpop.f32.mrb[0].mxu0
  %3414 = vdwg.mxu0
  %3415 = vmatprep.subr.bf16.mxu0 %v2530
  %3416 = vmatpush1.bf16.msra.mxu0 %v2529
  %3417 = vmatprep.subr.bf16.mxu0 %v2534
  %3418 = vmatpush1.bf16.msra.mxu0 %v2533
  %3419 = vmatprep.subr.bf16.mxu0 %v2538
  %3420 = vmatpush1.bf16.msra.mxu0 %v2537
  %3421 = vmatprep.subr.bf16.mxu0 %v2542
  %3422 = vmatpush1.bf16.msra.mxu0 %v2541
  %3423 = vmatprep.subr.bf16.mxu0 %v2546
  %3424 = vmatpush1.bf16.msra.mxu0 %v2545
  %3425 = vmatprep.subr.bf16.mxu0 %v2550
  %3426 = vmatpush1.bf16.msra.mxu0 %v2549
  %3427 = vmatprep.subr.bf16.mxu0 %v2554
  %3428 = vmatpush1.bf16.msra.mxu0 %v2553
  %3429 = vmatprep.subr.bf16.mxu0 %v2558
  %3430 = vmatpush1.bf16.msra.mxu0 %v2557
  %3431 = vmatprep.subr.bf16.mxu0 %v2562
  %3432 = vmatpush1.bf16.msra.mxu0 %v2561
  %3433 = vmatprep.subr.bf16.mxu0 %v2566
  %3434 = vmatpush1.bf16.msra.mxu0 %v2565
  %3435 = vmatprep.subr.bf16.mxu0 %v2570
  %3436 = vmatpush1.bf16.msra.mxu0 %v2569
  %3437 = vmatprep.subr.bf16.mxu0 %v2574
  %3438 = vmatpush1.bf16.msra.mxu0 %v2573
  %3439 = vmatprep.subr.bf16.mxu0 %v2578
  %3440 = vmatpush1.bf16.msra.mxu0 %v2577
  %3441 = vmatprep.subr.bf16.mxu0 %v2582
  %3442 = vmatpush1.bf16.msra.mxu0 %v2581
  %3443 = vmatprep.subr.bf16.mxu0 %v2586
  %3444 = vmatpush1.bf16.msra.mxu0 %v2585
  %3445 = vmatprep.subr.bf16.mxu0 %v2590
  %3446 = vmatpush1.bf16.msra.mxu0 %v2589
  %3447 = vmatprep.mubr.bf16.mxu0 %v72
  %3448 = vmatmul.mubr.bf16.gmra.mrb[0].mxu0 %v71
  %v3449 = vpop.f32.mrb[0].mxu0
  %v3450 = vadd.f32 %v3409, %v3449
  %v3451 = vpop.f32.mrb[0].mxu0
  %v3452 = vadd.f32 %v3411, %v3451
  %v3453 = vpop.f32.mrb[0].mxu0
  %v3454 = vpop.f32.mrb[0].mxu0
  %3455 = vdwg.mxu0
  %3456 = vmatprep.subr.bf16.mxu0 %v2594
  %3457 = vmatpush1.bf16.msra.mxu0 %v2593
  %3458 = vmatprep.subr.bf16.mxu0 %v2598
  %3459 = vmatpush1.bf16.msra.mxu0 %v2597
  %3460 = vmatprep.subr.bf16.mxu0 %v2602
  %3461 = vmatpush1.bf16.msra.mxu0 %v2601
  %3462 = vmatprep.subr.bf16.mxu0 %v2606
  %3463 = vmatpush1.bf16.msra.mxu0 %v2605
  %3464 = vmatprep.subr.bf16.mxu0 %v2610
  %3465 = vmatpush1.bf16.msra.mxu0 %v2609
  %3466 = vmatprep.subr.bf16.mxu0 %v2614
  %3467 = vmatpush1.bf16.msra.mxu0 %v2613
  %3468 = vmatprep.subr.bf16.mxu0 %v2618
  %3469 = vmatpush1.bf16.msra.mxu0 %v2617
  %3470 = vmatprep.subr.bf16.mxu0 %v2622
  %3471 = vmatpush1.bf16.msra.mxu0 %v2621
  %3472 = vmatprep.subr.bf16.mxu0 %v2626
  %3473 = vmatpush1.bf16.msra.mxu0 %v2625
  %3474 = vmatprep.subr.bf16.mxu0 %v2630
  %3475 = vmatpush1.bf16.msra.mxu0 %v2629
  %3476 = vmatprep.subr.bf16.mxu0 %v2634
  %3477 = vmatpush1.bf16.msra.mxu0 %v2633
  %3478 = vmatprep.subr.bf16.mxu0 %v2638
  %3479 = vmatpush1.bf16.msra.mxu0 %v2637
  %3480 = vmatprep.subr.bf16.mxu0 %v2642
  %3481 = vmatpush1.bf16.msra.mxu0 %v2641
  %3482 = vmatprep.subr.bf16.mxu0 %v2646
  %3483 = vmatpush1.bf16.msra.mxu0 %v2645
  %3484 = vmatprep.subr.bf16.mxu0 %v2650
  %3485 = vmatpush1.bf16.msra.mxu0 %v2649
  %3486 = vmatprep.subr.bf16.mxu0 %v2654
  %3487 = vmatpush1.bf16.msra.mxu0 %v2653
  %3488 = vmatprep.mubr.bf16.mxu0 %v74
  %3489 = vmatmul.mubr.bf16.gmra.mrb[0].mxu0 %v73
  %v3490 = vpop.f32.mrb[0].mxu0
  %v3491 = vadd.f32 %v3450, %v3490
  %v3492 = vpop.f32.mrb[0].mxu0
  %v3493 = vadd.f32 %v3452, %v3492
  %v3494 = vpop.f32.mrb[0].mxu0
  %v3495 = vpop.f32.mrb[0].mxu0
  %3496 = vdwg.mxu0
  %3497 = vmatprep.subr.bf16.mxu0 %v2148
  %3498 = vmatpush1.bf16.msra.mxu0 %v2147
  %3499 = vmatprep.subr.bf16.mxu0 %v2152
  %3500 = vmatpush1.bf16.msra.mxu0 %v2151
  %3501 = vmatprep.subr.bf16.mxu0 %v2156
  %3502 = vmatpush1.bf16.msra.mxu0 %v2155
  %3503 = vmatprep.subr.bf16.mxu0 %v2160
  %3504 = vmatpush1.bf16.msra.mxu0 %v2159
  %3505 = vmatprep.subr.bf16.mxu0 %v2164
  %3506 = vmatpush1.bf16.msra.mxu0 %v2163
  %3507 = vmatprep.subr.bf16.mxu0 %v2168
  %3508 = vmatpush1.bf16.msra.mxu0 %v2167
  %3509 = vmatprep.subr.bf16.mxu0 %v2172
  %3510 = vmatpush1.bf16.msra.mxu0 %v2171
  %3511 = vmatprep.subr.bf16.mxu0 %v2176
  %3512 = vmatpush1.bf16.msra.mxu0 %v2175
  %3513 = vmatprep.subr.bf16.mxu0 %v2180
  %3514 = vmatpush1.bf16.msra.mxu0 %v2179
  %3515 = vmatprep.subr.bf16.mxu0 %v2184
  %3516 = vmatpush1.bf16.msra.mxu0 %v2183
  %3517 = vmatprep.subr.bf16.mxu0 %v2188
  %3518 = vmatpush1.bf16.msra.mxu0 %v2187
  %3519 = vmatprep.subr.bf16.mxu0 %v2192
  %3520 = vmatpush1.bf16.msra.mxu0 %v2191
  %3521 = vmatprep.subr.bf16.mxu0 %v2196
  %3522 = vmatpush1.bf16.msra.mxu0 %v2195
  %3523 = vmatprep.subr.bf16.mxu0 %v2200
  %3524 = vmatpush1.bf16.msra.mxu0 %v2199
  %3525 = vmatprep.subr.bf16.mxu0 %v2204
  %3526 = vmatpush1.bf16.msra.mxu0 %v2203
  %3527 = vmatprep.subr.bf16.mxu0 %v2208
  %3528 = vmatpush1.bf16.msra.mxu0 %v2207
  %3529 = vmatprep.mubr.bf16.mxu0 %v60
  %3530 = vmatmul.mubr.bf16.gmra.mrb[0].mxu0 %v59
  %v3531 = vpop.f32.mrb[0].mxu0
  %v3532 = vadd.f32 %v600, %v3531
  %v3533 = vpop.f32.mrb[0].mxu0
  %v3534 = vadd.f32 %v604, %v3533
  %v3535 = vpop.f32.mrb[0].mxu0
  %v3536 = vpop.f32.mrb[0].mxu0
  %3537 = vdwg.mxu0
  %3538 = vmatprep.subr.bf16.mxu0 %v2212
  %3539 = vmatpush1.bf16.msra.mxu0 %v2211
  %3540 = vmatprep.subr.bf16.mxu0 %v2216
  %3541 = vmatpush1.bf16.msra.mxu0 %v2215
  %3542 = vmatprep.subr.bf16.mxu0 %v2220
  %3543 = vmatpush1.bf16.msra.mxu0 %v2219
  %3544 = vmatprep.subr.bf16.mxu0 %v2224
  %3545 = vmatpush1.bf16.msra.mxu0 %v2223
  %3546 = vmatprep.subr.bf16.mxu0 %v2228
  %3547 = vmatpush1.bf16.msra.mxu0 %v2227
  %3548 = vmatprep.subr.bf16.mxu0 %v2232
  %3549 = vmatpush1.bf16.msra.mxu0 %v2231
  %3550 = vmatprep.subr.bf16.mxu0 %v2236
  %3551 = vmatpush1.bf16.msra.mxu0 %v2235
  %3552 = vmatprep.subr.bf16.mxu0 %v2240
  %3553 = vmatpush1.bf16.msra.mxu0 %v2239
  %3554 = vmatprep.subr.bf16.mxu0 %v2244
  %3555 = vmatpush1.bf16.msra.mxu0 %v2243
  %3556 = vmatprep.subr.bf16.mxu0 %v2248
  %3557 = vmatpush1.bf16.msra.mxu0 %v2247
  %3558 = vmatprep.subr.bf16.mxu0 %v2252
  %3559 = vmatpush1.bf16.msra.mxu0 %v2251
  %3560 = vmatprep.subr.bf16.mxu0 %v2256
  %3561 = vmatpush1.bf16.msra.mxu0 %v2255
  %3562 = vmatprep.subr.bf16.mxu0 %v2260
  %3563 = vmatpush1.bf16.msra.mxu0 %v2259
  %3564 = vmatprep.subr.bf16.mxu0 %v2264
  %3565 = vmatpush1.bf16.msra.mxu0 %v2263
  %3566 = vmatprep.subr.bf16.mxu0 %v2268
  %3567 = vmatpush1.bf16.msra.mxu0 %v2267
  %3568 = vmatprep.subr.bf16.mxu0 %v2272
  %3569 = vmatpush1.bf16.msra.mxu0 %v2271
  %3570 = vmatprep.mubr.bf16.mxu0 %v62
  %3571 = vmatmul.mubr.bf16.gmra.mrb[0].mxu0 %v61
  %v3572 = vpop.f32.mrb[0].mxu0
  %v3573 = vadd.f32 %v3532, %v3572
  %v3574 = vpop.f32.mrb[0].mxu0
  %v3575 = vadd.f32 %v3534, %v3574
  %v3576 = vpop.f32.mrb[0].mxu0
  %v3577 = vpop.f32.mrb[0].mxu0
  %3578 = vdwg.mxu0
  %3579 = vmatprep.subr.bf16.mxu0 %v2276
  %3580 = vmatpush1.bf16.msra.mxu0 %v2275
  %3581 = vmatprep.subr.bf16.mxu0 %v2280
  %3582 = vmatpush1.bf16.msra.mxu0 %v2279
  %3583 = vmatprep.subr.bf16.mxu0 %v2284
  %3584 = vmatpush1.bf16.msra.mxu0 %v2283
  %3585 = vmatprep.subr.bf16.mxu0 %v2288
  %3586 = vmatpush1.bf16.msra.mxu0 %v2287
  %3587 = vmatprep.subr.bf16.mxu0 %v2292
  %3588 = vmatpush1.bf16.msra.mxu0 %v2291
  %3589 = vmatprep.subr.bf16.mxu0 %v2296
  %3590 = vmatpush1.bf16.msra.mxu0 %v2295
  %3591 = vmatprep.subr.bf16.mxu0 %v2300
  %3592 = vmatpush1.bf16.msra.mxu0 %v2299
  %3593 = vmatprep.subr.bf16.mxu0 %v2304
  %3594 = vmatpush1.bf16.msra.mxu0 %v2303
  %3595 = vmatprep.subr.bf16.mxu0 %v2308
  %3596 = vmatpush1.bf16.msra.mxu0 %v2307
  %3597 = vmatprep.subr.bf16.mxu0 %v2312
  %3598 = vmatpush1.bf16.msra.mxu0 %v2311
  %3599 = vmatprep.subr.bf16.mxu0 %v2316
  %3600 = vmatpush1.bf16.msra.mxu0 %v2315
  %3601 = vmatprep.subr.bf16.mxu0 %v2320
  %3602 = vmatpush1.bf16.msra.mxu0 %v2319
  %3603 = vmatprep.subr.bf16.mxu0 %v2324
  %3604 = vmatpush1.bf16.msra.mxu0 %v2323
  %3605 = vmatprep.subr.bf16.mxu0 %v2328
  %3606 = vmatpush1.bf16.msra.mxu0 %v2327
  %3607 = vmatprep.subr.bf16.mxu0 %v2332
  %3608 = vmatpush1.bf16.msra.mxu0 %v2331
  %3609 = vmatprep.subr.bf16.mxu0 %v2336
  %3610 = vmatpush1.bf16.msra.mxu0 %v2335
  %3611 = vmatprep.mubr.bf16.mxu0 %v64
  %3612 = vmatmul.mubr.bf16.gmra.mrb[0].mxu0 %v63
  %v3613 = vpop.f32.mrb[0].mxu0
  %v3614 = vadd.f32 %v3573, %v3613
  %v3615 = vpop.f32.mrb[0].mxu0
  %v3616 = vadd.f32 %v3575, %v3615
  %v3617 = vpop.f32.mrb[0].mxu0
  %v3618 = vpop.f32.mrb[0].mxu0
  %3619 = vdwg.mxu0
  %3620 = vmatprep.subr.bf16.mxu0 %v2340
  %3621 = vmatpush1.bf16.msra.mxu0 %v2339
  %3622 = vmatprep.subr.bf16.mxu0 %v2344
  %3623 = vmatpush1.bf16.msra.mxu0 %v2343
  %3624 = vmatprep.subr.bf16.mxu0 %v2348
  %3625 = vmatpush1.bf16.msra.mxu0 %v2347
  %3626 = vmatprep.subr.bf16.mxu0 %v2352
  %3627 = vmatpush1.bf16.msra.mxu0 %v2351
  %3628 = vmatprep.subr.bf16.mxu0 %v2356
  %3629 = vmatpush1.bf16.msra.mxu0 %v2355
  %3630 = vmatprep.subr.bf16.mxu0 %v2360
  %3631 = vmatpush1.bf16.msra.mxu0 %v2359
  %3632 = vmatprep.subr.bf16.mxu0 %v2364
  %3633 = vmatpush1.bf16.msra.mxu0 %v2363
  %3634 = vmatprep.subr.bf16.mxu0 %v2368
  %3635 = vmatpush1.bf16.msra.mxu0 %v2367
  %3636 = vmatprep.subr.bf16.mxu0 %v2372
  %3637 = vmatpush1.bf16.msra.mxu0 %v2371
  %3638 = vmatprep.subr.bf16.mxu0 %v2376
  %3639 = vmatpush1.bf16.msra.mxu0 %v2375
  %3640 = vmatprep.subr.bf16.mxu0 %v2380
  %3641 = vmatpush1.bf16.msra.mxu0 %v2379
  %3642 = vmatprep.subr.bf16.mxu0 %v2384
  %3643 = vmatpush1.bf16.msra.mxu0 %v2383
  %3644 = vmatprep.subr.bf16.mxu0 %v2388
  %3645 = vmatpush1.bf16.msra.mxu0 %v2387
  %3646 = vmatprep.subr.bf16.mxu0 %v2392
  %3647 = vmatpush1.bf16.msra.mxu0 %v2391
  %3648 = vmatprep.subr.bf16.mxu0 %v2396
  %3649 = vmatpush1.bf16.msra.mxu0 %v2395
  %3650 = vmatprep.subr.bf16.mxu0 %v2400
  %3651 = vmatpush1.bf16.msra.mxu0 %v2399
  %3652 = vmatprep.mubr.bf16.mxu0 %v66
  %3653 = vmatmul.mubr.bf16.gmra.mrb[0].mxu0 %v65
  %v3654 = vpop.f32.mrb[0].mxu0
  %v3655 = vadd.f32 %v3614, %v3654
  %v3656 = vpop.f32.mrb[0].mxu0
  %v3657 = vadd.f32 %v3616, %v3656
  %v3658 = vpop.f32.mrb[0].mxu0
  %v3659 = vpop.f32.mrb[0].mxu0
  %3660 = vdwg.mxu0
  %3661 = vmatprep.subr.bf16.mxu0 %v2404
  %3662 = vmatpush1.bf16.msra.mxu0 %v2403
  %3663 = vmatprep.subr.bf16.mxu0 %v2408
  %3664 = vmatpush1.bf16.msra.mxu0 %v2407
  %3665 = vmatprep.subr.bf16.mxu0 %v2412
  %3666 = vmatpush1.bf16.msra.mxu0 %v2411
  %3667 = vmatprep.subr.bf16.mxu0 %v2416
  %3668 = vmatpush1.bf16.msra.mxu0 %v2415
  %3669 = vmatprep.subr.bf16.mxu0 %v2420
  %3670 = vmatpush1.bf16.msra.mxu0 %v2419
  %3671 = vmatprep.subr.bf16.mxu0 %v2424
  %3672 = vmatpush1.bf16.msra.mxu0 %v2423
  %3673 = vmatprep.subr.bf16.mxu0 %v2428
  %3674 = vmatpush1.bf16.msra.mxu0 %v2427
  %3675 = vmatprep.subr.bf16.mxu0 %v2432
  %3676 = vmatpush1.bf16.msra.mxu0 %v2431
  %3677 = vmatprep.subr.bf16.mxu0 %v2436
  %3678 = vmatpush1.bf16.msra.mxu0 %v2435
  %3679 = vmatprep.subr.bf16.mxu0 %v2440
  %3680 = vmatpush1.bf16.msra.mxu0 %v2439
  %3681 = vmatprep.subr.bf16.mxu0 %v2444
  %3682 = vmatpush1.bf16.msra.mxu0 %v2443
  %3683 = vmatprep.subr.bf16.mxu0 %v2448
  %3684 = vmatpush1.bf16.msra.mxu0 %v2447
  %3685 = vmatprep.subr.bf16.mxu0 %v2452
  %3686 = vmatpush1.bf16.msra.mxu0 %v2451
  %3687 = vmatprep.subr.bf16.mxu0 %v2456
  %3688 = vmatpush1.bf16.msra.mxu0 %v2455
  %3689 = vmatprep.subr.bf16.mxu0 %v2460
  %3690 = vmatpush1.bf16.msra.mxu0 %v2459
  %3691 = vmatprep.subr.bf16.mxu0 %v2464
  %3692 = vmatpush1.bf16.msra.mxu0 %v2463
  %3693 = vmatprep.mubr.bf16.mxu0 %v68
  %3694 = vmatmul.mubr.bf16.gmra.mrb[0].mxu0 %v67
  %v3695 = vpop.f32.mrb[0].mxu0
  %v3696 = vadd.f32 %v3655, %v3695
  %v3697 = vpop.f32.mrb[0].mxu0
  %v3698 = vadd.f32 %v3657, %v3697
  %v3699 = vpop.f32.mrb[0].mxu0
  %v3700 = vpop.f32.mrb[0].mxu0
  %3701 = vdwg.mxu0
  %3702 = vmatprep.subr.bf16.mxu0 %v2468
  %3703 = vmatpush1.bf16.msra.mxu0 %v2467
  %3704 = vmatprep.subr.bf16.mxu0 %v2472
  %3705 = vmatpush1.bf16.msra.mxu0 %v2471
  %3706 = vmatprep.subr.bf16.mxu0 %v2476
  %3707 = vmatpush1.bf16.msra.mxu0 %v2475
  %3708 = vmatprep.subr.bf16.mxu0 %v2480
  %3709 = vmatpush1.bf16.msra.mxu0 %v2479
  %3710 = vmatprep.subr.bf16.mxu0 %v2484
  %3711 = vmatpush1.bf16.msra.mxu0 %v2483
  %3712 = vmatprep.subr.bf16.mxu0 %v2488
  %3713 = vmatpush1.bf16.msra.mxu0 %v2487
  %3714 = vmatprep.subr.bf16.mxu0 %v2492
  %3715 = vmatpush1.bf16.msra.mxu0 %v2491
  %3716 = vmatprep.subr.bf16.mxu0 %v2496
  %3717 = vmatpush1.bf16.msra.mxu0 %v2495
  %3718 = vmatprep.subr.bf16.mxu0 %v2500
  %3719 = vmatpush1.bf16.msra.mxu0 %v2499
  %3720 = vmatprep.subr.bf16.mxu0 %v2504
  %3721 = vmatpush1.bf16.msra.mxu0 %v2503
  %3722 = vmatprep.subr.bf16.mxu0 %v2508
  %3723 = vmatpush1.bf16.msra.mxu0 %v2507
  %3724 = vmatprep.subr.bf16.mxu0 %v2512
  %3725 = vmatpush1.bf16.msra.mxu0 %v2511
  %3726 = vmatprep.subr.bf16.mxu0 %v2516
  %3727 = vmatpush1.bf16.msra.mxu0 %v2515
  %3728 = vmatprep.subr.bf16.mxu0 %v2520
  %3729 = vmatpush1.bf16.msra.mxu0 %v2519
  %3730 = vmatprep.subr.bf16.mxu0 %v2524
  %3731 = vmatpush1.bf16.msra.mxu0 %v2523
  %3732 = vmatprep.subr.bf16.mxu0 %v2528
  %3733 = vmatpush1.bf16.msra.mxu0 %v2527
  %3734 = vmatprep.mubr.bf16.mxu0 %v70
  %3735 = vmatmul.mubr.bf16.gmra.mrb[0].mxu0 %v69
  %v3736 = vpop.f32.mrb[0].mxu0
  %v3737 = vadd.f32 %v3696, %v3736
  %v3738 = vpop.f32.mrb[0].mxu0
  %v3739 = vadd.f32 %v3698, %v3738
  %v3740 = vpop.f32.mrb[0].mxu0
  %v3741 = vpop.f32.mrb[0].mxu0
  %3742 = vdwg.mxu0
  %3743 = vmatprep.subr.bf16.mxu0 %v2532
  %3744 = vmatpush1.bf16.msra.mxu0 %v2531
  %3745 = vmatprep.subr.bf16.mxu0 %v2536
  %3746 = vmatpush1.bf16.msra.mxu0 %v2535
  %3747 = vmatprep.subr.bf16.mxu0 %v2540
  %3748 = vmatpush1.bf16.msra.mxu0 %v2539
  %3749 = vmatprep.subr.bf16.mxu0 %v2544
  %3750 = vmatpush1.bf16.msra.mxu0 %v2543
  %3751 = vmatprep.subr.bf16.mxu0 %v2548
  %3752 = vmatpush1.bf16.msra.mxu0 %v2547
  %3753 = vmatprep.subr.bf16.mxu0 %v2552
  %3754 = vmatpush1.bf16.msra.mxu0 %v2551
  %3755 = vmatprep.subr.bf16.mxu0 %v2556
  %3756 = vmatpush1.bf16.msra.mxu0 %v2555
  %3757 = vmatprep.subr.bf16.mxu0 %v2560
  %3758 = vmatpush1.bf16.msra.mxu0 %v2559
  %3759 = vmatprep.subr.bf16.mxu0 %v2564
  %3760 = vmatpush1.bf16.msra.mxu0 %v2563
  %3761 = vmatprep.subr.bf16.mxu0 %v2568
  %3762 = vmatpush1.bf16.msra.mxu0 %v2567
  %3763 = vmatprep.subr.bf16.mxu0 %v2572
  %3764 = vmatpush1.bf16.msra.mxu0 %v2571
  %3765 = vmatprep.subr.bf16.mxu0 %v2576
  %3766 = vmatpush1.bf16.msra.mxu0 %v2575
  %3767 = vmatprep.subr.bf16.mxu0 %v2580
  %3768 = vmatpush1.bf16.msra.mxu0 %v2579
  %3769 = vmatprep.subr.bf16.mxu0 %v2584
  %3770 = vmatpush1.bf16.msra.mxu0 %v2583
  %3771 = vmatprep.subr.bf16.mxu0 %v2588
  %3772 = vmatpush1.bf16.msra.mxu0 %v2587
  %3773 = vmatprep.subr.bf16.mxu0 %v2592
  %3774 = vmatpush1.bf16.msra.mxu0 %v2591
  %3775 = vmatprep.mubr.bf16.mxu0 %v72
  %3776 = vmatmul.mubr.bf16.gmra.mrb[0].mxu0 %v71
  %v3777 = vpop.f32.mrb[0].mxu0
  %v3778 = vadd.f32 %v3737, %v3777
  %v3779 = vpop.f32.mrb[0].mxu0
  %v3780 = vadd.f32 %v3739, %v3779
  %v3781 = vpop.f32.mrb[0].mxu0
  %v3782 = vpop.f32.mrb[0].mxu0
  %3783 = vdwg.mxu0
  %3784 = vmatprep.subr.bf16.mxu0 %v2596
  %3785 = vmatpush1.bf16.msra.mxu0 %v2595
  %3786 = vmatprep.subr.bf16.mxu0 %v2600
  %3787 = vmatpush1.bf16.msra.mxu0 %v2599
  %3788 = vmatprep.subr.bf16.mxu0 %v2604
  %3789 = vmatpush1.bf16.msra.mxu0 %v2603
  %3790 = vmatprep.subr.bf16.mxu0 %v2608
  %3791 = vmatpush1.bf16.msra.mxu0 %v2607
  %3792 = vmatprep.subr.bf16.mxu0 %v2612
  %3793 = vmatpush1.bf16.msra.mxu0 %v2611
  %3794 = vmatprep.subr.bf16.mxu0 %v2616
  %3795 = vmatpush1.bf16.msra.mxu0 %v2615
  %3796 = vmatprep.subr.bf16.mxu0 %v2620
  %3797 = vmatpush1.bf16.msra.mxu0 %v2619
  %3798 = vmatprep.subr.bf16.mxu0 %v2624
  %3799 = vmatpush1.bf16.msra.mxu0 %v2623
  %3800 = vmatprep.subr.bf16.mxu0 %v2628
  %3801 = vmatpush1.bf16.msra.mxu0 %v2627
  %3802 = vmatprep.subr.bf16.mxu0 %v2632
  %3803 = vmatpush1.bf16.msra.mxu0 %v2631
  %3804 = vmatprep.subr.bf16.mxu0 %v2636
  %3805 = vmatpush1.bf16.msra.mxu0 %v2635
  %3806 = vmatprep.subr.bf16.mxu0 %v2640
  %3807 = vmatpush1.bf16.msra.mxu0 %v2639
  %3808 = vmatprep.subr.bf16.mxu0 %v2644
  %3809 = vmatpush1.bf16.msra.mxu0 %v2643
  %3810 = vmatprep.subr.bf16.mxu0 %v2648
  %3811 = vmatpush1.bf16.msra.mxu0 %v2647
  %3812 = vmatprep.subr.bf16.mxu0 %v2652
  %3813 = vmatpush1.bf16.msra.mxu0 %v2651
  %3814 = vmatprep.subr.bf16.mxu0 %v2656
  %3815 = vmatpush1.bf16.msra.mxu0 %v2655
  %3816 = vmatprep.mubr.bf16.mxu0 %v74
  %3817 = vmatmul.mubr.bf16.gmra.mrb[0].mxu0 %v73
  %v3818 = vpop.f32.mrb[0].mxu0
  %v3819 = vadd.f32 %v3778, %v3818
  %v3820 = vpop.f32.mrb[0].mxu0
  %v3821 = vadd.f32 %v3780, %v3820
  %v3822 = vpop.f32.mrb[0].mxu0
  %v3823 = vpop.f32.mrb[0].mxu0
  %3824 = vdwg.mxu0
  %v3825 = vmax.f32 %v3491, 0.0
  %v3826 = vmax.f32 %v3493, 0.0
  %v3827 = vmax.f32 %v3819, 0.0
  %v3828 = vmax.f32 %v3821, 0.0
  %v3829 = vpack.c.bf16 %v3825, %v3825
  %v3830 = vpack.c.bf16 %v3826, %v3826
  %v3831 = vpack.c.bf16 %v3827, %v3827
  %v3832 = vpack.c.bf16 %v3828, %v3828
  %v3833 = vld [vmem:[%s3] sm:$0xff]
  %v3834 = vld [vmem:[%s3 + $0x8] sm:$0xff]
  %v3835 = vld [vmem:[%s3 + $0x10] sm:$0xff]
  %v3836 = vld [vmem:[%s3 + $0x18] sm:$0xff]
  %v3837 = vld [vmem:[%s3 + $0x20] sm:$0xff]
  %v3838 = vld [vmem:[%s3 + $0x28] sm:$0xff]
  %v3839 = vld [vmem:[%s3 + $0x30] sm:$0xff]
  %v3840 = vld [vmem:[%s3 + $0x38] sm:$0xff]
  %v3841 = vld [vmem:[%s3 + $0x40] sm:$0xff]
  %v3842 = vld [vmem:[%s3 + $0x48] sm:$0xff]
  %v3843 = vld [vmem:[%s3 + $0x50] sm:$0xff]
  %v3844 = vld [vmem:[%s3 + $0x58] sm:$0xff]
  %v3845 = vld [vmem:[%s3 + $0x60] sm:$0xff]
  %v3846 = vld [vmem:[%s3 + $0x68] sm:$0xff]
  %v3847 = vld [vmem:[%s3 + $0x70] sm:$0xff]
  %v3848 = vld [vmem:[%s3 + $0x78] sm:$0xff]
  %v3849 = vld [vmem:[%s3 + $0x80] sm:$0xff]
  %v3850 = vld [vmem:[%s3 + $0x88] sm:$0xff]
  %v3851 = vld [vmem:[%s3 + $0x90] sm:$0xff]
  %v3852 = vld [vmem:[%s3 + $0x98] sm:$0xff]
  %v3853 = vld [vmem:[%s3 + $0xa0] sm:$0xff]
  %v3854 = vld [vmem:[%s3 + $0xa8] sm:$0xff]
  %v3855 = vld [vmem:[%s3 + $0xb0] sm:$0xff]
  %v3856 = vld [vmem:[%s3 + $0xb8] sm:$0xff]
  %v3857 = vld [vmem:[%s3 + $0xc0] sm:$0xff]
  %v3858 = vld [vmem:[%s3 + $0xc8] sm:$0xff]
  %v3859 = vld [vmem:[%s3 + $0xd0] sm:$0xff]
  %v3860 = vld [vmem:[%s3 + $0xd8] sm:$0xff]
  %v3861 = vld [vmem:[%s3 + $0xe0] sm:$0xff]
  %v3862 = vld [vmem:[%s3 + $0xe8] sm:$0xff]
  %v3863 = vld [vmem:[%s3 + $0xf0] sm:$0xff]
  %v3864 = vld [vmem:[%s3 + $0xf8] sm:$0xff]
  %v3865 = vld [vmem:[%s3 + $0x100] sm:$0xff]
  %v3866 = vld [vmem:[%s3 + $0x108] sm:$0xff]
  %v3867 = vld [vmem:[%s3 + $0x110] sm:$0xff]
  %v3868 = vld [vmem:[%s3 + $0x118] sm:$0xff]
  %v3869 = vld [vmem:[%s3 + $0x120] sm:$0xff]
  %v3870 = vld [vmem:[%s3 + $0x128] sm:$0xff]
  %v3871 = vld [vmem:[%s3 + $0x130] sm:$0xff]
  %v3872 = vld [vmem:[%s3 + $0x138] sm:$0xff]
  %v3873 = vld [vmem:[%s3 + $0x140] sm:$0xff]
  %v3874 = vld [vmem:[%s3 + $0x148] sm:$0xff]
  %v3875 = vld [vmem:[%s3 + $0x150] sm:$0xff]
  %v3876 = vld [vmem:[%s3 + $0x158] sm:$0xff]
  %v3877 = vld [vmem:[%s3 + $0x160] sm:$0xff]
  %v3878 = vld [vmem:[%s3 + $0x168] sm:$0xff]
  %v3879 = vld [vmem:[%s3 + $0x170] sm:$0xff]
  %v3880 = vld [vmem:[%s3 + $0x178] sm:$0xff]
  %v3881 = vld [vmem:[%s3 + $0x180] sm:$0xff]
  %v3882 = vld [vmem:[%s3 + $0x188] sm:$0xff]
  %v3883 = vld [vmem:[%s3 + $0x190] sm:$0xff]
  %v3884 = vld [vmem:[%s3 + $0x198] sm:$0xff]
  %v3885 = vld [vmem:[%s3 + $0x1a0] sm:$0xff]
  %v3886 = vld [vmem:[%s3 + $0x1a8] sm:$0xff]
  %v3887 = vld [vmem:[%s3 + $0x1b0] sm:$0xff]
  %v3888 = vld [vmem:[%s3 + $0x1b8] sm:$0xff]
  %v3889 = vld [vmem:[%s3 + $0x1c0] sm:$0xff]
  %v3890 = vld [vmem:[%s3 + $0x1c8] sm:$0xff]
  %v3891 = vld [vmem:[%s3 + $0x1d0] sm:$0xff]
  %v3892 = vld [vmem:[%s3 + $0x1d8] sm:$0xff]
  %v3893 = vld [vmem:[%s3 + $0x1e0] sm:$0xff]
  %v3894 = vld [vmem:[%s3 + $0x1e8] sm:$0xff]
  %v3895 = vld [vmem:[%s3 + $0x1f0] sm:$0xff]
  %v3896 = vld [vmem:[%s3 + $0x1f8] sm:$0xff]
  %v3897 = vld [vmem:[%s3 + $0x200] sm:$0xff]
  %v3898 = vld [vmem:[%s3 + $0x208] sm:$0xff]
  %v3899 = vld [vmem:[%s3 + $0x210] sm:$0xff]
  %v3900 = vld [vmem:[%s3 + $0x218] sm:$0xff]
  %v3901 = vld [vmem:[%s3 + $0x220] sm:$0xff]
  %v3902 = vld [vmem:[%s3 + $0x228] sm:$0xff]
  %v3903 = vld [vmem:[%s3 + $0x230] sm:$0xff]
  %v3904 = vld [vmem:[%s3 + $0x238] sm:$0xff]
  %v3905 = vld [vmem:[%s3 + $0x240] sm:$0xff]
  %v3906 = vld [vmem:[%s3 + $0x248] sm:$0xff]
  %v3907 = vld [vmem:[%s3 + $0x250] sm:$0xff]
  %v3908 = vld [vmem:[%s3 + $0x258] sm:$0xff]
  %v3909 = vld [vmem:[%s3 + $0x260] sm:$0xff]
  %v3910 = vld [vmem:[%s3 + $0x268] sm:$0xff]
  %v3911 = vld [vmem:[%s3 + $0x270] sm:$0xff]
  %v3912 = vld [vmem:[%s3 + $0x278] sm:$0xff]
  %v3913 = vld [vmem:[%s3 + $0x280] sm:$0xff]
  %v3914 = vld [vmem:[%s3 + $0x288] sm:$0xff]
  %v3915 = vld [vmem:[%s3 + $0x290] sm:$0xff]
  %v3916 = vld [vmem:[%s3 + $0x298] sm:$0xff]
  %v3917 = vld [vmem:[%s3 + $0x2a0] sm:$0xff]
  %v3918 = vld [vmem:[%s3 + $0x2a8] sm:$0xff]
  %v3919 = vld [vmem:[%s3 + $0x2b0] sm:$0xff]
  %v3920 = vld [vmem:[%s3 + $0x2b8] sm:$0xff]
  %v3921 = vld [vmem:[%s3 + $0x2c0] sm:$0xff]
  %v3922 = vld [vmem:[%s3 + $0x2c8] sm:$0xff]
  %v3923 = vld [vmem:[%s3 + $0x2d0] sm:$0xff]
  %v3924 = vld [vmem:[%s3 + $0x2d8] sm:$0xff]
  %v3925 = vld [vmem:[%s3 + $0x2e0] sm:$0xff]
  %v3926 = vld [vmem:[%s3 + $0x2e8] sm:$0xff]
  %v3927 = vld [vmem:[%s3 + $0x2f0] sm:$0xff]
  %v3928 = vld [vmem:[%s3 + $0x2f8] sm:$0xff]
  %v3929 = vld [vmem:[%s3 + $0x300] sm:$0xff]
  %v3930 = vld [vmem:[%s3 + $0x308] sm:$0xff]
  %v3931 = vld [vmem:[%s3 + $0x310] sm:$0xff]
  %v3932 = vld [vmem:[%s3 + $0x318] sm:$0xff]
  %v3933 = vld [vmem:[%s3 + $0x320] sm:$0xff]
  %v3934 = vld [vmem:[%s3 + $0x328] sm:$0xff]
  %v3935 = vld [vmem:[%s3 + $0x330] sm:$0xff]
  %v3936 = vld [vmem:[%s3 + $0x338] sm:$0xff]
  %v3937 = vld [vmem:[%s3 + $0x340] sm:$0xff]
  %v3938 = vld [vmem:[%s3 + $0x348] sm:$0xff]
  %v3939 = vld [vmem:[%s3 + $0x350] sm:$0xff]
  %v3940 = vld [vmem:[%s3 + $0x358] sm:$0xff]
  %v3941 = vld [vmem:[%s3 + $0x360] sm:$0xff]
  %v3942 = vld [vmem:[%s3 + $0x368] sm:$0xff]
  %v3943 = vld [vmem:[%s3 + $0x370] sm:$0xff]
  %v3944 = vld [vmem:[%s3 + $0x378] sm:$0xff]
  %v3945 = vld [vmem:[%s3 + $0x380] sm:$0xff]
  %v3946 = vld [vmem:[%s3 + $0x388] sm:$0xff]
  %v3947 = vld [vmem:[%s3 + $0x390] sm:$0xff]
  %v3948 = vld [vmem:[%s3 + $0x398] sm:$0xff]
  %v3949 = vld [vmem:[%s3 + $0x3a0] sm:$0xff]
  %v3950 = vld [vmem:[%s3 + $0x3a8] sm:$0xff]
  %v3951 = vld [vmem:[%s3 + $0x3b0] sm:$0xff]
  %v3952 = vld [vmem:[%s3 + $0x3b8] sm:$0xff]
  %v3953 = vld [vmem:[%s3 + $0x3c0] sm:$0xff]
  %v3954 = vld [vmem:[%s3 + $0x3c8] sm:$0xff]
  %v3955 = vld [vmem:[%s3 + $0x3d0] sm:$0xff]
  %v3956 = vld [vmem:[%s3 + $0x3d8] sm:$0xff]
  %v3957 = vld [vmem:[%s3 + $0x3e0] sm:$0xff]
  %v3958 = vld [vmem:[%s3 + $0x3e8] sm:$0xff]
  %v3959 = vld [vmem:[%s3 + $0x3f0] sm:$0xff]
  %v3960 = vld [vmem:[%s3 + $0x3f8] sm:$0xff]
  %v3961 = vld [vmem:[%s4] sm:$0xf]
  %v3963 = vlaneseq
  %v3964 = vshrl.u32 %v3963, 7
  %v3965 = vsub.s32 0, %v3964
  %v3966 = vrot.slane %v3961, %v3965
  %v3967 = vlaneseq
  %v3968 = vshrl.u32 %v3967, 7
  %v3969 = vsub.s32 1, %v3968
  %v3970 = vrot.slane %v3961, %v3969
  %v3971 = vlaneseq
  %v3972 = vshrl.u32 %v3971, 7
  %v3973 = vsub.s32 2, %v3972
  %v3974 = vrot.slane %v3961, %v3973
  %v3975 = vlaneseq
  %v3976 = vshrl.u32 %v3975, 7
  %v3977 = vsub.s32 3, %v3976
  %v3978 = vrot.slane %v3961, %v3977
  %v4111 = vunpack.c.l.b16 %v3833
  %v4112 = vunpack.c.h.b16 %v3833
  %v4113 = vunpack.c.l.b16 %v3834
  %v4114 = vunpack.c.h.b16 %v3834
  %v4115 = vunpack.c.l.b16 %v3835
  %v4116 = vunpack.c.h.b16 %v3835
  %v4117 = vunpack.c.l.b16 %v3836
  %v4118 = vunpack.c.h.b16 %v3836
  %v4119 = vunpack.c.l.b16 %v3837
  %v4120 = vunpack.c.h.b16 %v3837
  %v4121 = vunpack.c.l.b16 %v3838
  %v4122 = vunpack.c.h.b16 %v3838
  %v4123 = vunpack.c.l.b16 %v3839
  %v4124 = vunpack.c.h.b16 %v3839
  %v4125 = vunpack.c.l.b16 %v3840
  %v4126 = vunpack.c.h.b16 %v3840
  %v4127 = vunpack.c.l.b16 %v3841
  %v4128 = vunpack.c.h.b16 %v3841
  %v4129 = vunpack.c.l.b16 %v3842
  %v4130 = vunpack.c.h.b16 %v3842
  %v4131 = vunpack.c.l.b16 %v3843
  %v4132 = vunpack.c.h.b16 %v3843
  %v4133 = vunpack.c.l.b16 %v3844
  %v4134 = vunpack.c.h.b16 %v3844
  %v4135 = vunpack.c.l.b16 %v3845
  %v4136 = vunpack.c.h.b16 %v3845
  %v4137 = vunpack.c.l.b16 %v3846
  %v4138 = vunpack.c.h.b16 %v3846
  %v4139 = vunpack.c.l.b16 %v3847
  %v4140 = vunpack.c.h.b16 %v3847
  %v4141 = vunpack.c.l.b16 %v3848
  %v4142 = vunpack.c.h.b16 %v3848
  %v4143 = vunpack.c.l.b16 %v3849
  %v4144 = vunpack.c.h.b16 %v3849
  %v4145 = vunpack.c.l.b16 %v3850
  %v4146 = vunpack.c.h.b16 %v3850
  %v4147 = vunpack.c.l.b16 %v3851
  %v4148 = vunpack.c.h.b16 %v3851
  %v4149 = vunpack.c.l.b16 %v3852
  %v4150 = vunpack.c.h.b16 %v3852
  %v4151 = vunpack.c.l.b16 %v3853
  %v4152 = vunpack.c.h.b16 %v3853
  %v4153 = vunpack.c.l.b16 %v3854
  %v4154 = vunpack.c.h.b16 %v3854
  %v4155 = vunpack.c.l.b16 %v3855
  %v4156 = vunpack.c.h.b16 %v3855
  %v4157 = vunpack.c.l.b16 %v3856
  %v4158 = vunpack.c.h.b16 %v3856
  %v4159 = vunpack.c.l.b16 %v3857
  %v4160 = vunpack.c.h.b16 %v3857
  %v4161 = vunpack.c.l.b16 %v3858
  %v4162 = vunpack.c.h.b16 %v3858
  %v4163 = vunpack.c.l.b16 %v3859
  %v4164 = vunpack.c.h.b16 %v3859
  %v4165 = vunpack.c.l.b16 %v3860
  %v4166 = vunpack.c.h.b16 %v3860
  %v4167 = vunpack.c.l.b16 %v3861
  %v4168 = vunpack.c.h.b16 %v3861
  %v4169 = vunpack.c.l.b16 %v3862
  %v4170 = vunpack.c.h.b16 %v3862
  %v4171 = vunpack.c.l.b16 %v3863
  %v4172 = vunpack.c.h.b16 %v3863
  %v4173 = vunpack.c.l.b16 %v3864
  %v4174 = vunpack.c.h.b16 %v3864
  %v4175 = vunpack.c.l.b16 %v3865
  %v4176 = vunpack.c.h.b16 %v3865
  %v4177 = vunpack.c.l.b16 %v3866
  %v4178 = vunpack.c.h.b16 %v3866
  %v4179 = vunpack.c.l.b16 %v3867
  %v4180 = vunpack.c.h.b16 %v3867
  %v4181 = vunpack.c.l.b16 %v3868
  %v4182 = vunpack.c.h.b16 %v3868
  %v4183 = vunpack.c.l.b16 %v3869
  %v4184 = vunpack.c.h.b16 %v3869
  %v4185 = vunpack.c.l.b16 %v3870
  %v4186 = vunpack.c.h.b16 %v3870
  %v4187 = vunpack.c.l.b16 %v3871
  %v4188 = vunpack.c.h.b16 %v3871
  %v4189 = vunpack.c.l.b16 %v3872
  %v4190 = vunpack.c.h.b16 %v3872
  %v4191 = vunpack.c.l.b16 %v3873
  %v4192 = vunpack.c.h.b16 %v3873
  %v4193 = vunpack.c.l.b16 %v3874
  %v4194 = vunpack.c.h.b16 %v3874
  %v4195 = vunpack.c.l.b16 %v3875
  %v4196 = vunpack.c.h.b16 %v3875
  %v4197 = vunpack.c.l.b16 %v3876
  %v4198 = vunpack.c.h.b16 %v3876
  %v4199 = vunpack.c.l.b16 %v3877
  %v4200 = vunpack.c.h.b16 %v3877
  %v4201 = vunpack.c.l.b16 %v3878
  %v4202 = vunpack.c.h.b16 %v3878
  %v4203 = vunpack.c.l.b16 %v3879
  %v4204 = vunpack.c.h.b16 %v3879
  %v4205 = vunpack.c.l.b16 %v3880
  %v4206 = vunpack.c.h.b16 %v3880
  %v4207 = vunpack.c.l.b16 %v3881
  %v4208 = vunpack.c.h.b16 %v3881
  %v4209 = vunpack.c.l.b16 %v3882
  %v4210 = vunpack.c.h.b16 %v3882
  %v4211 = vunpack.c.l.b16 %v3883
  %v4212 = vunpack.c.h.b16 %v3883
  %v4213 = vunpack.c.l.b16 %v3884
  %v4214 = vunpack.c.h.b16 %v3884
  %v4215 = vunpack.c.l.b16 %v3885
  %v4216 = vunpack.c.h.b16 %v3885
  %v4217 = vunpack.c.l.b16 %v3886
  %v4218 = vunpack.c.h.b16 %v3886
  %v4219 = vunpack.c.l.b16 %v3887
  %v4220 = vunpack.c.h.b16 %v3887
  %v4221 = vunpack.c.l.b16 %v3888
  %v4222 = vunpack.c.h.b16 %v3888
  %v4223 = vunpack.c.l.b16 %v3889
  %v4224 = vunpack.c.h.b16 %v3889
  %v4225 = vunpack.c.l.b16 %v3890
  %v4226 = vunpack.c.h.b16 %v3890
  %v4227 = vunpack.c.l.b16 %v3891
  %v4228 = vunpack.c.h.b16 %v3891
  %v4229 = vunpack.c.l.b16 %v3892
  %v4230 = vunpack.c.h.b16 %v3892
  %v4231 = vunpack.c.l.b16 %v3893
  %v4232 = vunpack.c.h.b16 %v3893
  %v4233 = vunpack.c.l.b16 %v3894
  %v4234 = vunpack.c.h.b16 %v3894
  %v4235 = vunpack.c.l.b16 %v3895
  %v4236 = vunpack.c.h.b16 %v3895
  %v4237 = vunpack.c.l.b16 %v3896
  %v4238 = vunpack.c.h.b16 %v3896
  %v4239 = vunpack.c.l.b16 %v3897
  %v4240 = vunpack.c.h.b16 %v3897
  %v4241 = vunpack.c.l.b16 %v3898
  %v4242 = vunpack.c.h.b16 %v3898
  %v4243 = vunpack.c.l.b16 %v3899
  %v4244 = vunpack.c.h.b16 %v3899
  %v4245 = vunpack.c.l.b16 %v3900
  %v4246 = vunpack.c.h.b16 %v3900
  %v4247 = vunpack.c.l.b16 %v3901
  %v4248 = vunpack.c.h.b16 %v3901
  %v4249 = vunpack.c.l.b16 %v3902
  %v4250 = vunpack.c.h.b16 %v3902
  %v4251 = vunpack.c.l.b16 %v3903
  %v4252 = vunpack.c.h.b16 %v3903
  %v4253 = vunpack.c.l.b16 %v3904
  %v4254 = vunpack.c.h.b16 %v3904
  %v4255 = vunpack.c.l.b16 %v3905
  %v4256 = vunpack.c.h.b16 %v3905
  %v4257 = vunpack.c.l.b16 %v3906
  %v4258 = vunpack.c.h.b16 %v3906
  %v4259 = vunpack.c.l.b16 %v3907
  %v4260 = vunpack.c.h.b16 %v3907
  %v4261 = vunpack.c.l.b16 %v3908
  %v4262 = vunpack.c.h.b16 %v3908
  %v4263 = vunpack.c.l.b16 %v3909
  %v4264 = vunpack.c.h.b16 %v3909
  %v4265 = vunpack.c.l.b16 %v3910
  %v4266 = vunpack.c.h.b16 %v3910
  %v4267 = vunpack.c.l.b16 %v3911
  %v4268 = vunpack.c.h.b16 %v3911
  %v4269 = vunpack.c.l.b16 %v3912
  %v4270 = vunpack.c.h.b16 %v3912
  %v4271 = vunpack.c.l.b16 %v3913
  %v4272 = vunpack.c.h.b16 %v3913
  %v4273 = vunpack.c.l.b16 %v3914
  %v4274 = vunpack.c.h.b16 %v3914
  %v4275 = vunpack.c.l.b16 %v3915
  %v4276 = vunpack.c.h.b16 %v3915
  %v4277 = vunpack.c.l.b16 %v3916
  %v4278 = vunpack.c.h.b16 %v3916
  %v4279 = vunpack.c.l.b16 %v3917
  %v4280 = vunpack.c.h.b16 %v3917
  %v4281 = vunpack.c.l.b16 %v3918
  %v4282 = vunpack.c.h.b16 %v3918
  %v4283 = vunpack.c.l.b16 %v3919
  %v4284 = vunpack.c.h.b16 %v3919
  %v4285 = vunpack.c.l.b16 %v3920
  %v4286 = vunpack.c.h.b16 %v3920
  %v4287 = vunpack.c.l.b16 %v3921
  %v4288 = vunpack.c.h.b16 %v3921
  %v4289 = vunpack.c.l.b16 %v3922
  %v4290 = vunpack.c.h.b16 %v3922
  %v4291 = vunpack.c.l.b16 %v3923
  %v4292 = vunpack.c.h.b16 %v3923
  %v4293 = vunpack.c.l.b16 %v3924
  %v4294 = vunpack.c.h.b16 %v3924
  %v4295 = vunpack.c.l.b16 %v3925
  %v4296 = vunpack.c.h.b16 %v3925
  %v4297 = vunpack.c.l.b16 %v3926
  %v4298 = vunpack.c.h.b16 %v3926
  %v4299 = vunpack.c.l.b16 %v3927
  %v4300 = vunpack.c.h.b16 %v3927
  %v4301 = vunpack.c.l.b16 %v3928
  %v4302 = vunpack.c.h.b16 %v3928
  %v4303 = vunpack.c.l.b16 %v3929
  %v4304 = vunpack.c.h.b16 %v3929
  %v4305 = vunpack.c.l.b16 %v3930
  %v4306 = vunpack.c.h.b16 %v3930
  %v4307 = vunpack.c.l.b16 %v3931
  %v4308 = vunpack.c.h.b16 %v3931
  %v4309 = vunpack.c.l.b16 %v3932
  %v4310 = vunpack.c.h.b16 %v3932
  %v4311 = vunpack.c.l.b16 %v3933
  %v4312 = vunpack.c.h.b16 %v3933
  %v4313 = vunpack.c.l.b16 %v3934
  %v4314 = vunpack.c.h.b16 %v3934
  %v4315 = vunpack.c.l.b16 %v3935
  %v4316 = vunpack.c.h.b16 %v3935
  %v4317 = vunpack.c.l.b16 %v3936
  %v4318 = vunpack.c.h.b16 %v3936
  %v4319 = vunpack.c.l.b16 %v3937
  %v4320 = vunpack.c.h.b16 %v3937
  %v4321 = vunpack.c.l.b16 %v3938
  %v4322 = vunpack.c.h.b16 %v3938
  %v4323 = vunpack.c.l.b16 %v3939
  %v4324 = vunpack.c.h.b16 %v3939
  %v4325 = vunpack.c.l.b16 %v3940
  %v4326 = vunpack.c.h.b16 %v3940
  %v4327 = vunpack.c.l.b16 %v3941
  %v4328 = vunpack.c.h.b16 %v3941
  %v4329 = vunpack.c.l.b16 %v3942
  %v4330 = vunpack.c.h.b16 %v3942
  %v4331 = vunpack.c.l.b16 %v3943
  %v4332 = vunpack.c.h.b16 %v3943
  %v4333 = vunpack.c.l.b16 %v3944
  %v4334 = vunpack.c.h.b16 %v3944
  %v4335 = vunpack.c.l.b16 %v3945
  %v4336 = vunpack.c.h.b16 %v3945
  %v4337 = vunpack.c.l.b16 %v3946
  %v4338 = vunpack.c.h.b16 %v3946
  %v4339 = vunpack.c.l.b16 %v3947
  %v4340 = vunpack.c.h.b16 %v3947
  %v4341 = vunpack.c.l.b16 %v3948
  %v4342 = vunpack.c.h.b16 %v3948
  %v4343 = vunpack.c.l.b16 %v3949
  %v4344 = vunpack.c.h.b16 %v3949
  %v4345 = vunpack.c.l.b16 %v3950
  %v4346 = vunpack.c.h.b16 %v3950
  %v4347 = vunpack.c.l.b16 %v3951
  %v4348 = vunpack.c.h.b16 %v3951
  %v4349 = vunpack.c.l.b16 %v3952
  %v4350 = vunpack.c.h.b16 %v3952
  %v4351 = vunpack.c.l.b16 %v3953
  %v4352 = vunpack.c.h.b16 %v3953
  %v4353 = vunpack.c.l.b16 %v3954
  %v4354 = vunpack.c.h.b16 %v3954
  %v4355 = vunpack.c.l.b16 %v3955
  %v4356 = vunpack.c.h.b16 %v3955
  %v4357 = vunpack.c.l.b16 %v3956
  %v4358 = vunpack.c.h.b16 %v3956
  %v4359 = vunpack.c.l.b16 %v3957
  %v4360 = vunpack.c.h.b16 %v3957
  %v4361 = vunpack.c.l.b16 %v3958
  %v4362 = vunpack.c.h.b16 %v3958
  %v4363 = vunpack.c.l.b16 %v3959
  %v4364 = vunpack.c.h.b16 %v3959
  %v4365 = vunpack.c.l.b16 %v3960
  %v4366 = vunpack.c.h.b16 %v3960
  %v4367 = vpack.c.b16 %v4115, %v4111
  %v4368 = vpack.c.b16 %v4116, %v4112
  %v4369 = vpack.c.b16 %v4117, %v4113
  %v4370 = vpack.c.b16 %v4118, %v4114
  %v4371 = vpack.c.b16 %v4123, %v4119
  %v4372 = vpack.c.b16 %v4124, %v4120
  %v4373 = vpack.c.b16 %v4125, %v4121
  %v4374 = vpack.c.b16 %v4126, %v4122
  %v4375 = vpack.c.b16 %v4131, %v4127
  %v4376 = vpack.c.b16 %v4132, %v4128
  %v4377 = vpack.c.b16 %v4133, %v4129
  %v4378 = vpack.c.b16 %v4134, %v4130
  %v4379 = vpack.c.b16 %v4139, %v4135
  %v4380 = vpack.c.b16 %v4140, %v4136
  %v4381 = vpack.c.b16 %v4141, %v4137
  %v4382 = vpack.c.b16 %v4142, %v4138
  %v4383 = vpack.c.b16 %v4147, %v4143
  %v4384 = vpack.c.b16 %v4148, %v4144
  %v4385 = vpack.c.b16 %v4149, %v4145
  %v4386 = vpack.c.b16 %v4150, %v4146
  %v4387 = vpack.c.b16 %v4155, %v4151
  %v4388 = vpack.c.b16 %v4156, %v4152
  %v4389 = vpack.c.b16 %v4157, %v4153
  %v4390 = vpack.c.b16 %v4158, %v4154
  %v4391 = vpack.c.b16 %v4163, %v4159
  %v4392 = vpack.c.b16 %v4164, %v4160
  %v4393 = vpack.c.b16 %v4165, %v4161
  %v4394 = vpack.c.b16 %v4166, %v4162
  %v4395 = vpack.c.b16 %v4171, %v4167
  %v4396 = vpack.c.b16 %v4172, %v4168
  %v4397 = vpack.c.b16 %v4173, %v4169
  %v4398 = vpack.c.b16 %v4174, %v4170
  %v4399 = vpack.c.b16 %v4179, %v4175
  %v4400 = vpack.c.b16 %v4180, %v4176
  %v4401 = vpack.c.b16 %v4181, %v4177
  %v4402 = vpack.c.b16 %v4182, %v4178
  %v4403 = vpack.c.b16 %v4187, %v4183
  %v4404 = vpack.c.b16 %v4188, %v4184
  %v4405 = vpack.c.b16 %v4189, %v4185
  %v4406 = vpack.c.b16 %v4190, %v4186
  %v4407 = vpack.c.b16 %v4195, %v4191
  %v4408 = vpack.c.b16 %v4196, %v4192
  %v4409 = vpack.c.b16 %v4197, %v4193
  %v4410 = vpack.c.b16 %v4198, %v4194
  %v4411 = vpack.c.b16 %v4203, %v4199
  %v4412 = vpack.c.b16 %v4204, %v4200
  %v4413 = vpack.c.b16 %v4205, %v4201
  %v4414 = vpack.c.b16 %v4206, %v4202
  %v4415 = vpack.c.b16 %v4211, %v4207
  %v4416 = vpack.c.b16 %v4212, %v4208
  %v4417 = vpack.c.b16 %v4213, %v4209
  %v4418 = vpack.c.b16 %v4214, %v4210
  %v4419 = vpack.c.b16 %v4219, %v4215
  %v4420 = vpack.c.b16 %v4220, %v4216
  %v4421 = vpack.c.b16 %v4221, %v4217
  %v4422 = vpack.c.b16 %v4222, %v4218
  %v4423 = vpack.c.b16 %v4227, %v4223
  %v4424 = vpack.c.b16 %v4228, %v4224
  %v4425 = vpack.c.b16 %v4229, %v4225
  %v4426 = vpack.c.b16 %v4230, %v4226
  %v4427 = vpack.c.b16 %v4235, %v4231
  %v4428 = vpack.c.b16 %v4236, %v4232
  %v4429 = vpack.c.b16 %v4237, %v4233
  %v4430 = vpack.c.b16 %v4238, %v4234
  %v4431 = vpack.c.b16 %v4243, %v4239
  %v4432 = vpack.c.b16 %v4244, %v4240
  %v4433 = vpack.c.b16 %v4245, %v4241
  %v4434 = vpack.c.b16 %v4246, %v4242
  %v4435 = vpack.c.b16 %v4251, %v4247
  %v4436 = vpack.c.b16 %v4252, %v4248
  %v4437 = vpack.c.b16 %v4253, %v4249
  %v4438 = vpack.c.b16 %v4254, %v4250
  %v4439 = vpack.c.b16 %v4259, %v4255
  %v4440 = vpack.c.b16 %v4260, %v4256
  %v4441 = vpack.c.b16 %v4261, %v4257
  %v4442 = vpack.c.b16 %v4262, %v4258
  %v4443 = vpack.c.b16 %v4267, %v4263
  %v4444 = vpack.c.b16 %v4268, %v4264
  %v4445 = vpack.c.b16 %v4269, %v4265
  %v4446 = vpack.c.b16 %v4270, %v4266
  %v4447 = vpack.c.b16 %v4275, %v4271
  %v4448 = vpack.c.b16 %v4276, %v4272
  %v4449 = vpack.c.b16 %v4277, %v4273
  %v4450 = vpack.c.b16 %v4278, %v4274
  %v4451 = vpack.c.b16 %v4283, %v4279
  %v4452 = vpack.c.b16 %v4284, %v4280
  %v4453 = vpack.c.b16 %v4285, %v4281
  %v4454 = vpack.c.b16 %v4286, %v4282
  %v4455 = vpack.c.b16 %v4291, %v4287
  %v4456 = vpack.c.b16 %v4292, %v4288
  %v4457 = vpack.c.b16 %v4293, %v4289
  %v4458 = vpack.c.b16 %v4294, %v4290
  %v4459 = vpack.c.b16 %v4299, %v4295
  %v4460 = vpack.c.b16 %v4300, %v4296
  %v4461 = vpack.c.b16 %v4301, %v4297
  %v4462 = vpack.c.b16 %v4302, %v4298
  %v4463 = vpack.c.b16 %v4307, %v4303
  %v4464 = vpack.c.b16 %v4308, %v4304
  %v4465 = vpack.c.b16 %v4309, %v4305
  %v4466 = vpack.c.b16 %v4310, %v4306
  %v4467 = vpack.c.b16 %v4315, %v4311
  %v4468 = vpack.c.b16 %v4316, %v4312
  %v4469 = vpack.c.b16 %v4317, %v4313
  %v4470 = vpack.c.b16 %v4318, %v4314
  %v4471 = vpack.c.b16 %v4323, %v4319
  %v4472 = vpack.c.b16 %v4324, %v4320
  %v4473 = vpack.c.b16 %v4325, %v4321
  %v4474 = vpack.c.b16 %v4326, %v4322
  %v4475 = vpack.c.b16 %v4331, %v4327
  %v4476 = vpack.c.b16 %v4332, %v4328
  %v4477 = vpack.c.b16 %v4333, %v4329
  %v4478 = vpack.c.b16 %v4334, %v4330
  %v4479 = vpack.c.b16 %v4339, %v4335
  %v4480 = vpack.c.b16 %v4340, %v4336
  %v4481 = vpack.c.b16 %v4341, %v4337
  %v4482 = vpack.c.b16 %v4342, %v4338
  %v4483 = vpack.c.b16 %v4347, %v4343
  %v4484 = vpack.c.b16 %v4348, %v4344
  %v4485 = vpack.c.b16 %v4349, %v4345
  %v4486 = vpack.c.b16 %v4350, %v4346
  %v4487 = vpack.c.b16 %v4355, %v4351
  %v4488 = vpack.c.b16 %v4356, %v4352
  %v4489 = vpack.c.b16 %v4357, %v4353
  %v4490 = vpack.c.b16 %v4358, %v4354
  %v4491 = vpack.c.b16 %v4363, %v4359
  %v4492 = vpack.c.b16 %v4364, %v4360
  %v4493 = vpack.c.b16 %v4365, %v4361
  %v4494 = vpack.c.b16 %v4366, %v4362
  %4623 = vmatprep.subr.bf16.mxu0 %v4368
  %4624 = vmatpush1.bf16.msra.mxu0 %v4367
  %4625 = vmatprep.subr.bf16.mxu0 %v4372
  %4626 = vmatpush1.bf16.msra.mxu0 %v4371
  %4627 = vmatprep.subr.bf16.mxu0 %v4376
  %4628 = vmatpush1.bf16.msra.mxu0 %v4375
  %4629 = vmatprep.subr.bf16.mxu0 %v4380
  %4630 = vmatpush1.bf16.msra.mxu0 %v4379
  %4631 = vmatprep.subr.bf16.mxu0 %v4384
  %4632 = vmatpush1.bf16.msra.mxu0 %v4383
  %4633 = vmatprep.subr.bf16.mxu0 %v4388
  %4634 = vmatpush1.bf16.msra.mxu0 %v4387
  %4635 = vmatprep.subr.bf16.mxu0 %v4392
  %4636 = vmatpush1.bf16.msra.mxu0 %v4391
  %4637 = vmatprep.subr.bf16.mxu0 %v4396
  %4638 = vmatpush1.bf16.msra.mxu0 %v4395
  %4639 = vmatprep.subr.bf16.mxu0 %v4400
  %4640 = vmatpush1.bf16.msra.mxu0 %v4399
  %4641 = vmatprep.subr.bf16.mxu0 %v4404
  %4642 = vmatpush1.bf16.msra.mxu0 %v4403
  %4643 = vmatprep.subr.bf16.mxu0 %v4408
  %4644 = vmatpush1.bf16.msra.mxu0 %v4407
  %4645 = vmatprep.subr.bf16.mxu0 %v4412
  %4646 = vmatpush1.bf16.msra.mxu0 %v4411
  %4647 = vmatprep.subr.bf16.mxu0 %v4416
  %4648 = vmatpush1.bf16.msra.mxu0 %v4415
  %4649 = vmatprep.subr.bf16.mxu0 %v4420
  %4650 = vmatpush1.bf16.msra.mxu0 %v4419
  %4651 = vmatprep.subr.bf16.mxu0 %v4424
  %4652 = vmatpush1.bf16.msra.mxu0 %v4423
  %4653 = vmatprep.subr.bf16.mxu0 %v4428
  %4654 = vmatpush1.bf16.msra.mxu0 %v4427
  %4655 = vmatprep.mubr.bf16.mxu0 %v3830
  %4656 = vmatmul.mubr.bf16.gmra.mrb[0].mxu0 %v3829
  %v4657 = vpop.f32.mrb[0].mxu0
  %v4658 = vadd.f32 %v3966, %v4657
  %v4659 = vpop.f32.mrb[0].mxu0
  %v4660 = vadd.f32 %v3970, %v4659
  %v4661 = vpop.f32.mrb[0].mxu0
  %v4662 = vpop.f32.mrb[0].mxu0
  %4663 = vdwg.mxu0
  %4664 = vmatprep.subr.bf16.mxu0 %v4432
  %4665 = vmatpush1.bf16.msra.mxu0 %v4431
  %4666 = vmatprep.subr.bf16.mxu0 %v4436
  %4667 = vmatpush1.bf16.msra.mxu0 %v4435
  %4668 = vmatprep.subr.bf16.mxu0 %v4440
  %4669 = vmatpush1.bf16.msra.mxu0 %v4439
  %4670 = vmatprep.subr.bf16.mxu0 %v4444
  %4671 = vmatpush1.bf16.msra.mxu0 %v4443
  %4672 = vmatprep.subr.bf16.mxu0 %v4448
  %4673 = vmatpush1.bf16.msra.mxu0 %v4447
  %4674 = vmatprep.subr.bf16.mxu0 %v4452
  %4675 = vmatpush1.bf16.msra.mxu0 %v4451
  %4676 = vmatprep.subr.bf16.mxu0 %v4456
  %4677 = vmatpush1.bf16.msra.mxu0 %v4455
  %4678 = vmatprep.subr.bf16.mxu0 %v4460
  %4679 = vmatpush1.bf16.msra.mxu0 %v4459
  %4680 = vmatprep.subr.bf16.mxu0 %v4464
  %4681 = vmatpush1.bf16.msra.mxu0 %v4463
  %4682 = vmatprep.subr.bf16.mxu0 %v4468
  %4683 = vmatpush1.bf16.msra.mxu0 %v4467
  %4684 = vmatprep.subr.bf16.mxu0 %v4472
  %4685 = vmatpush1.bf16.msra.mxu0 %v4471
  %4686 = vmatprep.subr.bf16.mxu0 %v4476
  %4687 = vmatpush1.bf16.msra.mxu0 %v4475
  %4688 = vmatprep.subr.bf16.mxu0 %v4480
  %4689 = vmatpush1.bf16.msra.mxu0 %v4479
  %4690 = vmatprep.subr.bf16.mxu0 %v4484
  %4691 = vmatpush1.bf16.msra.mxu0 %v4483
  %4692 = vmatprep.subr.bf16.mxu0 %v4488
  %4693 = vmatpush1.bf16.msra.mxu0 %v4487
  %4694 = vmatprep.subr.bf16.mxu0 %v4492
  %4695 = vmatpush1.bf16.msra.mxu0 %v4491
  %4696 = vmatprep.mubr.bf16.mxu0 %v3832
  %4697 = vmatmul.mubr.bf16.gmra.mrb[0].mxu0 %v3831
  %v4698 = vpop.f32.mrb[0].mxu0
  %v4699 = vadd.f32 %v4658, %v4698
  %v4700 = vpop.f32.mrb[0].mxu0
  %v4701 = vadd.f32 %v4660, %v4700
  %v4702 = vpop.f32.mrb[0].mxu0
  %v4703 = vpop.f32.mrb[0].mxu0
  %4704 = vdwg.mxu0
  %4705 = vmatprep.subr.bf16.mxu0 %v4370
  %4706 = vmatpush1.bf16.msra.mxu0 %v4369
  %4707 = vmatprep.subr.bf16.mxu0 %v4374
  %4708 = vmatpush1.bf16.msra.mxu0 %v4373
  %4709 = vmatprep.subr.bf16.mxu0 %v4378
  %4710 = vmatpush1.bf16.msra.mxu0 %v4377
  %4711 = vmatprep.subr.bf16.mxu0 %v4382
  %4712 = vmatpush1.bf16.msra.mxu0 %v4381
  %4713 = vmatprep.subr.bf16.mxu0 %v4386
  %4714 = vmatpush1.bf16.msra.mxu0 %v4385
  %4715 = vmatprep.subr.bf16.mxu0 %v4390
  %4716 = vmatpush1.bf16.msra.mxu0 %v4389
  %4717 = vmatprep.subr.bf16.mxu0 %v4394
  %4718 = vmatpush1.bf16.msra.mxu0 %v4393
  %4719 = vmatprep.subr.bf16.mxu0 %v4398
  %4720 = vmatpush1.bf16.msra.mxu0 %v4397
  %4721 = vmatprep.subr.bf16.mxu0 %v4402
  %4722 = vmatpush1.bf16.msra.mxu0 %v4401
  %4723 = vmatprep.subr.bf16.mxu0 %v4406
  %4724 = vmatpush1.bf16.msra.mxu0 %v4405
  %4725 = vmatprep.subr.bf16.mxu0 %v4410
  %4726 = vmatpush1.bf16.msra.mxu0 %v4409
  %4727 = vmatprep.subr.bf16.mxu0 %v4414
  %4728 = vmatpush1.bf16.msra.mxu0 %v4413
  %4729 = vmatprep.subr.bf16.mxu0 %v4418
  %4730 = vmatpush1.bf16.msra.mxu0 %v4417
  %4731 = vmatprep.subr.bf16.mxu0 %v4422
  %4732 = vmatpush1.bf16.msra.mxu0 %v4421
  %4733 = vmatprep.subr.bf16.mxu0 %v4426
  %4734 = vmatpush1.bf16.msra.mxu0 %v4425
  %4735 = vmatprep.subr.bf16.mxu0 %v4430
  %4736 = vmatpush1.bf16.msra.mxu0 %v4429
  %4737 = vmatprep.mubr.bf16.mxu0 %v3830
  %4738 = vmatmul.mubr.bf16.gmra.mrb[0].mxu0 %v3829
  %v4739 = vpop.f32.mrb[0].mxu0
  %v4740 = vadd.f32 %v3974, %v4739
  %v4741 = vpop.f32.mrb[0].mxu0
  %v4742 = vadd.f32 %v3978, %v4741
  %v4743 = vpop.f32.mrb[0].mxu0
  %v4744 = vpop.f32.mrb[0].mxu0
  %4745 = vdwg.mxu0
  %4746 = vmatprep.subr.bf16.mxu0 %v4434
  %4747 = vmatpush1.bf16.msra.mxu0 %v4433
  %4748 = vmatprep.subr.bf16.mxu0 %v4438
  %4749 = vmatpush1.bf16.msra.mxu0 %v4437
  %4750 = vmatprep.subr.bf16.mxu0 %v4442
  %4751 = vmatpush1.bf16.msra.mxu0 %v4441
  %4752 = vmatprep.subr.bf16.mxu0 %v4446
  %4753 = vmatpush1.bf16.msra.mxu0 %v4445
  %4754 = vmatprep.subr.bf16.mxu0 %v4450
  %4755 = vmatpush1.bf16.msra.mxu0 %v4449
  %4756 = vmatprep.subr.bf16.mxu0 %v4454
  %4757 = vmatpush1.bf16.msra.mxu0 %v4453
  %4758 = vmatprep.subr.bf16.mxu0 %v4458
  %4759 = vmatpush1.bf16.msra.mxu0 %v4457
  %4760 = vmatprep.subr.bf16.mxu0 %v4462
  %4761 = vmatpush1.bf16.msra.mxu0 %v4461
  %4762 = vmatprep.subr.bf16.mxu0 %v4466
  %4763 = vmatpush1.bf16.msra.mxu0 %v4465
  %4764 = vmatprep.subr.bf16.mxu0 %v4470
  %4765 = vmatpush1.bf16.msra.mxu0 %v4469
  %4766 = vmatprep.subr.bf16.mxu0 %v4474
  %4767 = vmatpush1.bf16.msra.mxu0 %v4473
  %4768 = vmatprep.subr.bf16.mxu0 %v4478
  %4769 = vmatpush1.bf16.msra.mxu0 %v4477
  %4770 = vmatprep.subr.bf16.mxu0 %v4482
  %4771 = vmatpush1.bf16.msra.mxu0 %v4481
  %4772 = vmatprep.subr.bf16.mxu0 %v4486
  %4773 = vmatpush1.bf16.msra.mxu0 %v4485
  %4774 = vmatprep.subr.bf16.mxu0 %v4490
  %4775 = vmatpush1.bf16.msra.mxu0 %v4489
  %4776 = vmatprep.subr.bf16.mxu0 %v4494
  %4777 = vmatpush1.bf16.msra.mxu0 %v4493
  %4778 = vmatprep.mubr.bf16.mxu0 %v3832
  %4779 = vmatmul.mubr.bf16.gmra.mrb[0].mxu0 %v3831
  %v4780 = vpop.f32.mrb[0].mxu0
  %v4781 = vadd.f32 %v4740, %v4780
  %v4782 = vpop.f32.mrb[0].mxu0
  %v4783 = vadd.f32 %v4742, %v4782
  %v4784 = vpop.f32.mrb[0].mxu0
  %v4785 = vpop.f32.mrb[0].mxu0
  %4786 = vdwg.mxu0
  %v4787 = vmax.f32 %v4699, 0.0
  %v4788 = vmax.f32 %v4701, 0.0
  %v4789 = vmax.f32 %v4781, 0.0
  %v4790 = vmax.f32 %v4783, 0.0
  %v4791 = vpack.c.bf16 %v4787, %v4787
  %v4792 = vpack.c.bf16 %v4788, %v4788
  %v4793 = vpack.c.bf16 %v4789, %v4789
  %v4794 = vpack.c.bf16 %v4790, %v4790
  %v4795 = vld [vmem:[%s5] sm:$0xf]
  %v4796 = vld [vmem:[%s5 + $0x4] sm:$0xf]
  %v4797 = vld [vmem:[%s5 + $0x8] sm:$0xf]
  %v4798 = vld [vmem:[%s5 + $0xc] sm:$0xf]
  %v4799 = vld [vmem:[%s5 + $0x10] sm:$0xf]
  %v4800 = vld [vmem:[%s5 + $0x14] sm:$0xf]
  %v4801 = vld [vmem:[%s5 + $0x18] sm:$0xf]
  %v4802 = vld [vmem:[%s5 + $0x1c] sm:$0xf]
  %v4803 = vld [vmem:[%s5 + $0x20] sm:$0xf]
  %v4804 = vld [vmem:[%s5 + $0x24] sm:$0xf]
  %v4805 = vld [vmem:[%s5 + $0x28] sm:$0xf]
  %v4806 = vld [vmem:[%s5 + $0x2c] sm:$0xf]
  %v4807 = vld [vmem:[%s5 + $0x30] sm:$0xf]
  %v4808 = vld [vmem:[%s5 + $0x34] sm:$0xf]
  %v4809 = vld [vmem:[%s5 + $0x38] sm:$0xf]
  %v4810 = vld [vmem:[%s5 + $0x3c] sm:$0xf]
  %v4811 = vld [vmem:[%s5 + $0x40] sm:$0xf]
  %v4812 = vld [vmem:[%s5 + $0x44] sm:$0xf]
  %v4813 = vld [vmem:[%s5 + $0x48] sm:$0xf]
  %v4814 = vld [vmem:[%s5 + $0x4c] sm:$0xf]
  %v4815 = vld [vmem:[%s5 + $0x50] sm:$0xf]
  %v4816 = vld [vmem:[%s5 + $0x54] sm:$0xf]
  %v4817 = vld [vmem:[%s5 + $0x58] sm:$0xf]
  %v4818 = vld [vmem:[%s5 + $0x5c] sm:$0xf]
  %v4819 = vld [vmem:[%s5 + $0x60] sm:$0xf]
  %v4820 = vld [vmem:[%s5 + $0x64] sm:$0xf]
  %v4821 = vld [vmem:[%s5 + $0x68] sm:$0xf]
  %v4822 = vld [vmem:[%s5 + $0x6c] sm:$0xf]
  %v4823 = vld [vmem:[%s5 + $0x70] sm:$0xf]
  %v4824 = vld [vmem:[%s5 + $0x74] sm:$0xf]
  %v4825 = vld [vmem:[%s5 + $0x78] sm:$0xf]
  %v4826 = vld [vmem:[%s5 + $0x7c] sm:$0xf]
  %v4827 = vld [vmem:[%s5 + $0x80] sm:$0xf]
  %v4828 = vld [vmem:[%s5 + $0x84] sm:$0xf]
  %v4829 = vld [vmem:[%s5 + $0x88] sm:$0xf]
  %v4830 = vld [vmem:[%s5 + $0x8c] sm:$0xf]
  %v4831 = vld [vmem:[%s5 + $0x90] sm:$0xf]
  %v4832 = vld [vmem:[%s5 + $0x94] sm:$0xf]
  %v4833 = vld [vmem:[%s5 + $0x98] sm:$0xf]
  %v4834 = vld [vmem:[%s5 + $0x9c] sm:$0xf]
  %v4835 = vld [vmem:[%s5 + $0xa0] sm:$0xf]
  %v4836 = vld [vmem:[%s5 + $0xa4] sm:$0xf]
  %v4837 = vld [vmem:[%s5 + $0xa8] sm:$0xf]
  %v4838 = vld [vmem:[%s5 + $0xac] sm:$0xf]
  %v4839 = vld [vmem:[%s5 + $0xb0] sm:$0xf]
  %v4840 = vld [vmem:[%s5 + $0xb4] sm:$0xf]
  %v4841 = vld [vmem:[%s5 + $0xb8] sm:$0xf]
  %v4842 = vld [vmem:[%s5 + $0xbc] sm:$0xf]
  %v4843 = vld [vmem:[%s5 + $0xc0] sm:$0xf]
  %v4844 = vld [vmem:[%s5 + $0xc4] sm:$0xf]
  %v4845 = vld [vmem:[%s5 + $0xc8] sm:$0xf]
  %v4846 = vld [vmem:[%s5 + $0xcc] sm:$0xf]
  %v4847 = vld [vmem:[%s5 + $0xd0] sm:$0xf]
  %v4848 = vld [vmem:[%s5 + $0xd4] sm:$0xf]
  %v4849 = vld [vmem:[%s5 + $0xd8] sm:$0xf]
  %v4850 = vld [vmem:[%s5 + $0xdc] sm:$0xf]
  %v4851 = vld [vmem:[%s5 + $0xe0] sm:$0xf]
  %v4852 = vld [vmem:[%s5 + $0xe4] sm:$0xf]
  %v4853 = vld [vmem:[%s5 + $0xe8] sm:$0xf]
  %v4854 = vld [vmem:[%s5 + $0xec] sm:$0xf]
  %v4855 = vld [vmem:[%s5 + $0xf0] sm:$0xf]
  %v4856 = vld [vmem:[%s5 + $0xf4] sm:$0xf]
  %v4857 = vld [vmem:[%s5 + $0xf8] sm:$0xf]
  %v4858 = vld [vmem:[%s5 + $0xfc] sm:$0xf]
  %v4859 = vld [vmem:[%s6] sm:$0x1]
  %v4861 = vlaneseq
  %v4862 = vshrl.u32 %v4861, 7
  %v4863 = vsub.s32 0, %v4862
  %v4864 = vrot.slane %v4859, %v4863
  %v4930 = vunpack.c.l.b16 %v4795
  %v4931 = vunpack.c.l.b16 %v4796
  %v4932 = vunpack.c.l.b16 %v4797
  %v4933 = vunpack.c.l.b16 %v4798
  %v4934 = vunpack.c.l.b16 %v4799
  %v4935 = vunpack.c.l.b16 %v4800
  %v4936 = vunpack.c.l.b16 %v4801
  %v4937 = vunpack.c.l.b16 %v4802
  %v4938 = vunpack.c.l.b16 %v4803
  %v4939 = vunpack.c.l.b16 %v4804
  %v4940 = vunpack.c.l.b16 %v4805
  %v4941 = vunpack.c.l.b16 %v4806
  %v4942 = vunpack.c.l.b16 %v4807
  %v4943 = vunpack.c.l.b16 %v4808
  %v4944 = vunpack.c.l.b16 %v4809
  %v4945 = vunpack.c.l.b16 %v4810
  %v4946 = vunpack.c.l.b16 %v4811
  %v4947 = vunpack.c.l.b16 %v4812
  %v4948 = vunpack.c.l.b16 %v4813
  %v4949 = vunpack.c.l.b16 %v4814
  %v4950 = vunpack.c.l.b16 %v4815
  %v4951 = vunpack.c.l.b16 %v4816
  %v4952 = vunpack.c.l.b16 %v4817
  %v4953 = vunpack.c.l.b16 %v4818
  %v4954 = vunpack.c.l.b16 %v4819
  %v4955 = vunpack.c.l.b16 %v4820
  %v4956 = vunpack.c.l.b16 %v4821
  %v4957 = vunpack.c.l.b16 %v4822
  %v4958 = vunpack.c.l.b16 %v4823
  %v4959 = vunpack.c.l.b16 %v4824
  %v4960 = vunpack.c.l.b16 %v4825
  %v4961 = vunpack.c.l.b16 %v4826
  %v4962 = vunpack.c.l.b16 %v4827
  %v4963 = vunpack.c.l.b16 %v4828
  %v4964 = vunpack.c.l.b16 %v4829
  %v4965 = vunpack.c.l.b16 %v4830
  %v4966 = vunpack.c.l.b16 %v4831
  %v4967 = vunpack.c.l.b16 %v4832
  %v4968 = vunpack.c.l.b16 %v4833
  %v4969 = vunpack.c.l.b16 %v4834
  %v4970 = vunpack.c.l.b16 %v4835
  %v4971 = vunpack.c.l.b16 %v4836
  %v4972 = vunpack.c.l.b16 %v4837
  %v4973 = vunpack.c.l.b16 %v4838
  %v4974 = vunpack.c.l.b16 %v4839
  %v4975 = vunpack.c.l.b16 %v4840
  %v4976 = vunpack.c.l.b16 %v4841
  %v4977 = vunpack.c.l.b16 %v4842
  %v4978 = vunpack.c.l.b16 %v4843
  %v4979 = vunpack.c.l.b16 %v4844
  %v4980 = vunpack.c.l.b16 %v4845
  %v4981 = vunpack.c.l.b16 %v4846
  %v4982 = vunpack.c.l.b16 %v4847
  %v4983 = vunpack.c.l.b16 %v4848
  %v4984 = vunpack.c.l.b16 %v4849
  %v4985 = vunpack.c.l.b16 %v4850
  %v4986 = vunpack.c.l.b16 %v4851
  %v4987 = vunpack.c.l.b16 %v4852
  %v4988 = vunpack.c.l.b16 %v4853
  %v4989 = vunpack.c.l.b16 %v4854
  %v4990 = vunpack.c.l.b16 %v4855
  %v4991 = vunpack.c.l.b16 %v4856
  %v4992 = vunpack.c.l.b16 %v4857
  %v4993 = vunpack.c.l.b16 %v4858
  %v4994 = vpack.c.b16 %v4931, %v4930
  %v4995 = vpack.c.b16 %v4933, %v4932
  %v4996 = vpack.c.b16 %v4935, %v4934
  %v4997 = vpack.c.b16 %v4937, %v4936
  %v4998 = vpack.c.b16 %v4939, %v4938
  %v4999 = vpack.c.b16 %v4941, %v4940
  %v5000 = vpack.c.b16 %v4943, %v4942
  %v5001 = vpack.c.b16 %v4945, %v4944
  %v5002 = vpack.c.b16 %v4947, %v4946
  %v5003 = vpack.c.b16 %v4949, %v4948
  %v5004 = vpack.c.b16 %v4951, %v4950
  %v5005 = vpack.c.b16 %v4953, %v4952
  %v5006 = vpack.c.b16 %v4955, %v4954
  %v5007 = vpack.c.b16 %v4957, %v4956
  %v5008 = vpack.c.b16 %v4959, %v4958
  %v5009 = vpack.c.b16 %v4961, %v4960
  %v5010 = vpack.c.b16 %v4963, %v4962
  %v5011 = vpack.c.b16 %v4965, %v4964
  %v5012 = vpack.c.b16 %v4967, %v4966
  %v5013 = vpack.c.b16 %v4969, %v4968
  %v5014 = vpack.c.b16 %v4971, %v4970
  %v5015 = vpack.c.b16 %v4973, %v4972
  %v5016 = vpack.c.b16 %v4975, %v4974
  %v5017 = vpack.c.b16 %v4977, %v4976
  %v5018 = vpack.c.b16 %v4979, %v4978
  %v5019 = vpack.c.b16 %v4981, %v4980
  %v5020 = vpack.c.b16 %v4983, %v4982
  %v5021 = vpack.c.b16 %v4985, %v4984
  %v5022 = vpack.c.b16 %v4987, %v4986
  %v5023 = vpack.c.b16 %v4989, %v4988
  %v5024 = vpack.c.b16 %v4991, %v4990
  %v5025 = vpack.c.b16 %v4993, %v4992
  %5058 = vmatprep.subr.bf16.mxu0 0
  %5059 = vmatpush1.bf16.msra.mxu0 %v4994
  %5060 = vmatprep.subr.bf16.mxu0 0
  %5061 = vmatpush1.bf16.msra.mxu0 %v4995
  %5062 = vmatprep.subr.bf16.mxu0 0
  %5063 = vmatpush1.bf16.msra.mxu0 %v4996
  %5064 = vmatprep.subr.bf16.mxu0 0
  %5065 = vmatpush1.bf16.msra.mxu0 %v4997
  %5066 = vmatprep.subr.bf16.mxu0 0
  %5067 = vmatpush1.bf16.msra.mxu0 %v4998
  %5068 = vmatprep.subr.bf16.mxu0 0
  %5069 = vmatpush1.bf16.msra.mxu0 %v4999
  %5070 = vmatprep.subr.bf16.mxu0 0
  %5071 = vmatpush1.bf16.msra.mxu0 %v5000
  %5072 = vmatprep.subr.bf16.mxu0 0
  %5073 = vmatpush1.bf16.msra.mxu0 %v5001
  %5074 = vmatprep.subr.bf16.mxu0 0
  %5075 = vmatpush1.bf16.msra.mxu0 %v5002
  %5076 = vmatprep.subr.bf16.mxu0 0
  %5077 = vmatpush1.bf16.msra.mxu0 %v5003
  %5078 = vmatprep.subr.bf16.mxu0 0
  %5079 = vmatpush1.bf16.msra.mxu0 %v5004
  %5080 = vmatprep.subr.bf16.mxu0 0
  %5081 = vmatpush1.bf16.msra.mxu0 %v5005
  %5082 = vmatprep.subr.bf16.mxu0 0
  %5083 = vmatpush1.bf16.msra.mxu0 %v5006
  %5084 = vmatprep.subr.bf16.mxu0 0
  %5085 = vmatpush1.bf16.msra.mxu0 %v5007
  %5086 = vmatprep.subr.bf16.mxu0 0
  %5087 = vmatpush1.bf16.msra.mxu0 %v5008
  %5088 = vmatprep.subr.bf16.mxu0 0
  %5089 = vmatpush1.bf16.msra.mxu0 %v5009
  %5090 = vmatprep.mubr.bf16.mxu0 %v4792
  %5091 = vmatmul.mubr.bf16.gmra.mrb[0].mxu0 %v4791
  %v5092 = vpop.f32.mrb[0].mxu0
  %v5093 = vadd.f32 %v4864, %v5092
  %v5094 = vpop.f32.mrb[0].mxu0
  %v5095 = vpop.f32.mrb[0].mxu0
  %v5096 = vpop.f32.mrb[0].mxu0
  %5097 = vdwg.mxu0
  %5098 = vmatprep.subr.bf16.mxu0 0
  %5099 = vmatpush1.bf16.msra.mxu0 %v5010
  %5100 = vmatprep.subr.bf16.mxu0 0
  %5101 = vmatpush1.bf16.msra.mxu0 %v5011
  %5102 = vmatprep.subr.bf16.mxu0 0
  %5103 = vmatpush1.bf16.msra.mxu0 %v5012
  %5104 = vmatprep.subr.bf16.mxu0 0
  %5105 = vmatpush1.bf16.msra.mxu0 %v5013
  %5106 = vmatprep.subr.bf16.mxu0 0
  %5107 = vmatpush1.bf16.msra.mxu0 %v5014
  %5108 = vmatprep.subr.bf16.mxu0 0
  %5109 = vmatpush1.bf16.msra.mxu0 %v5015
  %5110 = vmatprep.subr.bf16.mxu0 0
  %5111 = vmatpush1.bf16.msra.mxu0 %v5016
  %5112 = vmatprep.subr.bf16.mxu0 0
  %5113 = vmatpush1.bf16.msra.mxu0 %v5017
  %5114 = vmatprep.subr.bf16.mxu0 0
  %5115 = vmatpush1.bf16.msra.mxu0 %v5018
  %5116 = vmatprep.subr.bf16.mxu0 0
  %5117 = vmatpush1.bf16.msra.mxu0 %v5019
  %5118 = vmatprep.subr.bf16.mxu0 0
  %5119 = vmatpush1.bf16.msra.mxu0 %v5020
  %5120 = vmatprep.subr.bf16.mxu0 0
  %5121 = vmatpush1.bf16.msra.mxu0 %v5021
  %5122 = vmatprep.subr.bf16.mxu0 0
  %5123 = vmatpush1.bf16.msra.mxu0 %v5022
  %5124 = vmatprep.subr.bf16.mxu0 0
  %5125 = vmatpush1.bf16.msra.mxu0 %v5023
  %5126 = vmatprep.subr.bf16.mxu0 0
  %5127 = vmatpush1.bf16.msra.mxu0 %v5024
  %5128 = vmatprep.subr.bf16.mxu0 0
  %5129 = vmatpush1.bf16.msra.mxu0 %v5025
  %5130 = vmatprep.mubr.bf16.mxu0 %v4794
  %5131 = vmatmul.mubr.bf16.gmra.mrb[0].mxu0 %v4793
  %v5132 = vpop.f32.mrb[0].mxu0
  %v5133 = vadd.f32 %v5093, %v5132
  %v5134 = vpop.f32.mrb[0].mxu0
  %v5135 = vpop.f32.mrb[0].mxu0
  %v5136 = vpop.f32.mrb[0].mxu0
  %5137 = vdwg.mxu0
  %vm5138 = vcmask 35840
  %5139 = vst.msk [vmem:[%s7] sm:$0xf] %vm5138, %v5133
  // Predicated region
  $region30: #{siamese_forward.7} parent=0 // pred_check
    _
  $region31: #{siamese_forward.7} parent=0 // pred_check_branch
    %5141 = sbr.rel (0) target = $region33
  $region32: #{siamese_forward.7} parent=0 // pred_region
    _
  $region33: #{siamese_forward.7} parent=0 // pred_fallthru
    _
  // Predicated region
  $region34: #{siamese_forward.7} parent=0 // pred_check
    _
  $region35: #{siamese_forward.7} parent=0 // pred_check_branch
    %5143 = sbr.rel (0) target = $region37
  $region36: #{siamese_forward.7} parent=0 // pred_region
    _
  $region37: #{siamese_forward.7} parent=0 // pred_fallthru
    _

</llo_original>
